<compile_context>
chip_gen: v7x
topology: tpu7x:2x2x1
jax: 0.10.0
libtpu: 0.0.40
codegen_flags: <defaults>
</compile_context>

<pallas_src>
import jax
import jax.numpy as jnp
from jax.experimental import pallas as pl
from jax.experimental.pallas import tpu as pltpu

# ----------------------------- model sizes ---------------------------------
NODE_DIM = 40          # node feature dim (== hidden_dim, divisible by HEADS)
EDGE_DIM = 16          # edge feature dim
GLOBAL_DIM = 8         # global feature dim
HIDDEN_DIM = 40        # hidden_dim of GraphNets
HEADS = 5              # hard-coded num_heads in NodeAttnModel
HEAD_DIM = HIDDEN_DIM // HEADS
HC = HEADS * HEAD_DIM
DEPTH = 3

N_PER_GRAPH = 8
N_GRAPHS = 2
N_NODES = N_PER_GRAPH * N_GRAPHS     # 16
N_EDGES = 4 * N_PER_GRAPH            # 32 (fwd + bwd ring per graph)

_SELU_ALPHA = 1.6732632423543772
_SELU_SCALE = 1.0507009873554805
_LN_EPS = 1e-5
_NEG_BIG = -1e30


def _rup(x, m):
    return ((x + m - 1) // m) * m


# ----------------------------- in-kernel helpers ---------------------------
def _layernorm(x, g, b):
    mu = jnp.mean(x, axis=-1, keepdims=True)
    var = jnp.mean((x - mu) ** 2, axis=-1, keepdims=True)
    return (x - mu) * jax.lax.rsqrt(var + _LN_EPS) * g + b


def _selu(x):
    return _SELU_SCALE * jnp.where(
        x > 0, x, _SELU_ALPHA * (jnp.exp(jnp.minimum(x, 0.0)) - 1.0))


def _leaky_relu(x, slope=0.2):
    return jnp.where(x > 0, x, slope * x)


# ----------------------------- parameter layout -----------------------------
def _param_specs():
    cond_fan = float(2 * NODE_DIM + GLOBAL_DIM)     # fan-in of the (conceptual) FiLM linears
    gin_fan = float(GLOBAL_DIM + 4 * NODE_DIM)      # fan-in of the (conceptual) global linear 1
    return [
        # EdgeFiLM: fused [gamma | beta] output, weights row-split over [src, dst, u]
        ('wgb_x', 'w', (NODE_DIM, 2 * EDGE_DIM), cond_fan),
        ('wgb_d', 'w', (NODE_DIM, 2 * EDGE_DIM), cond_fan),
        ('wgb_u', 'w', (GLOBAL_DIM, 2 * EDGE_DIM), cond_fan),
        ('bgb',   'b', (1, 2 * EDGE_DIM), None),
        # GATv2
        ('wl',    'w', (NODE_DIM, HC), float(NODE_DIM)),
        ('bl',    'b', (1, HC), None),
        ('wr',    'w', (NODE_DIM, HC), float(NODE_DIM)),
        ('br',    'b', (1, HC), None),
        ('watt',  'att', (HC, HEADS), float(HEAD_DIM)),   # att vector pre-folded with head mask
        ('battn', 'b', (1, HC), None),
        # node residual / MLP
        ('ln1g', 'g', (1, NODE_DIM), None), ('ln1b', 'b', (1, NODE_DIM), None),
        ('m_w1', 'w', (NODE_DIM, HIDDEN_DIM), float(NODE_DIM)), ('m_b1', 'b', (1, HIDDEN_DIM), None),
        ('m_lng', 'g', (1, HIDDEN_DIM), None), ('m_lnb', 'b', (1, HIDDEN_DIM), None),
        ('m_w2', 'w', (HIDDEN_DIM, NODE_DIM), float(HIDDEN_DIM)), ('m_b2', 'b', (1, NODE_DIM), None),
        ('ln2g', 'g', (1, NODE_DIM), None), ('ln2b', 'b', (1, NODE_DIM), None),
        # GlobalPNA: linear-1 weights row-split over [u, mean, std, max, min]
        ('g_w1_u',  'w', (GLOBAL_DIM, HIDDEN_DIM), gin_fan),
        ('g_w1_me', 'w', (NODE_DIM, HIDDEN_DIM), gin_fan),
        ('g_w1_st', 'w', (NODE_DIM, HIDDEN_DIM), gin_fan),
        ('g_w1_mx', 'w', (NODE_DIM, HIDDEN_DIM), gin_fan),
        ('g_w1_mn', 'w', (NODE_DIM, HIDDEN_DIM), gin_fan),
        ('g_b1',  'b', (1, HIDDEN_DIM), None),
        ('g_lng', 'g', (1, HIDDEN_DIM), None), ('g_lnb', 'b', (1, HIDDEN_DIM), None),
        ('g_w2', 'w', (HIDDEN_DIM, GLOBAL_DIM), float(HIDDEN_DIM)), ('g_b2', 'b', (1, GLOBAL_DIM), None),
    ]


PARAM_NAMES = tuple(s[0] for s in _param_specs())

VEC_NAMES = ('bgb', 'bl', 'br', 'battn', 'ln1g', 'ln1b', 'm_b1', 'm_lng', 'm_lnb',
             'm_b2', 'ln2g', 'ln2b', 'g_b1', 'g_lng', 'g_lnb', 'g_b2')
VEC_WIDTHS = {'bgb': 2 * EDGE_DIM, 'g_b2': GLOBAL_DIM}   # default width NODE_DIM


def _head_block_matrix():
    # [HC, H]: 1 where lane k belongs to head h, else 0.
    return jnp.repeat(jnp.eye(HEADS, dtype=jnp.float32), HEAD_DIM, axis=0)


def init_layer_params(key):
    specs = _param_specs()
    keys = jax.random.split(key, len(specs))
    out = []
    for (name, kind, shape, fan), k in zip(specs, keys):
        if kind == 'w':
            out.append(jax.random.normal(k, shape, jnp.float32) / jnp.sqrt(fan))
        elif kind == 'att':
            att_flat = jax.random.normal(k, (HC, 1), jnp.float32) / jnp.sqrt(fan)
            out.append(att_flat * _head_block_matrix())          # [HC, H]
        elif kind == 'g':
            out.append(jnp.ones(shape, jnp.float32))
        else:
            out.append(jnp.zeros(shape, jnp.float32))
    return tuple(out)


# ----------------------------- slab packing (glue) --------------------------
def _wmisc_layout():
    spec = [('wgb_u', GLOBAL_DIM, 2 * EDGE_DIM),
            ('watt', HC, HEADS),
            ('m_w1', NODE_DIM, HIDDEN_DIM),
            ('m_w2', HIDDEN_DIM, NODE_DIM),
            ('g_w1', GLOBAL_DIM + 4 * NODE_DIM, HIDDEN_DIM),
            ('g_w2', HIDDEN_DIM, GLOBAL_DIM)]
    layout, r = {}, 0
    for name, rows, lanes in spec:
        layout[name] = (r, rows, lanes)
        r += _rup(rows, 16)          # 16-row alignment (bf16 sublane packing)
    return layout, r, max(l for _, _, l in spec)


def pack_params(per_layer):
    """per-layer param tuples -> (Wproj [D,40,144] bf16, Wmisc [D,384,40] bf16, Vec [D,16,40] f32)."""
    wl_layout, wrows, wlanes = _wmisc_layout()
    wproj_l, wmisc_l, vec_l = [], [], []
    for params in per_layer:
        p = dict(zip(PARAM_NAMES, params))
        # fused projection weight [wgb_x | wgb_d | wl | wr]  -> [NODE_DIM, 144]
        # (v5e note: cap this at <=128 lanes if single-N-pass matters there.)
        wproj = jnp.concatenate([p['wgb_x'], p['wgb_d'], p['wl'], p['wr']], axis=1)
        # fused GlobalPNA linear-1 weight, rows ordered [u | mean | std | max | min]
        g_w1 = jnp.concatenate([p['g_w1_u'], p['g_w1_me'], p['g_w1_st'],
                                p['g_w1_mx'], p['g_w1_mn']], axis=0)       # [168, 40]
        mats = {'wgb_u': p['wgb_u'], 'watt': p['watt'], 'm_w1': p['m_w1'],
                'm_w2': p['m_w2'], 'g_w1': g_w1, 'g_w2': p['g_w2']}
        slab = jnp.zeros((wrows, wlanes), jnp.float32)
        for name, (r0, rows, lanes) in wl_layout.items():
            slab = slab.at[r0:r0 + rows, :lanes].set(mats[name])
        vec = jnp.zeros((len(VEC_NAMES), NODE_DIM), jnp.float32)
        for i, name in enumerate(VEC_NAMES):
            v = p[name]
            vec = vec.at[i:i + 1, :v.shape[1]].set(v)
        wproj_l.append(wproj); wmisc_l.append(slab); vec_l.append(vec)
    return (jnp.stack(wproj_l).astype(jnp.bfloat16),
            jnp.stack(wmisc_l).astype(jnp.bfloat16),
            jnp.stack(vec_l))                                   # biases/LN kept f32


# ----------------------------- graph structure (glue) -----------------------
def _struct_layout(n_nodes, n_edges, n_graphs):
    N, E, B = n_nodes, n_edges, n_graphs
    Ea = E + N
    spec = [('STg', 2 * Ea, N), ('Tatt', Ea, N), ('TattT', N, Ea),
            ('GS', E, B), ('BMT', HEADS, HC), ('PT', N, B),
            ('Pmean2', 2 * B, 2 * N)]
    layout, r = {}, 0
    for name, rows, lanes in spec:
        layout[name] = (r, rows, lanes)
        r += _rup(rows, 16)
    return layout, r, max(l for _, _, l in spec)


def build_structure(edge_index, batch, n_nodes, n_graphs):
    f32 = jnp.float32
    row, col = edge_index[0], edge_index[1]
    n_edges = row.shape[0]
    loops = jnp.arange(n_nodes, dtype=row.dtype)                 # GATv2 self-loops
    row_a = jnp.concatenate([row, loops])
    col_a = jnp.concatenate([col, loops])
    Satt = jax.nn.one_hot(row_a, n_nodes, dtype=f32)             # [Ea, N]
    Tatt = jax.nn.one_hot(col_a, n_nodes, dtype=f32)             # [Ea, N]
    STg = jnp.concatenate([Satt, Tatt], axis=0)                  # [2Ea, N] single gather matrix
    GS = jax.nn.one_hot(batch[row], n_graphs, dtype=f32)         # [E, B]  (u[batch[row]])
    PT = jax.nn.one_hot(batch, n_graphs, dtype=f32)              # [N, B]
    P = PT.T                                                     # [B, N]
    cnt = jnp.maximum(jnp.sum(P, axis=1, keepdims=True), 1.0)
    Pmean = P / cnt                                              # 1/count folded in
    Z = jnp.zeros_like(Pmean)
    Pmean2 = jnp.concatenate([jnp.concatenate([Pmean, Z], axis=1),
                              jnp.concatenate([Z, Pmean], axis=1)], axis=0)  # [2B, 2N]
    BMT = _head_block_matrix().T                                 # [H, HC]
    mats = {'STg': STg, 'Tatt': Tatt, 'TattT': Tatt.T, 'GS': GS,
            'BMT': BMT, 'PT': PT, 'Pmean2': Pmean2}
    layout, rows_total, lanes_total = _struct_layout(n_nodes, n_edges, n_graphs)
    slab = jnp.zeros((rows_total, lanes_total), f32)
    for name, (r0, rows, lanes) in layout.items():
        slab = slab.at[r0:r0 + rows, :lanes].set(mats[name])
    # 0/1 entries and 1/8 counts are exact in bf16 -> halve DMA bytes, used directly as bf16.
    return slab.astype(jnp.bfloat16)


# ----------------------------- the fused Pallas kernel ----------------------
def _make_kernel(n_nodes, n_edges, n_graphs, depth):
    N, E, B = n_nodes, n_edges, n_graphs
    Ea = E + N
    D, De, Dg = NODE_DIM, EDGE_DIM, GLOBAL_DIM
    sl, _, _ = _struct_layout(N, E, B)
    wl, _, _ = _wmisc_layout()
    f32, bf16 = jnp.float32, jnp.bfloat16

    def kernel(x_ref, e_ref, u_ref, S_ref, Wproj_ref, Wmisc_ref, Vec_ref, uo_ref):
        # ---- structure slab (bf16; 0/1 selection matrices used directly as bf16) ----
        S = S_ref[...]

        def sblk(name):
            r0, rows, lanes = sl[name]
            return S[r0:r0 + rows, :lanes]

        STg = sblk('STg')        # [2Ea, N]
        Tatt = sblk('Tatt')      # [Ea, N]
        TattT = sblk('TattT')    # [N, Ea]
        GS = sblk('GS')          # [E, B]
        BMT = sblk('BMT')        # [H, HC]
        PT = sblk('PT')          # [N, B]
        Pmean2 = sblk('Pmean2')  # [2B, 2N]

        x = x_ref[...]           # [N, D]  (f32, carried across layers in VMEM)
        e = e_ref[...]           # [E, De] (updated but never returned, per GraphNets.forward)
        u = u_ref[...]           # [B, Dg]

        graph_masks = [PT[:, b:b + 1] > 0.5 for b in range(B)]  # hoisted, reused every layer

        for d in range(depth):
            Wproj = Wproj_ref[d]         # [D, 144] bf16  = [wgb_x | wgb_d | wl | wr]
            Wmisc = Wmisc_ref[d]         # [384, 40] bf16
            Vec = Vec_ref[d]             # [16, 40] f32

            def wblk(name):
                r0, rows, lanes = wl[name]
                return Wmisc[r0:r0 + rows, :lanes]

            def vrow(name):
                i = VEC_NAMES.index(name)
                return Vec[i:i + 1, :VEC_WIDTHS.get(name, NODE_DIM)]

            # ---- one gather matmul covers x[row], x[col] and both attention gathers ----
            x_bf = x.astype(bf16)
            gathered = jnp.dot(STg, x_bf, preferred_element_type=f32).astype(bf16)  # [2Ea, D]
            # ---- one fused projection matmul for FiLM(src,dst) + GATv2(lhs,rhs) -------
            proj = jnp.dot(gathered, Wproj, preferred_element_type=f32)             # [2Ea, 144]

            # ------------------ Edge model: FiLM (OLD x, OLD u) ---------------------
            u_e = jnp.dot(GS, u.astype(bf16), preferred_element_type=f32)           # [E, Dg]
            pre = (proj[:E, 0:2 * De]                         # x_src @ wgb_x
                   + proj[Ea:Ea + E, 2 * De:4 * De]           # x_dst @ wgb_d
                   + jnp.dot(u_e.astype(bf16), wblk('wgb_u'), preferred_element_type=f32)
                   + vrow('bgb'))                                                     # [E, 2De]
            gamma = jax.nn.sigmoid(pre[:, :De])
            beta = pre[:, De:]
            e = gamma * e + beta

            # ------------------ Node model: GATv2 attention + residual MLP ----------
            # TODO(synk): edge_attr is ignored by the attention because the original module
            # builds GAT(...) without edge_dim (GATv2Conv.lin_edge is None).
            xj = proj[:Ea, 4 * De:4 * De + D] + vrow('bl')        # [Ea, HC]  (source lin)
            xi = proj[Ea:, 4 * De + D:4 * De + 2 * D] + vrow('br')  # [Ea, HC]  (target lin)
            z = _leaky_relu(xi + xj)
            alpha = jnp.dot(z.astype(bf16), wblk('watt'), preferred_element_type=f32)  # [Ea, H]
            # Scatter-softmax over incoming edges of each target node.  Subtracting the
            # per-head GLOBAL max (instead of PyG's per-target max) is a constant shift per
            # softmax group -> identical softmax, exp <= 1, and avoids a [N, Ea, H] masked max.
            m_h = jnp.max(alpha, axis=0, keepdims=True)                                # [1, H]
            ex = jnp.exp(alpha - m_h)                                                  # [Ea, H]
            s_node = jnp.dot(TattT, ex.astype(bf16), preferred_element_type=f32) + 1e-16
            s_edge = jnp.dot(Tatt, s_node.astype(bf16), preferred_element_type=f32)    # [Ea, H]
            a_norm = ex * pl.reciprocal(s_edge, approx=True)                           # [Ea, H]
            a_full = jnp.dot(a_norm.astype(bf16), BMT, preferred_element_type=f32)     # [Ea, HC]
            attn = jnp.dot(TattT, (xj * a_full).astype(bf16),
                           preferred_element_type=f32) + vrow('battn')                 # [N, HC]

            h1 = _layernorm(x + attn, vrow('ln1g'), vrow('ln1b'))
            m = jnp.dot(h1.astype(bf16), wblk('m_w1'), preferred_element_type=f32) + vrow('m_b1')
            m = _selu(m)
            m = _layernorm(m, vrow('m_lng'), vrow('m_lnb'))
            m = jnp.dot(m.astype(bf16), wblk('m_w2'), preferred_element_type=f32) + vrow('m_b2')
            x = _layernorm(h1 + m, vrow('ln2g'), vrow('ln2b'))

            # ------------------ Global model: PNA pooling + MLP (NEW x, OLD u) ------
            # mean and mean-of-squares in ONE matmul via block-diagonal Pmean2.
            xx = jnp.concatenate([x.astype(bf16), (x * x).astype(bf16)], axis=0)       # [2N, D]
            ms = jnp.dot(Pmean2, xx, preferred_element_type=f32)                       # [2B, D]
            mean, mean2 = ms[:B], ms[B:]
            var = mean2 - mean * mean
            std = jnp.sqrt(jnp.maximum(var, 0.0) + 1e-5)                # PyG StdAggregation
            # per-graph max AND min from one masked reduction over [x | -x]
            xn = jnp.concatenate([x, -x], axis=1)                                      # [N, 2D]
            gmm = jnp.concatenate(
                [jnp.max(jnp.where(graph_masks[b], xn, _NEG_BIG), axis=0, keepdims=True)
                 for b in range(B)], axis=0)                                           # [B, 2D]
            gmax, gmin = gmm[:, :D], -gmm[:, D:]
            gin = jnp.concatenate([u, mean, std, gmax, gmin], axis=1)                  # [B, 168]
            hg = jnp.dot(gin.astype(bf16), wblk('g_w1'),
                         preferred_element_type=f32) + vrow('g_b1')
            hg = _selu(hg)
            hg = _layernorm(hg, vrow('g_lng'), vrow('g_lnb'))
            u = jnp.dot(hg.astype(bf16), wblk('g_w2'),
                        preferred_element_type=f32) + vrow('g_b2')

        # GraphNets.forward returns u only -> only u leaves the kernel.
        uo_ref[...] = u

    return kernel


# ----------------------------- wrapper ---------------------------------------
def graphnets_fused_call(x, edge_attr, u, struct_slab, wproj, wmisc, vec):
    kernel = _make_kernel(x.shape[0], edge_attr.shape[0], u.shape[0], wproj.shape[0])
    inputs = (x, edge_attr, u, struct_slab, wproj, wmisc, vec)
    vmem = lambda: pl.BlockSpec(memory_space=pltpu.MemorySpace.VMEM)
    # Single gridless invocation: total footprint < 1 MiB, everything VMEM-resident.
    # (A parallel grid axis would only pay off on v7x with multiple independent batches.)
    return pl.pallas_call(
        kernel,
        out_shape=jax.ShapeDtypeStruct(u.shape, jnp.float32),
        in_specs=[vmem() for _ in inputs],
        out_specs=vmem(),
    )(*inputs)


@jax.jit
def graphnets_forward(x, edge_index, edge_attr, u, batch, wproj, wmisc, vec):
    struct = build_structure(edge_index, batch, x.shape[0], u.shape[0])
    return graphnets_fused_call(x, edge_attr, u, struct, wproj, wmisc, vec)


# ----------------------------- main -----------------------------------------
if __name__ == "__main__":
    assert HIDDEN_DIM == NODE_DIM and HIDDEN_DIM % HEADS == 0

    key = jax.random.PRNGKey(0)
    k_x, k_e, k_u, k_w = jax.random.split(key, 4)

    # deterministic small graph batch: 2 graphs, 8 nodes each, fwd+bwd ring edges
    base = jnp.arange(N_PER_GRAPH, dtype=jnp.int32)
    rows, cols = [], []
    for gph in range(N_GRAPHS):
        off = gph * N_PER_GRAPH
        rows.append(off + base);                      cols.append(off + (base + 1) % N_PER_GRAPH)
        rows.append(off + (base + 1) % N_PER_GRAPH);  cols.append(off + base)
    edge_index = jnp.stack([jnp.concatenate(rows), jnp.concatenate(cols)])   # [2, 32]
    batch = jnp.repeat(jnp.arange(N_GRAPHS, dtype=jnp.int32), N_PER_GRAPH)   # [16]

    x = jax.random.normal(k_x, (N_NODES, NODE_DIM), jnp.float32)
    edge_attr = jax.random.normal(k_e, (N_EDGES, EDGE_DIM), jnp.float32)
    u = jax.random.normal(k_u, (N_GRAPHS, GLOBAL_DIM), jnp.float32)

    layer_keys = jax.random.split(k_w, DEPTH)
    per_layer = [init_layer_params(k) for k in layer_keys]
    wproj, wmisc, vec = pack_params(per_layer)          # 3 packed parameter slabs

    u_out = graphnets_forward(x, edge_index, edge_attr, u, batch, wproj, wmisc, vec)
    u_out = jax.block_until_ready(u_out)

    assert u_out.shape == (N_GRAPHS, GLOBAL_DIM)
    assert bool(jnp.all(jnp.isfinite(u_out)))
    print("KERNEL_OK")
</pallas_src>

<mosaic_0001>
module attributes {stable_mosaic.version = 11 : i64} {
  func.func @kernel(%arg0: memref<16x40xf32, #tpu.memory_space<vmem>>, %arg1: memref<32x16xf32, #tpu.memory_space<vmem>>, %arg2: memref<2x8xf32, #tpu.memory_space<vmem>>, %arg3: memref<240x48xbf16, #tpu.memory_space<vmem>>, %arg4: memref<3x40x144xbf16, #tpu.memory_space<vmem>>, %arg5: memref<3x384x40xbf16, #tpu.memory_space<vmem>>, %arg6: memref<3x16x40xf32, #tpu.memory_space<vmem>>, %arg7: memref<2x8xf32, #tpu.memory_space<vmem>>) attributes {dimension_semantics = [], scalar_prefetch = 0 : i64, scratch_operands = 0 : i64, tpu.core_type = #tpu.core_type<tc>} {
    %c0 = arith.constant 0 : index
    %c0_0 = arith.constant 0 : index
    %0 = vector.load %arg3[%c0, %c0_0] : memref<240x48xbf16, #tpu.memory_space<vmem>>, vector<240x48xbf16>
    %1 = vector.extract_strided_slice %0 {offsets = [0, 0], sizes = [96, 16], strides = [1, 1]} : vector<240x48xbf16> to vector<96x16xbf16>
    %2 = vector.extract_strided_slice %0 {offsets = [96, 0], sizes = [48, 16], strides = [1, 1]} : vector<240x48xbf16> to vector<48x16xbf16>
    %3 = vector.extract_strided_slice %0 {offsets = [144, 0], sizes = [16, 48], strides = [1, 1]} : vector<240x48xbf16> to vector<16x48xbf16>
    %4 = vector.extract_strided_slice %0 {offsets = [192, 0], sizes = [5, 40], strides = [1, 1]} : vector<240x48xbf16> to vector<5x40xbf16>
    %5 = vector.extract_strided_slice %0 {offsets = [208, 0], sizes = [16, 2], strides = [1, 1]} : vector<240x48xbf16> to vector<16x2xbf16>
    %6 = vector.extract_strided_slice %0 {offsets = [224, 0], sizes = [4, 32], strides = [1, 1]} : vector<240x48xbf16> to vector<4x32xbf16>
    %c0_1 = arith.constant 0 : index
    %c0_2 = arith.constant 0 : index
    %7 = vector.load %arg0[%c0_1, %c0_2] : memref<16x40xf32, #tpu.memory_space<vmem>>, vector<16x40xf32>
    %c0_3 = arith.constant 0 : index
    %c0_4 = arith.constant 0 : index
    %8 = vector.load %arg2[%c0_3, %c0_4] : memref<2x8xf32, #tpu.memory_space<vmem>>, vector<2x8xf32>
    %9 = vector.extract_strided_slice %5 {offsets = [0, 0], sizes = [16, 1], strides = [1, 1]} : vector<16x2xbf16> to vector<16x1xbf16>
    %cst = arith.constant 5.000000e-01 : bf16
    %10 = vector.broadcast %cst : bf16 to vector<16x1xbf16>
    %11 = arith.cmpf ogt, %9, %10 : vector<16x1xbf16>
    %12 = vector.extract_strided_slice %5 {offsets = [0, 1], sizes = [16, 1], strides = [1, 1]} : vector<16x2xbf16> to vector<16x1xbf16>
    %cst_5 = arith.constant 5.000000e-01 : bf16
    %13 = vector.broadcast %cst_5 : bf16 to vector<16x1xbf16>
    %14 = arith.cmpf ogt, %12, %13 : vector<16x1xbf16>
    %c0_6 = arith.constant 0 : index
    %c0_7 = arith.constant 0 : index
    %c0_8 = arith.constant 0 : index
    %15 = vector.load %arg4[%c0_6, %c0_7, %c0_8] : memref<3x40x144xbf16, #tpu.memory_space<vmem>>, vector<1x40x144xbf16>
    %16 = vector.shape_cast %15 : vector<1x40x144xbf16> to vector<40x144xbf16>
    %c0_9 = arith.constant 0 : index
    %c0_10 = arith.constant 0 : index
    %c0_11 = arith.constant 0 : index
    %17 = vector.load %arg5[%c0_9, %c0_10, %c0_11] : memref<3x384x40xbf16, #tpu.memory_space<vmem>>, vector<1x384x40xbf16>
    %18 = vector.shape_cast %17 : vector<1x384x40xbf16> to vector<384x40xbf16>
    %c0_12 = arith.constant 0 : index
    %c0_13 = arith.constant 0 : index
    %c0_14 = arith.constant 0 : index
    %19 = vector.load %arg6[%c0_12, %c0_13, %c0_14] : memref<3x16x40xf32, #tpu.memory_space<vmem>>, vector<1x16x40xf32>
    %20 = vector.shape_cast %19 : vector<1x16x40xf32> to vector<16x40xf32>
    %21 = arith.truncf %7 : vector<16x40xf32> to vector<16x40xbf16>
    %cst_15 = arith.constant dense<0.000000e+00> : vector<96x40xf32>
    %22 = tpu.matmul %1, %21, %cst_15 {dimension_numbers = #tpu.dot_dimension_numbers<[1], [0], [0], [1], [0, 0, 1, 1], [], []>} : vector<96x16xbf16>, vector<16x40xbf16>, vector<96x40xf32> -> vector<96x40xf32>
    %23 = arith.truncf %22 : vector<96x40xf32> to vector<96x40xbf16>
    %cst_16 = arith.constant dense<0.000000e+00> : vector<96x144xf32>
    %24 = tpu.matmul %23, %16, %cst_16 {dimension_numbers = #tpu.dot_dimension_numbers<[1], [0], [0], [1], [0, 0, 1, 1], [], []>} : vector<96x40xbf16>, vector<40x144xbf16>, vector<96x144xf32> -> vector<96x144xf32>
    %25 = vector.extract_strided_slice %24 {offsets = [0, 64], sizes = [48, 40], strides = [1, 1]} : vector<96x144xf32> to vector<48x40xf32>
    %26 = vector.extract_strided_slice %20 {offsets = [1, 0], sizes = [1, 40], strides = [1, 1]} : vector<16x40xf32> to vector<1x40xf32>
    %27 = vector.broadcast %26 : vector<1x40xf32> to vector<48x40xf32>
    %28 = arith.addf %25, %27 : vector<48x40xf32>
    %29 = vector.extract_strided_slice %24 {offsets = [48, 104], sizes = [48, 40], strides = [1, 1]} : vector<96x144xf32> to vector<48x40xf32>
    %30 = vector.extract_strided_slice %20 {offsets = [2, 0], sizes = [1, 40], strides = [1, 1]} : vector<16x40xf32> to vector<1x40xf32>
    %31 = vector.broadcast %30 : vector<1x40xf32> to vector<48x40xf32>
    %32 = arith.addf %29, %31 : vector<48x40xf32>
    %33 = arith.addf %32, %28 : vector<48x40xf32>
    %cst_17 = arith.constant 0.000000e+00 : f32
    %34 = vector.broadcast %cst_17 : f32 to vector<48x40xf32>
    %35 = arith.cmpf ogt, %33, %34 : vector<48x40xf32>
    %cst_18 = arith.constant 2.000000e-01 : f32
    %36 = vector.broadcast %cst_18 : f32 to vector<48x40xf32>
    %37 = arith.mulf %36, %33 : vector<48x40xf32>
    %38 = arith.select %35, %33, %37 : vector<48x40xi1>, vector<48x40xf32>
    %39 = arith.truncf %38 : vector<48x40xf32> to vector<48x40xbf16>
    %40 = vector.extract_strided_slice %18 {offsets = [16, 0], sizes = [40, 5], strides = [1, 1]} : vector<384x40xbf16> to vector<40x5xbf16>
    %cst_19 = arith.constant dense<0.000000e+00> : vector<48x5xf32>
    %41 = tpu.matmul %39, %40, %cst_19 {dimension_numbers = #tpu.dot_dimension_numbers<[1], [0], [0], [1], [0, 0, 1, 1], [], []>} : vector<48x40xbf16>, vector<40x5xbf16>, vector<48x5xf32> -> vector<48x5xf32>
    %cst_20 = arith.constant dense<0xFF800000> : vector<5xf32>
    %42 = vector.multi_reduction <maximumf>, %41, %cst_20 [0] : vector<48x5xf32> to vector<5xf32>
    %43 = vector.shape_cast %42 : vector<5xf32> to vector<1x5xf32>
    %44 = vector.broadcast %43 : vector<1x5xf32> to vector<48x5xf32>
    %45 = arith.subf %41, %44 : vector<48x5xf32>
    %46 = math.exp %45 : vector<48x5xf32>
    %47 = arith.truncf %46 : vector<48x5xf32> to vector<48x5xbf16>
    %cst_21 = arith.constant dense<0.000000e+00> : vector<16x5xf32>
    %48 = tpu.matmul %3, %47, %cst_21 {dimension_numbers = #tpu.dot_dimension_numbers<[1], [0], [0], [1], [0, 0, 1, 1], [], []>} : vector<16x48xbf16>, vector<48x5xbf16>, vector<16x5xf32> -> vector<16x5xf32>
    %cst_22 = arith.constant 1.000000e-16 : f32
    %49 = vector.broadcast %cst_22 : f32 to vector<16x5xf32>
    %50 = arith.addf %48, %49 : vector<16x5xf32>
    %51 = arith.truncf %50 : vector<16x5xf32> to vector<16x5xbf16>
    %cst_23 = arith.constant dense<0.000000e+00> : vector<48x5xf32>
    %52 = tpu.matmul %2, %51, %cst_23 {dimension_numbers = #tpu.dot_dimension_numbers<[1], [0], [0], [1], [0, 0, 1, 1], [], []>} : vector<48x16xbf16>, vector<16x5xbf16>, vector<48x5xf32> -> vector<48x5xf32>
    %53 = tpu.reciprocal %52 {approx = true} : vector<48x5xf32> -> vector<48x5xf32>
    %54 = arith.mulf %46, %53 : vector<48x5xf32>
    %55 = arith.truncf %54 : vector<48x5xf32> to vector<48x5xbf16>
    %cst_24 = arith.constant dense<0.000000e+00> : vector<48x40xf32>
    %56 = tpu.matmul %55, %4, %cst_24 {dimension_numbers = #tpu.dot_dimension_numbers<[1], [0], [0], [1], [0, 0, 1, 1], [], []>} : vector<48x5xbf16>, vector<5x40xbf16>, vector<48x40xf32> -> vector<48x40xf32>
    %57 = arith.mulf %28, %56 : vector<48x40xf32>
    %58 = arith.truncf %57 : vector<48x40xf32> to vector<48x40xbf16>
    %cst_25 = arith.constant dense<0.000000e+00> : vector<16x40xf32>
    %59 = tpu.matmul %3, %58, %cst_25 {dimension_numbers = #tpu.dot_dimension_numbers<[1], [0], [0], [1], [0, 0, 1, 1], [], []>} : vector<16x48xbf16>, vector<48x40xbf16>, vector<16x40xf32> -> vector<16x40xf32>
    %60 = vector.extract_strided_slice %20 {offsets = [3, 0], sizes = [1, 40], strides = [1, 1]} : vector<16x40xf32> to vector<1x40xf32>
    %61 = vector.broadcast %60 : vector<1x40xf32> to vector<16x40xf32>
    %62 = arith.addf %59, %61 : vector<16x40xf32>
    %63 = arith.addf %7, %62 : vector<16x40xf32>
    %64 = vector.extract_strided_slice %20 {offsets = [4, 0], sizes = [1, 40], strides = [1, 1]} : vector<16x40xf32> to vector<1x40xf32>
    %65 = vector.extract_strided_slice %20 {offsets = [5, 0], sizes = [1, 40], strides = [1, 1]} : vector<16x40xf32> to vector<1x40xf32>
    %cst_26 = arith.constant dense<0.000000e+00> : vector<16xf32>
    %66 = vector.multi_reduction <add>, %63, %cst_26 [1] : vector<16x40xf32> to vector<16xf32>
    %67 = vector.shape_cast %66 : vector<16xf32> to vector<16x1xf32>
    %cst_27 = arith.constant 4.000000e+01 : f32
    %68 = vector.broadcast %cst_27 : f32 to vector<16x1xf32>
    %69 = arith.divf %67, %68 : vector<16x1xf32>
    %70 = vector.broadcast %69 : vector<16x1xf32> to vector<16x40xf32>
    %71 = arith.subf %63, %70 : vector<16x40xf32>
    %72 = arith.mulf %71, %71 : vector<16x40xf32>
    %cst_28 = arith.constant dense<0.000000e+00> : vector<16xf32>
    %73 = vector.multi_reduction <add>, %72, %cst_28 [1] : vector<16x40xf32> to vector<16xf32>
    %74 = vector.shape_cast %73 : vector<16xf32> to vector<16x1xf32>
    %cst_29 = arith.constant 4.000000e+01 : f32
    %75 = vector.broadcast %cst_29 : f32 to vector<16x1xf32>
    %76 = arith.divf %74, %75 : vector<16x1xf32>
    %77 = vector.broadcast %69 : vector<16x1xf32> to vector<16x40xf32>
    %78 = arith.subf %63, %77 : vector<16x40xf32>
    %cst_30 = arith.constant 9.99999974E-6 : f32
    %79 = vector.broadcast %cst_30 : f32 to vector<16x1xf32>
    %80 = arith.addf %76, %79 : vector<16x1xf32>
    %81 = math.rsqrt %80 : vector<16x1xf32>
    %82 = vector.broadcast %81 : vector<16x1xf32> to vector<16x40xf32>
    %83 = arith.mulf %78, %82 : vector<16x40xf32>
    %84 = vector.broadcast %64 : vector<1x40xf32> to vector<16x40xf32>
    %85 = arith.mulf %83, %84 : vector<16x40xf32>
    %86 = vector.broadcast %65 : vector<1x40xf32> to vector<16x40xf32>
    %87 = arith.addf %85, %86 : vector<16x40xf32>
    %88 = arith.truncf %87 : vector<16x40xf32> to vector<16x40xbf16>
    %89 = vector.extract_strided_slice %18 {offsets = [64, 0], sizes = [40, 40], strides = [1, 1]} : vector<384x40xbf16> to vector<40x40xbf16>
    %cst_31 = arith.constant dense<0.000000e+00> : vector<16x40xf32>
    %90 = tpu.matmul %88, %89, %cst_31 {dimension_numbers = #tpu.dot_dimension_numbers<[1], [0], [0], [1], [0, 0, 1, 1], [], []>} : vector<16x40xbf16>, vector<40x40xbf16>, vector<16x40xf32> -> vector<16x40xf32>
    %91 = vector.extract_strided_slice %20 {offsets = [6, 0], sizes = [1, 40], strides = [1, 1]} : vector<16x40xf32> to vector<1x40xf32>
    %92 = vector.broadcast %91 : vector<1x40xf32> to vector<16x40xf32>
    %93 = arith.addf %90, %92 : vector<16x40xf32>
    %cst_32 = arith.constant 0.000000e+00 : f32
    %94 = vector.broadcast %cst_32 : f32 to vector<16x40xf32>
    %95 = arith.cmpf ogt, %93, %94 : vector<16x40xf32>
    %cst_33 = arith.constant 0.000000e+00 : f32
    %96 = vector.broadcast %cst_33 : f32 to vector<16x40xf32>
    %97 = arith.minimumf %93, %96 : vector<16x40xf32>
    %98 = math.exp %97 : vector<16x40xf32>
    %cst_34 = arith.constant 1.000000e+00 : f32
    %99 = vector.broadcast %cst_34 : f32 to vector<16x40xf32>
    %100 = arith.subf %98, %99 : vector<16x40xf32>
    %cst_35 = arith.constant 1.67326319 : f32
    %101 = vector.broadcast %cst_35 : f32 to vector<16x40xf32>
    %102 = arith.mulf %101, %100 : vector<16x40xf32>
    %103 = arith.select %95, %93, %102 : vector<16x40xi1>, vector<16x40xf32>
    %cst_36 = arith.constant 1.05070102 : f32
    %104 = vector.broadcast %cst_36 : f32 to vector<16x40xf32>
    %105 = arith.mulf %104, %103 : vector<16x40xf32>
    %106 = vector.extract_strided_slice %20 {offsets = [7, 0], sizes = [1, 40], strides = [1, 1]} : vector<16x40xf32> to vector<1x40xf32>
    %107 = vector.extract_strided_slice %20 {offsets = [8, 0], sizes = [1, 40], strides = [1, 1]} : vector<16x40xf32> to vector<1x40xf32>
    %cst_37 = arith.constant dense<0.000000e+00> : vector<16xf32>
    %108 = vector.multi_reduction <add>, %105, %cst_37 [1] : vector<16x40xf32> to vector<16xf32>
    %109 = vector.shape_cast %108 : vector<16xf32> to vector<16x1xf32>
    %cst_38 = arith.constant 4.000000e+01 : f32
    %110 = vector.broadcast %cst_38 : f32 to vector<16x1xf32>
    %111 = arith.divf %109, %110 : vector<16x1xf32>
    %112 = vector.broadcast %111 : vector<16x1xf32> to vector<16x40xf32>
    %113 = arith.subf %105, %112 : vector<16x40xf32>
    %114 = arith.mulf %113, %113 : vector<16x40xf32>
    %cst_39 = arith.constant dense<0.000000e+00> : vector<16xf32>
    %115 = vector.multi_reduction <add>, %114, %cst_39 [1] : vector<16x40xf32> to vector<16xf32>
    %116 = vector.shape_cast %115 : vector<16xf32> to vector<16x1xf32>
    %cst_40 = arith.constant 4.000000e+01 : f32
    %117 = vector.broadcast %cst_40 : f32 to vector<16x1xf32>
    %118 = arith.divf %116, %117 : vector<16x1xf32>
    %119 = vector.broadcast %111 : vector<16x1xf32> to vector<16x40xf32>
    %120 = arith.subf %105, %119 : vector<16x40xf32>
    %cst_41 = arith.constant 9.99999974E-6 : f32
    %121 = vector.broadcast %cst_41 : f32 to vector<16x1xf32>
    %122 = arith.addf %118, %121 : vector<16x1xf32>
    %123 = math.rsqrt %122 : vector<16x1xf32>
    %124 = vector.broadcast %123 : vector<16x1xf32> to vector<16x40xf32>
    %125 = arith.mulf %120, %124 : vector<16x40xf32>
    %126 = vector.broadcast %106 : vector<1x40xf32> to vector<16x40xf32>
    %127 = arith.mulf %125, %126 : vector<16x40xf32>
    %128 = vector.broadcast %107 : vector<1x40xf32> to vector<16x40xf32>
    %129 = arith.addf %127, %128 : vector<16x40xf32>
    %130 = arith.truncf %129 : vector<16x40xf32> to vector<16x40xbf16>
    %131 = vector.extract_strided_slice %18 {offsets = [112, 0], sizes = [40, 40], strides = [1, 1]} : vector<384x40xbf16> to vector<40x40xbf16>
    %cst_42 = arith.constant dense<0.000000e+00> : vector<16x40xf32>
    %132 = tpu.matmul %130, %131, %cst_42 {dimension_numbers = #tpu.dot_dimension_numbers<[1], [0], [0], [1], [0, 0, 1, 1], [], []>} : vector<16x40xbf16>, vector<40x40xbf16>, vector<16x40xf32> -> vector<16x40xf32>
    %133 = vector.extract_strided_slice %20 {offsets = [9, 0], sizes = [1, 40], strides = [1, 1]} : vector<16x40xf32> to vector<1x40xf32>
    %134 = vector.broadcast %133 : vector<1x40xf32> to vector<16x40xf32>
    %135 = arith.addf %132, %134 : vector<16x40xf32>
    %136 = arith.addf %87, %135 : vector<16x40xf32>
    %137 = vector.extract_strided_slice %20 {offsets = [10, 0], sizes = [1, 40], strides = [1, 1]} : vector<16x40xf32> to vector<1x40xf32>
    %138 = vector.extract_strided_slice %20 {offsets = [11, 0], sizes = [1, 40], strides = [1, 1]} : vector<16x40xf32> to vector<1x40xf32>
    %cst_43 = arith.constant dense<0.000000e+00> : vector<16xf32>
    %139 = vector.multi_reduction <add>, %136, %cst_43 [1] : vector<16x40xf32> to vector<16xf32>
    %140 = vector.shape_cast %139 : vector<16xf32> to vector<16x1xf32>
    %cst_44 = arith.constant 4.000000e+01 : f32
    %141 = vector.broadcast %cst_44 : f32 to vector<16x1xf32>
    %142 = arith.divf %140, %141 : vector<16x1xf32>
    %143 = vector.broadcast %142 : vector<16x1xf32> to vector<16x40xf32>
    %144 = arith.subf %136, %143 : vector<16x40xf32>
    %145 = arith.mulf %144, %144 : vector<16x40xf32>
    %cst_45 = arith.constant dense<0.000000e+00> : vector<16xf32>
    %146 = vector.multi_reduction <add>, %145, %cst_45 [1] : vector<16x40xf32> to vector<16xf32>
    %147 = vector.shape_cast %146 : vector<16xf32> to vector<16x1xf32>
    %cst_46 = arith.constant 4.000000e+01 : f32
    %148 = vector.broadcast %cst_46 : f32 to vector<16x1xf32>
    %149 = arith.divf %147, %148 : vector<16x1xf32>
    %150 = vector.broadcast %142 : vector<16x1xf32> to vector<16x40xf32>
    %151 = arith.subf %136, %150 : vector<16x40xf32>
    %cst_47 = arith.constant 9.99999974E-6 : f32
    %152 = vector.broadcast %cst_47 : f32 to vector<16x1xf32>
    %153 = arith.addf %149, %152 : vector<16x1xf32>
    %154 = math.rsqrt %153 : vector<16x1xf32>
    %155 = vector.broadcast %154 : vector<16x1xf32> to vector<16x40xf32>
    %156 = arith.mulf %151, %155 : vector<16x40xf32>
    %157 = vector.broadcast %137 : vector<1x40xf32> to vector<16x40xf32>
    %158 = arith.mulf %156, %157 : vector<16x40xf32>
    %159 = vector.broadcast %138 : vector<1x40xf32> to vector<16x40xf32>
    %160 = arith.addf %158, %159 : vector<16x40xf32>
    %161 = arith.truncf %160 : vector<16x40xf32> to vector<16x40xbf16>
    %162 = arith.mulf %160, %160 : vector<16x40xf32>
    %163 = arith.truncf %162 : vector<16x40xf32> to vector<16x40xbf16>
    %164 = tpu.concatenate %161, %163 in 0 : vector<16x40xbf16>, vector<16x40xbf16> -> vector<32x40xbf16>
    %cst_48 = arith.constant dense<0.000000e+00> : vector<4x40xf32>
    %165 = tpu.matmul %6, %164, %cst_48 {dimension_numbers = #tpu.dot_dimension_numbers<[1], [0], [0], [1], [0, 0, 1, 1], [], []>} : vector<4x32xbf16>, vector<32x40xbf16>, vector<4x40xf32> -> vector<4x40xf32>
    %166 = vector.extract_strided_slice %165 {offsets = [0, 0], sizes = [2, 40], strides = [1, 1]} : vector<4x40xf32> to vector<2x40xf32>
    %167 = vector.extract_strided_slice %165 {offsets = [2, 0], sizes = [2, 40], strides = [1, 1]} : vector<4x40xf32> to vector<2x40xf32>
    %168 = arith.mulf %166, %166 : vector<2x40xf32>
    %169 = arith.subf %167, %168 : vector<2x40xf32>
    %cst_49 = arith.constant 0.000000e+00 : f32
    %170 = vector.broadcast %cst_49 : f32 to vector<2x40xf32>
    %171 = arith.maximumf %169, %170 : vector<2x40xf32>
    %cst_50 = arith.constant 9.99999974E-6 : f32
    %172 = vector.broadcast %cst_50 : f32 to vector<2x40xf32>
    %173 = arith.addf %171, %172 : vector<2x40xf32>
    %174 = math.sqrt %173 : vector<2x40xf32>
    %cst_51 = arith.constant 0.000000e+00 : f32
    %175 = vector.broadcast %cst_51 : f32 to vector<16x40xf32>
    %176 = arith.subf %175, %160 : vector<16x40xf32>
    %177 = tpu.concatenate %160, %176 in 1 : vector<16x40xf32>, vector<16x40xf32> -> vector<16x80xf32>
    %cst_52 = arith.constant -1.000000e+30 : f32
    %178 = vector.shape_cast %11 : vector<16x1xi1> to vector<16x1xi1>
    %179 = vector.broadcast %178 : vector<16x1xi1> to vector<16x80xi1>
    %180 = vector.broadcast %cst_52 : f32 to vector<16x80xf32>
    %181 = arith.select %179, %177, %180 : vector<16x80xi1>, vector<16x80xf32>
    %cst_53 = arith.constant dense<0xFF800000> : vector<80xf32>
    %182 = vector.multi_reduction <maximumf>, %181, %cst_53 [0] : vector<16x80xf32> to vector<80xf32>
    %183 = vector.shape_cast %182 : vector<80xf32> to vector<1x80xf32>
    %cst_54 = arith.constant -1.000000e+30 : f32
    %184 = vector.shape_cast %14 : vector<16x1xi1> to vector<16x1xi1>
    %185 = vector.broadcast %184 : vector<16x1xi1> to vector<16x80xi1>
    %186 = vector.broadcast %cst_54 : f32 to vector<16x80xf32>
    %187 = arith.select %185, %177, %186 : vector<16x80xi1>, vector<16x80xf32>
    %cst_55 = arith.constant dense<0xFF800000> : vector<80xf32>
    %188 = vector.multi_reduction <maximumf>, %187, %cst_55 [0] : vector<16x80xf32> to vector<80xf32>
    %189 = vector.shape_cast %188 : vector<80xf32> to vector<1x80xf32>
    %190 = tpu.concatenate %183, %189 in 0 : vector<1x80xf32>, vector<1x80xf32> -> vector<2x80xf32>
    %191 = vector.extract_strided_slice %190 {offsets = [0, 0], sizes = [2, 40], strides = [1, 1]} : vector<2x80xf32> to vector<2x40xf32>
    %192 = vector.extract_strided_slice %190 {offsets = [0, 40], sizes = [2, 40], strides = [1, 1]} : vector<2x80xf32> to vector<2x40xf32>
    %cst_56 = arith.constant 0.000000e+00 : f32
    %193 = vector.broadcast %cst_56 : f32 to vector<2x40xf32>
    %194 = arith.subf %193, %192 : vector<2x40xf32>
    %195 = tpu.concatenate %8, %166, %174, %191, %194 in 1 : vector<2x8xf32>, vector<2x40xf32>, vector<2x40xf32>, vector<2x40xf32>, vector<2x40xf32> -> vector<2x168xf32>
    %196 = arith.truncf %195 : vector<2x168xf32> to vector<2x168xbf16>
    %197 = vector.extract_strided_slice %18 {offsets = [160, 0], sizes = [168, 40], strides = [1, 1]} : vector<384x40xbf16> to vector<168x40xbf16>
    %cst_57 = arith.constant dense<0.000000e+00> : vector<2x40xf32>
    %198 = tpu.matmul %196, %197, %cst_57 {dimension_numbers = #tpu.dot_dimension_numbers<[1], [0], [0], [1], [0, 0, 1, 1], [], []>} : vector<2x168xbf16>, vector<168x40xbf16>, vector<2x40xf32> -> vector<2x40xf32>
    %199 = vector.extract_strided_slice %20 {offsets = [12, 0], sizes = [1, 40], strides = [1, 1]} : vector<16x40xf32> to vector<1x40xf32>
    %200 = vector.broadcast %199 : vector<1x40xf32> to vector<2x40xf32>
    %201 = arith.addf %198, %200 : vector<2x40xf32>
    %cst_58 = arith.constant 0.000000e+00 : f32
    %202 = vector.broadcast %cst_58 : f32 to vector<2x40xf32>
    %203 = arith.cmpf ogt, %201, %202 : vector<2x40xf32>
    %cst_59 = arith.constant 0.000000e+00 : f32
    %204 = vector.broadcast %cst_59 : f32 to vector<2x40xf32>
    %205 = arith.minimumf %201, %204 : vector<2x40xf32>
    %206 = math.exp %205 : vector<2x40xf32>
    %cst_60 = arith.constant 1.000000e+00 : f32
    %207 = vector.broadcast %cst_60 : f32 to vector<2x40xf32>
    %208 = arith.subf %206, %207 : vector<2x40xf32>
    %cst_61 = arith.constant 1.67326319 : f32
    %209 = vector.broadcast %cst_61 : f32 to vector<2x40xf32>
    %210 = arith.mulf %209, %208 : vector<2x40xf32>
    %211 = arith.select %203, %201, %210 : vector<2x40xi1>, vector<2x40xf32>
    %cst_62 = arith.constant 1.05070102 : f32
    %212 = vector.broadcast %cst_62 : f32 to vector<2x40xf32>
    %213 = arith.mulf %212, %211 : vector<2x40xf32>
    %214 = vector.extract_strided_slice %20 {offsets = [13, 0], sizes = [1, 40], strides = [1, 1]} : vector<16x40xf32> to vector<1x40xf32>
    %215 = vector.extract_strided_slice %20 {offsets = [14, 0], sizes = [1, 40], strides = [1, 1]} : vector<16x40xf32> to vector<1x40xf32>
    %cst_63 = arith.constant dense<0.000000e+00> : vector<2xf32>
    %216 = vector.multi_reduction <add>, %213, %cst_63 [1] : vector<2x40xf32> to vector<2xf32>
    %217 = vector.shape_cast %216 : vector<2xf32> to vector<2x1xf32>
    %cst_64 = arith.constant 4.000000e+01 : f32
    %218 = vector.broadcast %cst_64 : f32 to vector<2x1xf32>
    %219 = arith.divf %217, %218 : vector<2x1xf32>
    %220 = vector.broadcast %219 : vector<2x1xf32> to vector<2x40xf32>
    %221 = arith.subf %213, %220 : vector<2x40xf32>
    %222 = arith.mulf %221, %221 : vector<2x40xf32>
    %cst_65 = arith.constant dense<0.000000e+00> : vector<2xf32>
    %223 = vector.multi_reduction <add>, %222, %cst_65 [1] : vector<2x40xf32> to vector<2xf32>
    %224 = vector.shape_cast %223 : vector<2xf32> to vector<2x1xf32>
    %cst_66 = arith.constant 4.000000e+01 : f32
    %225 = vector.broadcast %cst_66 : f32 to vector<2x1xf32>
    %226 = arith.divf %224, %225 : vector<2x1xf32>
    %227 = vector.broadcast %219 : vector<2x1xf32> to vector<2x40xf32>
    %228 = arith.subf %213, %227 : vector<2x40xf32>
    %cst_67 = arith.constant 9.99999974E-6 : f32
    %229 = vector.broadcast %cst_67 : f32 to vector<2x1xf32>
    %230 = arith.addf %226, %229 : vector<2x1xf32>
    %231 = math.rsqrt %230 : vector<2x1xf32>
    %232 = vector.broadcast %231 : vector<2x1xf32> to vector<2x40xf32>
    %233 = arith.mulf %228, %232 : vector<2x40xf32>
    %234 = vector.broadcast %214 : vector<1x40xf32> to vector<2x40xf32>
    %235 = arith.mulf %233, %234 : vector<2x40xf32>
    %236 = vector.broadcast %215 : vector<1x40xf32> to vector<2x40xf32>
    %237 = arith.addf %235, %236 : vector<2x40xf32>
    %238 = arith.truncf %237 : vector<2x40xf32> to vector<2x40xbf16>
    %239 = vector.extract_strided_slice %18 {offsets = [336, 0], sizes = [40, 8], strides = [1, 1]} : vector<384x40xbf16> to vector<40x8xbf16>
    %cst_68 = arith.constant dense<0.000000e+00> : vector<2x8xf32>
    %240 = tpu.matmul %238, %239, %cst_68 {dimension_numbers = #tpu.dot_dimension_numbers<[1], [0], [0], [1], [0, 0, 1, 1], [], []>} : vector<2x40xbf16>, vector<40x8xbf16>, vector<2x8xf32> -> vector<2x8xf32>
    %241 = vector.extract_strided_slice %20 {offsets = [15, 0], sizes = [1, 8], strides = [1, 1]} : vector<16x40xf32> to vector<1x8xf32>
    %242 = vector.broadcast %241 : vector<1x8xf32> to vector<2x8xf32>
    %243 = arith.addf %240, %242 : vector<2x8xf32>
    %c1 = arith.constant 1 : index
    %c0_69 = arith.constant 0 : index
    %c0_70 = arith.constant 0 : index
    %244 = vector.load %arg4[%c1, %c0_69, %c0_70] : memref<3x40x144xbf16, #tpu.memory_space<vmem>>, vector<1x40x144xbf16>
    %245 = vector.shape_cast %244 : vector<1x40x144xbf16> to vector<40x144xbf16>
    %c1_71 = arith.constant 1 : index
    %c0_72 = arith.constant 0 : index
    %c0_73 = arith.constant 0 : index
    %246 = vector.load %arg5[%c1_71, %c0_72, %c0_73] : memref<3x384x40xbf16, #tpu.memory_space<vmem>>, vector<1x384x40xbf16>
    %247 = vector.shape_cast %246 : vector<1x384x40xbf16> to vector<384x40xbf16>
    %c1_74 = arith.constant 1 : index
    %c0_75 = arith.constant 0 : index
    %c0_76 = arith.constant 0 : index
    %248 = vector.load %arg6[%c1_74, %c0_75, %c0_76] : memref<3x16x40xf32, #tpu.memory_space<vmem>>, vector<1x16x40xf32>
    %249 = vector.shape_cast %248 : vector<1x16x40xf32> to vector<16x40xf32>
    %250 = arith.truncf %160 : vector<16x40xf32> to vector<16x40xbf16>
    %cst_77 = arith.constant dense<0.000000e+00> : vector<96x40xf32>
    %251 = tpu.matmul %1, %250, %cst_77 {dimension_numbers = #tpu.dot_dimension_numbers<[1], [0], [0], [1], [0, 0, 1, 1], [], []>} : vector<96x16xbf16>, vector<16x40xbf16>, vector<96x40xf32> -> vector<96x40xf32>
    %252 = arith.truncf %251 : vector<96x40xf32> to vector<96x40xbf16>
    %cst_78 = arith.constant dense<0.000000e+00> : vector<96x144xf32>
    %253 = tpu.matmul %252, %245, %cst_78 {dimension_numbers = #tpu.dot_dimension_numbers<[1], [0], [0], [1], [0, 0, 1, 1], [], []>} : vector<96x40xbf16>, vector<40x144xbf16>, vector<96x144xf32> -> vector<96x144xf32>
    %254 = vector.extract_strided_slice %253 {offsets = [0, 64], sizes = [48, 40], strides = [1, 1]} : vector<96x144xf32> to vector<48x40xf32>
    %255 = vector.extract_strided_slice %249 {offsets = [1, 0], sizes = [1, 40], strides = [1, 1]} : vector<16x40xf32> to vector<1x40xf32>
    %256 = vector.broadcast %255 : vector<1x40xf32> to vector<48x40xf32>
    %257 = arith.addf %254, %256 : vector<48x40xf32>
    %258 = vector.extract_strided_slice %253 {offsets = [48, 104], sizes = [48, 40], strides = [1, 1]} : vector<96x144xf32> to vector<48x40xf32>
    %259 = vector.extract_strided_slice %249 {offsets = [2, 0], sizes = [1, 40], strides = [1, 1]} : vector<16x40xf32> to vector<1x40xf32>
    %260 = vector.broadcast %259 : vector<1x40xf32> to vector<48x40xf32>
    %261 = arith.addf %258, %260 : vector<48x40xf32>
    %262 = arith.addf %261, %257 : vector<48x40xf32>
    %cst_79 = arith.constant 0.000000e+00 : f32
    %263 = vector.broadcast %cst_79 : f32 to vector<48x40xf32>
    %264 = arith.cmpf ogt, %262, %263 : vector<48x40xf32>
    %cst_80 = arith.constant 2.000000e-01 : f32
    %265 = vector.broadcast %cst_80 : f32 to vector<48x40xf32>
    %266 = arith.mulf %265, %262 : vector<48x40xf32>
    %267 = arith.select %264, %262, %266 : vector<48x40xi1>, vector<48x40xf32>
    %268 = arith.truncf %267 : vector<48x40xf32> to vector<48x40xbf16>
    %269 = vector.extract_strided_slice %247 {offsets = [16, 0], sizes = [40, 5], strides = [1, 1]} : vector<384x40xbf16> to vector<40x5xbf16>
    %cst_81 = arith.constant dense<0.000000e+00> : vector<48x5xf32>
    %270 = tpu.matmul %268, %269, %cst_81 {dimension_numbers = #tpu.dot_dimension_numbers<[1], [0], [0], [1], [0, 0, 1, 1], [], []>} : vector<48x40xbf16>, vector<40x5xbf16>, vector<48x5xf32> -> vector<48x5xf32>
    %cst_82 = arith.constant dense<0xFF800000> : vector<5xf32>
    %271 = vector.multi_reduction <maximumf>, %270, %cst_82 [0] : vector<48x5xf32> to vector<5xf32>
    %272 = vector.shape_cast %271 : vector<5xf32> to vector<1x5xf32>
    %273 = vector.broadcast %272 : vector<1x5xf32> to vector<48x5xf32>
    %274 = arith.subf %270, %273 : vector<48x5xf32>
    %275 = math.exp %274 : vector<48x5xf32>
    %276 = arith.truncf %275 : vector<48x5xf32> to vector<48x5xbf16>
    %cst_83 = arith.constant dense<0.000000e+00> : vector<16x5xf32>
    %277 = tpu.matmul %3, %276, %cst_83 {dimension_numbers = #tpu.dot_dimension_numbers<[1], [0], [0], [1], [0, 0, 1, 1], [], []>} : vector<16x48xbf16>, vector<48x5xbf16>, vector<16x5xf32> -> vector<16x5xf32>
    %cst_84 = arith.constant 1.000000e-16 : f32
    %278 = vector.broadcast %cst_84 : f32 to vector<16x5xf32>
    %279 = arith.addf %277, %278 : vector<16x5xf32>
    %280 = arith.truncf %279 : vector<16x5xf32> to vector<16x5xbf16>
    %cst_85 = arith.constant dense<0.000000e+00> : vector<48x5xf32>
    %281 = tpu.matmul %2, %280, %cst_85 {dimension_numbers = #tpu.dot_dimension_numbers<[1], [0], [0], [1], [0, 0, 1, 1], [], []>} : vector<48x16xbf16>, vector<16x5xbf16>, vector<48x5xf32> -> vector<48x5xf32>
    %282 = tpu.reciprocal %281 {approx = true} : vector<48x5xf32> -> vector<48x5xf32>
    %283 = arith.mulf %275, %282 : vector<48x5xf32>
    %284 = arith.truncf %283 : vector<48x5xf32> to vector<48x5xbf16>
    %cst_86 = arith.constant dense<0.000000e+00> : vector<48x40xf32>
    %285 = tpu.matmul %284, %4, %cst_86 {dimension_numbers = #tpu.dot_dimension_numbers<[1], [0], [0], [1], [0, 0, 1, 1], [], []>} : vector<48x5xbf16>, vector<5x40xbf16>, vector<48x40xf32> -> vector<48x40xf32>
    %286 = arith.mulf %257, %285 : vector<48x40xf32>
    %287 = arith.truncf %286 : vector<48x40xf32> to vector<48x40xbf16>
    %cst_87 = arith.constant dense<0.000000e+00> : vector<16x40xf32>
    %288 = tpu.matmul %3, %287, %cst_87 {dimension_numbers = #tpu.dot_dimension_numbers<[1], [0], [0], [1], [0, 0, 1, 1], [], []>} : vector<16x48xbf16>, vector<48x40xbf16>, vector<16x40xf32> -> vector<16x40xf32>
    %289 = vector.extract_strided_slice %249 {offsets = [3, 0], sizes = [1, 40], strides = [1, 1]} : vector<16x40xf32> to vector<1x40xf32>
    %290 = vector.broadcast %289 : vector<1x40xf32> to vector<16x40xf32>
    %291 = arith.addf %288, %290 : vector<16x40xf32>
    %292 = arith.addf %160, %291 : vector<16x40xf32>
    %293 = vector.extract_strided_slice %249 {offsets = [4, 0], sizes = [1, 40], strides = [1, 1]} : vector<16x40xf32> to vector<1x40xf32>
    %294 = vector.extract_strided_slice %249 {offsets = [5, 0], sizes = [1, 40], strides = [1, 1]} : vector<16x40xf32> to vector<1x40xf32>
    %cst_88 = arith.constant dense<0.000000e+00> : vector<16xf32>
    %295 = vector.multi_reduction <add>, %292, %cst_88 [1] : vector<16x40xf32> to vector<16xf32>
    %296 = vector.shape_cast %295 : vector<16xf32> to vector<16x1xf32>
    %cst_89 = arith.constant 4.000000e+01 : f32
    %297 = vector.broadcast %cst_89 : f32 to vector<16x1xf32>
    %298 = arith.divf %296, %297 : vector<16x1xf32>
    %299 = vector.broadcast %298 : vector<16x1xf32> to vector<16x40xf32>
    %300 = arith.subf %292, %299 : vector<16x40xf32>
    %301 = arith.mulf %300, %300 : vector<16x40xf32>
    %cst_90 = arith.constant dense<0.000000e+00> : vector<16xf32>
    %302 = vector.multi_reduction <add>, %301, %cst_90 [1] : vector<16x40xf32> to vector<16xf32>
    %303 = vector.shape_cast %302 : vector<16xf32> to vector<16x1xf32>
    %cst_91 = arith.constant 4.000000e+01 : f32
    %304 = vector.broadcast %cst_91 : f32 to vector<16x1xf32>
    %305 = arith.divf %303, %304 : vector<16x1xf32>
    %306 = vector.broadcast %298 : vector<16x1xf32> to vector<16x40xf32>
    %307 = arith.subf %292, %306 : vector<16x40xf32>
    %cst_92 = arith.constant 9.99999974E-6 : f32
    %308 = vector.broadcast %cst_92 : f32 to vector<16x1xf32>
    %309 = arith.addf %305, %308 : vector<16x1xf32>
    %310 = math.rsqrt %309 : vector<16x1xf32>
    %311 = vector.broadcast %310 : vector<16x1xf32> to vector<16x40xf32>
    %312 = arith.mulf %307, %311 : vector<16x40xf32>
    %313 = vector.broadcast %293 : vector<1x40xf32> to vector<16x40xf32>
    %314 = arith.mulf %312, %313 : vector<16x40xf32>
    %315 = vector.broadcast %294 : vector<1x40xf32> to vector<16x40xf32>
    %316 = arith.addf %314, %315 : vector<16x40xf32>
    %317 = arith.truncf %316 : vector<16x40xf32> to vector<16x40xbf16>
    %318 = vector.extract_strided_slice %247 {offsets = [64, 0], sizes = [40, 40], strides = [1, 1]} : vector<384x40xbf16> to vector<40x40xbf16>
    %cst_93 = arith.constant dense<0.000000e+00> : vector<16x40xf32>
    %319 = tpu.matmul %317, %318, %cst_93 {dimension_numbers = #tpu.dot_dimension_numbers<[1], [0], [0], [1], [0, 0, 1, 1], [], []>} : vector<16x40xbf16>, vector<40x40xbf16>, vector<16x40xf32> -> vector<16x40xf32>
    %320 = vector.extract_strided_slice %249 {offsets = [6, 0], sizes = [1, 40], strides = [1, 1]} : vector<16x40xf32> to vector<1x40xf32>
    %321 = vector.broadcast %320 : vector<1x40xf32> to vector<16x40xf32>
    %322 = arith.addf %319, %321 : vector<16x40xf32>
    %cst_94 = arith.constant 0.000000e+00 : f32
    %323 = vector.broadcast %cst_94 : f32 to vector<16x40xf32>
    %324 = arith.cmpf ogt, %322, %323 : vector<16x40xf32>
    %cst_95 = arith.constant 0.000000e+00 : f32
    %325 = vector.broadcast %cst_95 : f32 to vector<16x40xf32>
    %326 = arith.minimumf %322, %325 : vector<16x40xf32>
    %327 = math.exp %326 : vector<16x40xf32>
    %cst_96 = arith.constant 1.000000e+00 : f32
    %328 = vector.broadcast %cst_96 : f32 to vector<16x40xf32>
    %329 = arith.subf %327, %328 : vector<16x40xf32>
    %cst_97 = arith.constant 1.67326319 : f32
    %330 = vector.broadcast %cst_97 : f32 to vector<16x40xf32>
    %331 = arith.mulf %330, %329 : vector<16x40xf32>
    %332 = arith.select %324, %322, %331 : vector<16x40xi1>, vector<16x40xf32>
    %cst_98 = arith.constant 1.05070102 : f32
    %333 = vector.broadcast %cst_98 : f32 to vector<16x40xf32>
    %334 = arith.mulf %333, %332 : vector<16x40xf32>
    %335 = vector.extract_strided_slice %249 {offsets = [7, 0], sizes = [1, 40], strides = [1, 1]} : vector<16x40xf32> to vector<1x40xf32>
    %336 = vector.extract_strided_slice %249 {offsets = [8, 0], sizes = [1, 40], strides = [1, 1]} : vector<16x40xf32> to vector<1x40xf32>
    %cst_99 = arith.constant dense<0.000000e+00> : vector<16xf32>
    %337 = vector.multi_reduction <add>, %334, %cst_99 [1] : vector<16x40xf32> to vector<16xf32>
    %338 = vector.shape_cast %337 : vector<16xf32> to vector<16x1xf32>
    %cst_100 = arith.constant 4.000000e+01 : f32
    %339 = vector.broadcast %cst_100 : f32 to vector<16x1xf32>
    %340 = arith.divf %338, %339 : vector<16x1xf32>
    %341 = vector.broadcast %340 : vector<16x1xf32> to vector<16x40xf32>
    %342 = arith.subf %334, %341 : vector<16x40xf32>
    %343 = arith.mulf %342, %342 : vector<16x40xf32>
    %cst_101 = arith.constant dense<0.000000e+00> : vector<16xf32>
    %344 = vector.multi_reduction <add>, %343, %cst_101 [1] : vector<16x40xf32> to vector<16xf32>
    %345 = vector.shape_cast %344 : vector<16xf32> to vector<16x1xf32>
    %cst_102 = arith.constant 4.000000e+01 : f32
    %346 = vector.broadcast %cst_102 : f32 to vector<16x1xf32>
    %347 = arith.divf %345, %346 : vector<16x1xf32>
    %348 = vector.broadcast %340 : vector<16x1xf32> to vector<16x40xf32>
    %349 = arith.subf %334, %348 : vector<16x40xf32>
    %cst_103 = arith.constant 9.99999974E-6 : f32
    %350 = vector.broadcast %cst_103 : f32 to vector<16x1xf32>
    %351 = arith.addf %347, %350 : vector<16x1xf32>
    %352 = math.rsqrt %351 : vector<16x1xf32>
    %353 = vector.broadcast %352 : vector<16x1xf32> to vector<16x40xf32>
    %354 = arith.mulf %349, %353 : vector<16x40xf32>
    %355 = vector.broadcast %335 : vector<1x40xf32> to vector<16x40xf32>
    %356 = arith.mulf %354, %355 : vector<16x40xf32>
    %357 = vector.broadcast %336 : vector<1x40xf32> to vector<16x40xf32>
    %358 = arith.addf %356, %357 : vector<16x40xf32>
    %359 = arith.truncf %358 : vector<16x40xf32> to vector<16x40xbf16>
    %360 = vector.extract_strided_slice %247 {offsets = [112, 0], sizes = [40, 40], strides = [1, 1]} : vector<384x40xbf16> to vector<40x40xbf16>
    %cst_104 = arith.constant dense<0.000000e+00> : vector<16x40xf32>
    %361 = tpu.matmul %359, %360, %cst_104 {dimension_numbers = #tpu.dot_dimension_numbers<[1], [0], [0], [1], [0, 0, 1, 1], [], []>} : vector<16x40xbf16>, vector<40x40xbf16>, vector<16x40xf32> -> vector<16x40xf32>
    %362 = vector.extract_strided_slice %249 {offsets = [9, 0], sizes = [1, 40], strides = [1, 1]} : vector<16x40xf32> to vector<1x40xf32>
    %363 = vector.broadcast %362 : vector<1x40xf32> to vector<16x40xf32>
    %364 = arith.addf %361, %363 : vector<16x40xf32>
    %365 = arith.addf %316, %364 : vector<16x40xf32>
    %366 = vector.extract_strided_slice %249 {offsets = [10, 0], sizes = [1, 40], strides = [1, 1]} : vector<16x40xf32> to vector<1x40xf32>
    %367 = vector.extract_strided_slice %249 {offsets = [11, 0], sizes = [1, 40], strides = [1, 1]} : vector<16x40xf32> to vector<1x40xf32>
    %cst_105 = arith.constant dense<0.000000e+00> : vector<16xf32>
    %368 = vector.multi_reduction <add>, %365, %cst_105 [1] : vector<16x40xf32> to vector<16xf32>
    %369 = vector.shape_cast %368 : vector<16xf32> to vector<16x1xf32>
    %cst_106 = arith.constant 4.000000e+01 : f32
    %370 = vector.broadcast %cst_106 : f32 to vector<16x1xf32>
    %371 = arith.divf %369, %370 : vector<16x1xf32>
    %372 = vector.broadcast %371 : vector<16x1xf32> to vector<16x40xf32>
    %373 = arith.subf %365, %372 : vector<16x40xf32>
    %374 = arith.mulf %373, %373 : vector<16x40xf32>
    %cst_107 = arith.constant dense<0.000000e+00> : vector<16xf32>
    %375 = vector.multi_reduction <add>, %374, %cst_107 [1] : vector<16x40xf32> to vector<16xf32>
    %376 = vector.shape_cast %375 : vector<16xf32> to vector<16x1xf32>
    %cst_108 = arith.constant 4.000000e+01 : f32
    %377 = vector.broadcast %cst_108 : f32 to vector<16x1xf32>
    %378 = arith.divf %376, %377 : vector<16x1xf32>
    %379 = vector.broadcast %371 : vector<16x1xf32> to vector<16x40xf32>
    %380 = arith.subf %365, %379 : vector<16x40xf32>
    %cst_109 = arith.constant 9.99999974E-6 : f32
    %381 = vector.broadcast %cst_109 : f32 to vector<16x1xf32>
    %382 = arith.addf %378, %381 : vector<16x1xf32>
    %383 = math.rsqrt %382 : vector<16x1xf32>
    %384 = vector.broadcast %383 : vector<16x1xf32> to vector<16x40xf32>
    %385 = arith.mulf %380, %384 : vector<16x40xf32>
    %386 = vector.broadcast %366 : vector<1x40xf32> to vector<16x40xf32>
    %387 = arith.mulf %385, %386 : vector<16x40xf32>
    %388 = vector.broadcast %367 : vector<1x40xf32> to vector<16x40xf32>
    %389 = arith.addf %387, %388 : vector<16x40xf32>
    %390 = arith.truncf %389 : vector<16x40xf32> to vector<16x40xbf16>
    %391 = arith.mulf %389, %389 : vector<16x40xf32>
    %392 = arith.truncf %391 : vector<16x40xf32> to vector<16x40xbf16>
    %393 = tpu.concatenate %390, %392 in 0 : vector<16x40xbf16>, vector<16x40xbf16> -> vector<32x40xbf16>
    %cst_110 = arith.constant dense<0.000000e+00> : vector<4x40xf32>
    %394 = tpu.matmul %6, %393, %cst_110 {dimension_numbers = #tpu.dot_dimension_numbers<[1], [0], [0], [1], [0, 0, 1, 1], [], []>} : vector<4x32xbf16>, vector<32x40xbf16>, vector<4x40xf32> -> vector<4x40xf32>
    %395 = vector.extract_strided_slice %394 {offsets = [0, 0], sizes = [2, 40], strides = [1, 1]} : vector<4x40xf32> to vector<2x40xf32>
    %396 = vector.extract_strided_slice %394 {offsets = [2, 0], sizes = [2, 40], strides = [1, 1]} : vector<4x40xf32> to vector<2x40xf32>
    %397 = arith.mulf %395, %395 : vector<2x40xf32>
    %398 = arith.subf %396, %397 : vector<2x40xf32>
    %cst_111 = arith.constant 0.000000e+00 : f32
    %399 = vector.broadcast %cst_111 : f32 to vector<2x40xf32>
    %400 = arith.maximumf %398, %399 : vector<2x40xf32>
    %cst_112 = arith.constant 9.99999974E-6 : f32
    %401 = vector.broadcast %cst_112 : f32 to vector<2x40xf32>
    %402 = arith.addf %400, %401 : vector<2x40xf32>
    %403 = math.sqrt %402 : vector<2x40xf32>
    %cst_113 = arith.constant 0.000000e+00 : f32
    %404 = vector.broadcast %cst_113 : f32 to vector<16x40xf32>
    %405 = arith.subf %404, %389 : vector<16x40xf32>
    %406 = tpu.concatenate %389, %405 in 1 : vector<16x40xf32>, vector<16x40xf32> -> vector<16x80xf32>
    %cst_114 = arith.constant -1.000000e+30 : f32
    %407 = vector.shape_cast %11 : vector<16x1xi1> to vector<16x1xi1>
    %408 = vector.broadcast %407 : vector<16x1xi1> to vector<16x80xi1>
    %409 = vector.broadcast %cst_114 : f32 to vector<16x80xf32>
    %410 = arith.select %408, %406, %409 : vector<16x80xi1>, vector<16x80xf32>
    %cst_115 = arith.constant dense<0xFF800000> : vector<80xf32>
    %411 = vector.multi_reduction <maximumf>, %410, %cst_115 [0] : vector<16x80xf32> to vector<80xf32>
    %412 = vector.shape_cast %411 : vector<80xf32> to vector<1x80xf32>
    %cst_116 = arith.constant -1.000000e+30 : f32
    %413 = vector.shape_cast %14 : vector<16x1xi1> to vector<16x1xi1>
    %414 = vector.broadcast %413 : vector<16x1xi1> to vector<16x80xi1>
    %415 = vector.broadcast %cst_116 : f32 to vector<16x80xf32>
    %416 = arith.select %414, %406, %415 : vector<16x80xi1>, vector<16x80xf32>
    %cst_117 = arith.constant dense<0xFF800000> : vector<80xf32>
    %417 = vector.multi_reduction <maximumf>, %416, %cst_117 [0] : vector<16x80xf32> to vector<80xf32>
    %418 = vector.shape_cast %417 : vector<80xf32> to vector<1x80xf32>
    %419 = tpu.concatenate %412, %418 in 0 : vector<1x80xf32>, vector<1x80xf32> -> vector<2x80xf32>
    %420 = vector.extract_strided_slice %419 {offsets = [0, 0], sizes = [2, 40], strides = [1, 1]} : vector<2x80xf32> to vector<2x40xf32>
    %421 = vector.extract_strided_slice %419 {offsets = [0, 40], sizes = [2, 40], strides = [1, 1]} : vector<2x80xf32> to vector<2x40xf32>
    %cst_118 = arith.constant 0.000000e+00 : f32
    %422 = vector.broadcast %cst_118 : f32 to vector<2x40xf32>
    %423 = arith.subf %422, %421 : vector<2x40xf32>
    %424 = tpu.concatenate %243, %395, %403, %420, %423 in 1 : vector<2x8xf32>, vector<2x40xf32>, vector<2x40xf32>, vector<2x40xf32>, vector<2x40xf32> -> vector<2x168xf32>
    %425 = arith.truncf %424 : vector<2x168xf32> to vector<2x168xbf16>
    %426 = vector.extract_strided_slice %247 {offsets = [160, 0], sizes = [168, 40], strides = [1, 1]} : vector<384x40xbf16> to vector<168x40xbf16>
    %cst_119 = arith.constant dense<0.000000e+00> : vector<2x40xf32>
    %427 = tpu.matmul %425, %426, %cst_119 {dimension_numbers = #tpu.dot_dimension_numbers<[1], [0], [0], [1], [0, 0, 1, 1], [], []>} : vector<2x168xbf16>, vector<168x40xbf16>, vector<2x40xf32> -> vector<2x40xf32>
    %428 = vector.extract_strided_slice %249 {offsets = [12, 0], sizes = [1, 40], strides = [1, 1]} : vector<16x40xf32> to vector<1x40xf32>
    %429 = vector.broadcast %428 : vector<1x40xf32> to vector<2x40xf32>
    %430 = arith.addf %427, %429 : vector<2x40xf32>
    %cst_120 = arith.constant 0.000000e+00 : f32
    %431 = vector.broadcast %cst_120 : f32 to vector<2x40xf32>
    %432 = arith.cmpf ogt, %430, %431 : vector<2x40xf32>
    %cst_121 = arith.constant 0.000000e+00 : f32
    %433 = vector.broadcast %cst_121 : f32 to vector<2x40xf32>
    %434 = arith.minimumf %430, %433 : vector<2x40xf32>
    %435 = math.exp %434 : vector<2x40xf32>
    %cst_122 = arith.constant 1.000000e+00 : f32
    %436 = vector.broadcast %cst_122 : f32 to vector<2x40xf32>
    %437 = arith.subf %435, %436 : vector<2x40xf32>
    %cst_123 = arith.constant 1.67326319 : f32
    %438 = vector.broadcast %cst_123 : f32 to vector<2x40xf32>
    %439 = arith.mulf %438, %437 : vector<2x40xf32>
    %440 = arith.select %432, %430, %439 : vector<2x40xi1>, vector<2x40xf32>
    %cst_124 = arith.constant 1.05070102 : f32
    %441 = vector.broadcast %cst_124 : f32 to vector<2x40xf32>
    %442 = arith.mulf %441, %440 : vector<2x40xf32>
    %443 = vector.extract_strided_slice %249 {offsets = [13, 0], sizes = [1, 40], strides = [1, 1]} : vector<16x40xf32> to vector<1x40xf32>
    %444 = vector.extract_strided_slice %249 {offsets = [14, 0], sizes = [1, 40], strides = [1, 1]} : vector<16x40xf32> to vector<1x40xf32>
    %cst_125 = arith.constant dense<0.000000e+00> : vector<2xf32>
    %445 = vector.multi_reduction <add>, %442, %cst_125 [1] : vector<2x40xf32> to vector<2xf32>
    %446 = vector.shape_cast %445 : vector<2xf32> to vector<2x1xf32>
    %cst_126 = arith.constant 4.000000e+01 : f32
    %447 = vector.broadcast %cst_126 : f32 to vector<2x1xf32>
    %448 = arith.divf %446, %447 : vector<2x1xf32>
    %449 = vector.broadcast %448 : vector<2x1xf32> to vector<2x40xf32>
    %450 = arith.subf %442, %449 : vector<2x40xf32>
    %451 = arith.mulf %450, %450 : vector<2x40xf32>
    %cst_127 = arith.constant dense<0.000000e+00> : vector<2xf32>
    %452 = vector.multi_reduction <add>, %451, %cst_127 [1] : vector<2x40xf32> to vector<2xf32>
    %453 = vector.shape_cast %452 : vector<2xf32> to vector<2x1xf32>
    %cst_128 = arith.constant 4.000000e+01 : f32
    %454 = vector.broadcast %cst_128 : f32 to vector<2x1xf32>
    %455 = arith.divf %453, %454 : vector<2x1xf32>
    %456 = vector.broadcast %448 : vector<2x1xf32> to vector<2x40xf32>
    %457 = arith.subf %442, %456 : vector<2x40xf32>
    %cst_129 = arith.constant 9.99999974E-6 : f32
    %458 = vector.broadcast %cst_129 : f32 to vector<2x1xf32>
    %459 = arith.addf %455, %458 : vector<2x1xf32>
    %460 = math.rsqrt %459 : vector<2x1xf32>
    %461 = vector.broadcast %460 : vector<2x1xf32> to vector<2x40xf32>
    %462 = arith.mulf %457, %461 : vector<2x40xf32>
    %463 = vector.broadcast %443 : vector<1x40xf32> to vector<2x40xf32>
    %464 = arith.mulf %462, %463 : vector<2x40xf32>
    %465 = vector.broadcast %444 : vector<1x40xf32> to vector<2x40xf32>
    %466 = arith.addf %464, %465 : vector<2x40xf32>
    %467 = arith.truncf %466 : vector<2x40xf32> to vector<2x40xbf16>
    %468 = vector.extract_strided_slice %247 {offsets = [336, 0], sizes = [40, 8], strides = [1, 1]} : vector<384x40xbf16> to vector<40x8xbf16>
    %cst_130 = arith.constant dense<0.000000e+00> : vector<2x8xf32>
    %469 = tpu.matmul %467, %468, %cst_130 {dimension_numbers = #tpu.dot_dimension_numbers<[1], [0], [0], [1], [0, 0, 1, 1], [], []>} : vector<2x40xbf16>, vector<40x8xbf16>, vector<2x8xf32> -> vector<2x8xf32>
    %470 = vector.extract_strided_slice %249 {offsets = [15, 0], sizes = [1, 8], strides = [1, 1]} : vector<16x40xf32> to vector<1x8xf32>
    %471 = vector.broadcast %470 : vector<1x8xf32> to vector<2x8xf32>
    %472 = arith.addf %469, %471 : vector<2x8xf32>
    %c2 = arith.constant 2 : index
    %c0_131 = arith.constant 0 : index
    %c0_132 = arith.constant 0 : index
    %473 = vector.load %arg4[%c2, %c0_131, %c0_132] : memref<3x40x144xbf16, #tpu.memory_space<vmem>>, vector<1x40x144xbf16>
    %474 = vector.shape_cast %473 : vector<1x40x144xbf16> to vector<40x144xbf16>
    %c2_133 = arith.constant 2 : index
    %c0_134 = arith.constant 0 : index
    %c0_135 = arith.constant 0 : index
    %475 = vector.load %arg5[%c2_133, %c0_134, %c0_135] : memref<3x384x40xbf16, #tpu.memory_space<vmem>>, vector<1x384x40xbf16>
    %476 = vector.shape_cast %475 : vector<1x384x40xbf16> to vector<384x40xbf16>
    %c2_136 = arith.constant 2 : index
    %c0_137 = arith.constant 0 : index
    %c0_138 = arith.constant 0 : index
    %477 = vector.load %arg6[%c2_136, %c0_137, %c0_138] : memref<3x16x40xf32, #tpu.memory_space<vmem>>, vector<1x16x40xf32>
    %478 = vector.shape_cast %477 : vector<1x16x40xf32> to vector<16x40xf32>
    %479 = arith.truncf %389 : vector<16x40xf32> to vector<16x40xbf16>
    %cst_139 = arith.constant dense<0.000000e+00> : vector<96x40xf32>
    %480 = tpu.matmul %1, %479, %cst_139 {dimension_numbers = #tpu.dot_dimension_numbers<[1], [0], [0], [1], [0, 0, 1, 1], [], []>} : vector<96x16xbf16>, vector<16x40xbf16>, vector<96x40xf32> -> vector<96x40xf32>
    %481 = arith.truncf %480 : vector<96x40xf32> to vector<96x40xbf16>
    %cst_140 = arith.constant dense<0.000000e+00> : vector<96x144xf32>
    %482 = tpu.matmul %481, %474, %cst_140 {dimension_numbers = #tpu.dot_dimension_numbers<[1], [0], [0], [1], [0, 0, 1, 1], [], []>} : vector<96x40xbf16>, vector<40x144xbf16>, vector<96x144xf32> -> vector<96x144xf32>
    %483 = vector.extract_strided_slice %482 {offsets = [0, 64], sizes = [48, 40], strides = [1, 1]} : vector<96x144xf32> to vector<48x40xf32>
    %484 = vector.extract_strided_slice %478 {offsets = [1, 0], sizes = [1, 40], strides = [1, 1]} : vector<16x40xf32> to vector<1x40xf32>
    %485 = vector.broadcast %484 : vector<1x40xf32> to vector<48x40xf32>
    %486 = arith.addf %483, %485 : vector<48x40xf32>
    %487 = vector.extract_strided_slice %482 {offsets = [48, 104], sizes = [48, 40], strides = [1, 1]} : vector<96x144xf32> to vector<48x40xf32>
    %488 = vector.extract_strided_slice %478 {offsets = [2, 0], sizes = [1, 40], strides = [1, 1]} : vector<16x40xf32> to vector<1x40xf32>
    %489 = vector.broadcast %488 : vector<1x40xf32> to vector<48x40xf32>
    %490 = arith.addf %487, %489 : vector<48x40xf32>
    %491 = arith.addf %490, %486 : vector<48x40xf32>
    %cst_141 = arith.constant 0.000000e+00 : f32
    %492 = vector.broadcast %cst_141 : f32 to vector<48x40xf32>
    %493 = arith.cmpf ogt, %491, %492 : vector<48x40xf32>
    %cst_142 = arith.constant 2.000000e-01 : f32
    %494 = vector.broadcast %cst_142 : f32 to vector<48x40xf32>
    %495 = arith.mulf %494, %491 : vector<48x40xf32>
    %496 = arith.select %493, %491, %495 : vector<48x40xi1>, vector<48x40xf32>
    %497 = arith.truncf %496 : vector<48x40xf32> to vector<48x40xbf16>
    %498 = vector.extract_strided_slice %476 {offsets = [16, 0], sizes = [40, 5], strides = [1, 1]} : vector<384x40xbf16> to vector<40x5xbf16>
    %cst_143 = arith.constant dense<0.000000e+00> : vector<48x5xf32>
    %499 = tpu.matmul %497, %498, %cst_143 {dimension_numbers = #tpu.dot_dimension_numbers<[1], [0], [0], [1], [0, 0, 1, 1], [], []>} : vector<48x40xbf16>, vector<40x5xbf16>, vector<48x5xf32> -> vector<48x5xf32>
    %cst_144 = arith.constant dense<0xFF800000> : vector<5xf32>
    %500 = vector.multi_reduction <maximumf>, %499, %cst_144 [0] : vector<48x5xf32> to vector<5xf32>
    %501 = vector.shape_cast %500 : vector<5xf32> to vector<1x5xf32>
    %502 = vector.broadcast %501 : vector<1x5xf32> to vector<48x5xf32>
    %503 = arith.subf %499, %502 : vector<48x5xf32>
    %504 = math.exp %503 : vector<48x5xf32>
    %505 = arith.truncf %504 : vector<48x5xf32> to vector<48x5xbf16>
    %cst_145 = arith.constant dense<0.000000e+00> : vector<16x5xf32>
    %506 = tpu.matmul %3, %505, %cst_145 {dimension_numbers = #tpu.dot_dimension_numbers<[1], [0], [0], [1], [0, 0, 1, 1], [], []>} : vector<16x48xbf16>, vector<48x5xbf16>, vector<16x5xf32> -> vector<16x5xf32>
    %cst_146 = arith.constant 1.000000e-16 : f32
    %507 = vector.broadcast %cst_146 : f32 to vector<16x5xf32>
    %508 = arith.addf %506, %507 : vector<16x5xf32>
    %509 = arith.truncf %508 : vector<16x5xf32> to vector<16x5xbf16>
    %cst_147 = arith.constant dense<0.000000e+00> : vector<48x5xf32>
    %510 = tpu.matmul %2, %509, %cst_147 {dimension_numbers = #tpu.dot_dimension_numbers<[1], [0], [0], [1], [0, 0, 1, 1], [], []>} : vector<48x16xbf16>, vector<16x5xbf16>, vector<48x5xf32> -> vector<48x5xf32>
    %511 = tpu.reciprocal %510 {approx = true} : vector<48x5xf32> -> vector<48x5xf32>
    %512 = arith.mulf %504, %511 : vector<48x5xf32>
    %513 = arith.truncf %512 : vector<48x5xf32> to vector<48x5xbf16>
    %cst_148 = arith.constant dense<0.000000e+00> : vector<48x40xf32>
    %514 = tpu.matmul %513, %4, %cst_148 {dimension_numbers = #tpu.dot_dimension_numbers<[1], [0], [0], [1], [0, 0, 1, 1], [], []>} : vector<48x5xbf16>, vector<5x40xbf16>, vector<48x40xf32> -> vector<48x40xf32>
    %515 = arith.mulf %486, %514 : vector<48x40xf32>
    %516 = arith.truncf %515 : vector<48x40xf32> to vector<48x40xbf16>
    %cst_149 = arith.constant dense<0.000000e+00> : vector<16x40xf32>
    %517 = tpu.matmul %3, %516, %cst_149 {dimension_numbers = #tpu.dot_dimension_numbers<[1], [0], [0], [1], [0, 0, 1, 1], [], []>} : vector<16x48xbf16>, vector<48x40xbf16>, vector<16x40xf32> -> vector<16x40xf32>
    %518 = vector.extract_strided_slice %478 {offsets = [3, 0], sizes = [1, 40], strides = [1, 1]} : vector<16x40xf32> to vector<1x40xf32>
    %519 = vector.broadcast %518 : vector<1x40xf32> to vector<16x40xf32>
    %520 = arith.addf %517, %519 : vector<16x40xf32>
    %521 = arith.addf %389, %520 : vector<16x40xf32>
    %522 = vector.extract_strided_slice %478 {offsets = [4, 0], sizes = [1, 40], strides = [1, 1]} : vector<16x40xf32> to vector<1x40xf32>
    %523 = vector.extract_strided_slice %478 {offsets = [5, 0], sizes = [1, 40], strides = [1, 1]} : vector<16x40xf32> to vector<1x40xf32>
    %cst_150 = arith.constant dense<0.000000e+00> : vector<16xf32>
    %524 = vector.multi_reduction <add>, %521, %cst_150 [1] : vector<16x40xf32> to vector<16xf32>
    %525 = vector.shape_cast %524 : vector<16xf32> to vector<16x1xf32>
    %cst_151 = arith.constant 4.000000e+01 : f32
    %526 = vector.broadcast %cst_151 : f32 to vector<16x1xf32>
    %527 = arith.divf %525, %526 : vector<16x1xf32>
    %528 = vector.broadcast %527 : vector<16x1xf32> to vector<16x40xf32>
    %529 = arith.subf %521, %528 : vector<16x40xf32>
    %530 = arith.mulf %529, %529 : vector<16x40xf32>
    %cst_152 = arith.constant dense<0.000000e+00> : vector<16xf32>
    %531 = vector.multi_reduction <add>, %530, %cst_152 [1] : vector<16x40xf32> to vector<16xf32>
    %532 = vector.shape_cast %531 : vector<16xf32> to vector<16x1xf32>
    %cst_153 = arith.constant 4.000000e+01 : f32
    %533 = vector.broadcast %cst_153 : f32 to vector<16x1xf32>
    %534 = arith.divf %532, %533 : vector<16x1xf32>
    %535 = vector.broadcast %527 : vector<16x1xf32> to vector<16x40xf32>
    %536 = arith.subf %521, %535 : vector<16x40xf32>
    %cst_154 = arith.constant 9.99999974E-6 : f32
    %537 = vector.broadcast %cst_154 : f32 to vector<16x1xf32>
    %538 = arith.addf %534, %537 : vector<16x1xf32>
    %539 = math.rsqrt %538 : vector<16x1xf32>
    %540 = vector.broadcast %539 : vector<16x1xf32> to vector<16x40xf32>
    %541 = arith.mulf %536, %540 : vector<16x40xf32>
    %542 = vector.broadcast %522 : vector<1x40xf32> to vector<16x40xf32>
    %543 = arith.mulf %541, %542 : vector<16x40xf32>
    %544 = vector.broadcast %523 : vector<1x40xf32> to vector<16x40xf32>
    %545 = arith.addf %543, %544 : vector<16x40xf32>
    %546 = arith.truncf %545 : vector<16x40xf32> to vector<16x40xbf16>
    %547 = vector.extract_strided_slice %476 {offsets = [64, 0], sizes = [40, 40], strides = [1, 1]} : vector<384x40xbf16> to vector<40x40xbf16>
    %cst_155 = arith.constant dense<0.000000e+00> : vector<16x40xf32>
    %548 = tpu.matmul %546, %547, %cst_155 {dimension_numbers = #tpu.dot_dimension_numbers<[1], [0], [0], [1], [0, 0, 1, 1], [], []>} : vector<16x40xbf16>, vector<40x40xbf16>, vector<16x40xf32> -> vector<16x40xf32>
    %549 = vector.extract_strided_slice %478 {offsets = [6, 0], sizes = [1, 40], strides = [1, 1]} : vector<16x40xf32> to vector<1x40xf32>
    %550 = vector.broadcast %549 : vector<1x40xf32> to vector<16x40xf32>
    %551 = arith.addf %548, %550 : vector<16x40xf32>
    %cst_156 = arith.constant 0.000000e+00 : f32
    %552 = vector.broadcast %cst_156 : f32 to vector<16x40xf32>
    %553 = arith.cmpf ogt, %551, %552 : vector<16x40xf32>
    %cst_157 = arith.constant 0.000000e+00 : f32
    %554 = vector.broadcast %cst_157 : f32 to vector<16x40xf32>
    %555 = arith.minimumf %551, %554 : vector<16x40xf32>
    %556 = math.exp %555 : vector<16x40xf32>
    %cst_158 = arith.constant 1.000000e+00 : f32
    %557 = vector.broadcast %cst_158 : f32 to vector<16x40xf32>
    %558 = arith.subf %556, %557 : vector<16x40xf32>
    %cst_159 = arith.constant 1.67326319 : f32
    %559 = vector.broadcast %cst_159 : f32 to vector<16x40xf32>
    %560 = arith.mulf %559, %558 : vector<16x40xf32>
    %561 = arith.select %553, %551, %560 : vector<16x40xi1>, vector<16x40xf32>
    %cst_160 = arith.constant 1.05070102 : f32
    %562 = vector.broadcast %cst_160 : f32 to vector<16x40xf32>
    %563 = arith.mulf %562, %561 : vector<16x40xf32>
    %564 = vector.extract_strided_slice %478 {offsets = [7, 0], sizes = [1, 40], strides = [1, 1]} : vector<16x40xf32> to vector<1x40xf32>
    %565 = vector.extract_strided_slice %478 {offsets = [8, 0], sizes = [1, 40], strides = [1, 1]} : vector<16x40xf32> to vector<1x40xf32>
    %cst_161 = arith.constant dense<0.000000e+00> : vector<16xf32>
    %566 = vector.multi_reduction <add>, %563, %cst_161 [1] : vector<16x40xf32> to vector<16xf32>
    %567 = vector.shape_cast %566 : vector<16xf32> to vector<16x1xf32>
    %cst_162 = arith.constant 4.000000e+01 : f32
    %568 = vector.broadcast %cst_162 : f32 to vector<16x1xf32>
    %569 = arith.divf %567, %568 : vector<16x1xf32>
    %570 = vector.broadcast %569 : vector<16x1xf32> to vector<16x40xf32>
    %571 = arith.subf %563, %570 : vector<16x40xf32>
    %572 = arith.mulf %571, %571 : vector<16x40xf32>
    %cst_163 = arith.constant dense<0.000000e+00> : vector<16xf32>
    %573 = vector.multi_reduction <add>, %572, %cst_163 [1] : vector<16x40xf32> to vector<16xf32>
    %574 = vector.shape_cast %573 : vector<16xf32> to vector<16x1xf32>
    %cst_164 = arith.constant 4.000000e+01 : f32
    %575 = vector.broadcast %cst_164 : f32 to vector<16x1xf32>
    %576 = arith.divf %574, %575 : vector<16x1xf32>
    %577 = vector.broadcast %569 : vector<16x1xf32> to vector<16x40xf32>
    %578 = arith.subf %563, %577 : vector<16x40xf32>
    %cst_165 = arith.constant 9.99999974E-6 : f32
    %579 = vector.broadcast %cst_165 : f32 to vector<16x1xf32>
    %580 = arith.addf %576, %579 : vector<16x1xf32>
    %581 = math.rsqrt %580 : vector<16x1xf32>
    %582 = vector.broadcast %581 : vector<16x1xf32> to vector<16x40xf32>
    %583 = arith.mulf %578, %582 : vector<16x40xf32>
    %584 = vector.broadcast %564 : vector<1x40xf32> to vector<16x40xf32>
    %585 = arith.mulf %583, %584 : vector<16x40xf32>
    %586 = vector.broadcast %565 : vector<1x40xf32> to vector<16x40xf32>
    %587 = arith.addf %585, %586 : vector<16x40xf32>
    %588 = arith.truncf %587 : vector<16x40xf32> to vector<16x40xbf16>
    %589 = vector.extract_strided_slice %476 {offsets = [112, 0], sizes = [40, 40], strides = [1, 1]} : vector<384x40xbf16> to vector<40x40xbf16>
    %cst_166 = arith.constant dense<0.000000e+00> : vector<16x40xf32>
    %590 = tpu.matmul %588, %589, %cst_166 {dimension_numbers = #tpu.dot_dimension_numbers<[1], [0], [0], [1], [0, 0, 1, 1], [], []>} : vector<16x40xbf16>, vector<40x40xbf16>, vector<16x40xf32> -> vector<16x40xf32>
    %591 = vector.extract_strided_slice %478 {offsets = [9, 0], sizes = [1, 40], strides = [1, 1]} : vector<16x40xf32> to vector<1x40xf32>
    %592 = vector.broadcast %591 : vector<1x40xf32> to vector<16x40xf32>
    %593 = arith.addf %590, %592 : vector<16x40xf32>
    %594 = arith.addf %545, %593 : vector<16x40xf32>
    %595 = vector.extract_strided_slice %478 {offsets = [10, 0], sizes = [1, 40], strides = [1, 1]} : vector<16x40xf32> to vector<1x40xf32>
    %596 = vector.extract_strided_slice %478 {offsets = [11, 0], sizes = [1, 40], strides = [1, 1]} : vector<16x40xf32> to vector<1x40xf32>
    %cst_167 = arith.constant dense<0.000000e+00> : vector<16xf32>
    %597 = vector.multi_reduction <add>, %594, %cst_167 [1] : vector<16x40xf32> to vector<16xf32>
    %598 = vector.shape_cast %597 : vector<16xf32> to vector<16x1xf32>
    %cst_168 = arith.constant 4.000000e+01 : f32
    %599 = vector.broadcast %cst_168 : f32 to vector<16x1xf32>
    %600 = arith.divf %598, %599 : vector<16x1xf32>
    %601 = vector.broadcast %600 : vector<16x1xf32> to vector<16x40xf32>
    %602 = arith.subf %594, %601 : vector<16x40xf32>
    %603 = arith.mulf %602, %602 : vector<16x40xf32>
    %cst_169 = arith.constant dense<0.000000e+00> : vector<16xf32>
    %604 = vector.multi_reduction <add>, %603, %cst_169 [1] : vector<16x40xf32> to vector<16xf32>
    %605 = vector.shape_cast %604 : vector<16xf32> to vector<16x1xf32>
    %cst_170 = arith.constant 4.000000e+01 : f32
    %606 = vector.broadcast %cst_170 : f32 to vector<16x1xf32>
    %607 = arith.divf %605, %606 : vector<16x1xf32>
    %608 = vector.broadcast %600 : vector<16x1xf32> to vector<16x40xf32>
    %609 = arith.subf %594, %608 : vector<16x40xf32>
    %cst_171 = arith.constant 9.99999974E-6 : f32
    %610 = vector.broadcast %cst_171 : f32 to vector<16x1xf32>
    %611 = arith.addf %607, %610 : vector<16x1xf32>
    %612 = math.rsqrt %611 : vector<16x1xf32>
    %613 = vector.broadcast %612 : vector<16x1xf32> to vector<16x40xf32>
    %614 = arith.mulf %609, %613 : vector<16x40xf32>
    %615 = vector.broadcast %595 : vector<1x40xf32> to vector<16x40xf32>
    %616 = arith.mulf %614, %615 : vector<16x40xf32>
    %617 = vector.broadcast %596 : vector<1x40xf32> to vector<16x40xf32>
    %618 = arith.addf %616, %617 : vector<16x40xf32>
    %619 = arith.truncf %618 : vector<16x40xf32> to vector<16x40xbf16>
    %620 = arith.mulf %618, %618 : vector<16x40xf32>
    %621 = arith.truncf %620 : vector<16x40xf32> to vector<16x40xbf16>
    %622 = tpu.concatenate %619, %621 in 0 : vector<16x40xbf16>, vector<16x40xbf16> -> vector<32x40xbf16>
    %cst_172 = arith.constant dense<0.000000e+00> : vector<4x40xf32>
    %623 = tpu.matmul %6, %622, %cst_172 {dimension_numbers = #tpu.dot_dimension_numbers<[1], [0], [0], [1], [0, 0, 1, 1], [], []>} : vector<4x32xbf16>, vector<32x40xbf16>, vector<4x40xf32> -> vector<4x40xf32>
    %624 = vector.extract_strided_slice %623 {offsets = [0, 0], sizes = [2, 40], strides = [1, 1]} : vector<4x40xf32> to vector<2x40xf32>
    %625 = vector.extract_strided_slice %623 {offsets = [2, 0], sizes = [2, 40], strides = [1, 1]} : vector<4x40xf32> to vector<2x40xf32>
    %626 = arith.mulf %624, %624 : vector<2x40xf32>
    %627 = arith.subf %625, %626 : vector<2x40xf32>
    %cst_173 = arith.constant 0.000000e+00 : f32
    %628 = vector.broadcast %cst_173 : f32 to vector<2x40xf32>
    %629 = arith.maximumf %627, %628 : vector<2x40xf32>
    %cst_174 = arith.constant 9.99999974E-6 : f32
    %630 = vector.broadcast %cst_174 : f32 to vector<2x40xf32>
    %631 = arith.addf %629, %630 : vector<2x40xf32>
    %632 = math.sqrt %631 : vector<2x40xf32>
    %cst_175 = arith.constant 0.000000e+00 : f32
    %633 = vector.broadcast %cst_175 : f32 to vector<16x40xf32>
    %634 = arith.subf %633, %618 : vector<16x40xf32>
    %635 = tpu.concatenate %618, %634 in 1 : vector<16x40xf32>, vector<16x40xf32> -> vector<16x80xf32>
    %cst_176 = arith.constant -1.000000e+30 : f32
    %636 = vector.shape_cast %11 : vector<16x1xi1> to vector<16x1xi1>
    %637 = vector.broadcast %636 : vector<16x1xi1> to vector<16x80xi1>
    %638 = vector.broadcast %cst_176 : f32 to vector<16x80xf32>
    %639 = arith.select %637, %635, %638 : vector<16x80xi1>, vector<16x80xf32>
    %cst_177 = arith.constant dense<0xFF800000> : vector<80xf32>
    %640 = vector.multi_reduction <maximumf>, %639, %cst_177 [0] : vector<16x80xf32> to vector<80xf32>
    %641 = vector.shape_cast %640 : vector<80xf32> to vector<1x80xf32>
    %cst_178 = arith.constant -1.000000e+30 : f32
    %642 = vector.shape_cast %14 : vector<16x1xi1> to vector<16x1xi1>
    %643 = vector.broadcast %642 : vector<16x1xi1> to vector<16x80xi1>
    %644 = vector.broadcast %cst_178 : f32 to vector<16x80xf32>
    %645 = arith.select %643, %635, %644 : vector<16x80xi1>, vector<16x80xf32>
    %cst_179 = arith.constant dense<0xFF800000> : vector<80xf32>
    %646 = vector.multi_reduction <maximumf>, %645, %cst_179 [0] : vector<16x80xf32> to vector<80xf32>
    %647 = vector.shape_cast %646 : vector<80xf32> to vector<1x80xf32>
    %648 = tpu.concatenate %641, %647 in 0 : vector<1x80xf32>, vector<1x80xf32> -> vector<2x80xf32>
    %649 = vector.extract_strided_slice %648 {offsets = [0, 0], sizes = [2, 40], strides = [1, 1]} : vector<2x80xf32> to vector<2x40xf32>
    %650 = vector.extract_strided_slice %648 {offsets = [0, 40], sizes = [2, 40], strides = [1, 1]} : vector<2x80xf32> to vector<2x40xf32>
    %cst_180 = arith.constant 0.000000e+00 : f32
    %651 = vector.broadcast %cst_180 : f32 to vector<2x40xf32>
    %652 = arith.subf %651, %650 : vector<2x40xf32>
    %653 = tpu.concatenate %472, %624, %632, %649, %652 in 1 : vector<2x8xf32>, vector<2x40xf32>, vector<2x40xf32>, vector<2x40xf32>, vector<2x40xf32> -> vector<2x168xf32>
    %654 = arith.truncf %653 : vector<2x168xf32> to vector<2x168xbf16>
    %655 = vector.extract_strided_slice %476 {offsets = [160, 0], sizes = [168, 40], strides = [1, 1]} : vector<384x40xbf16> to vector<168x40xbf16>
    %cst_181 = arith.constant dense<0.000000e+00> : vector<2x40xf32>
    %656 = tpu.matmul %654, %655, %cst_181 {dimension_numbers = #tpu.dot_dimension_numbers<[1], [0], [0], [1], [0, 0, 1, 1], [], []>} : vector<2x168xbf16>, vector<168x40xbf16>, vector<2x40xf32> -> vector<2x40xf32>
    %657 = vector.extract_strided_slice %478 {offsets = [12, 0], sizes = [1, 40], strides = [1, 1]} : vector<16x40xf32> to vector<1x40xf32>
    %658 = vector.broadcast %657 : vector<1x40xf32> to vector<2x40xf32>
    %659 = arith.addf %656, %658 : vector<2x40xf32>
    %cst_182 = arith.constant 0.000000e+00 : f32
    %660 = vector.broadcast %cst_182 : f32 to vector<2x40xf32>
    %661 = arith.cmpf ogt, %659, %660 : vector<2x40xf32>
    %cst_183 = arith.constant 0.000000e+00 : f32
    %662 = vector.broadcast %cst_183 : f32 to vector<2x40xf32>
    %663 = arith.minimumf %659, %662 : vector<2x40xf32>
    %664 = math.exp %663 : vector<2x40xf32>
    %cst_184 = arith.constant 1.000000e+00 : f32
    %665 = vector.broadcast %cst_184 : f32 to vector<2x40xf32>
    %666 = arith.subf %664, %665 : vector<2x40xf32>
    %cst_185 = arith.constant 1.67326319 : f32
    %667 = vector.broadcast %cst_185 : f32 to vector<2x40xf32>
    %668 = arith.mulf %667, %666 : vector<2x40xf32>
    %669 = arith.select %661, %659, %668 : vector<2x40xi1>, vector<2x40xf32>
    %cst_186 = arith.constant 1.05070102 : f32
    %670 = vector.broadcast %cst_186 : f32 to vector<2x40xf32>
    %671 = arith.mulf %670, %669 : vector<2x40xf32>
    %672 = vector.extract_strided_slice %478 {offsets = [13, 0], sizes = [1, 40], strides = [1, 1]} : vector<16x40xf32> to vector<1x40xf32>
    %673 = vector.extract_strided_slice %478 {offsets = [14, 0], sizes = [1, 40], strides = [1, 1]} : vector<16x40xf32> to vector<1x40xf32>
    %cst_187 = arith.constant dense<0.000000e+00> : vector<2xf32>
    %674 = vector.multi_reduction <add>, %671, %cst_187 [1] : vector<2x40xf32> to vector<2xf32>
    %675 = vector.shape_cast %674 : vector<2xf32> to vector<2x1xf32>
    %cst_188 = arith.constant 4.000000e+01 : f32
    %676 = vector.broadcast %cst_188 : f32 to vector<2x1xf32>
    %677 = arith.divf %675, %676 : vector<2x1xf32>
    %678 = vector.broadcast %677 : vector<2x1xf32> to vector<2x40xf32>
    %679 = arith.subf %671, %678 : vector<2x40xf32>
    %680 = arith.mulf %679, %679 : vector<2x40xf32>
    %cst_189 = arith.constant dense<0.000000e+00> : vector<2xf32>
    %681 = vector.multi_reduction <add>, %680, %cst_189 [1] : vector<2x40xf32> to vector<2xf32>
    %682 = vector.shape_cast %681 : vector<2xf32> to vector<2x1xf32>
    %cst_190 = arith.constant 4.000000e+01 : f32
    %683 = vector.broadcast %cst_190 : f32 to vector<2x1xf32>
    %684 = arith.divf %682, %683 : vector<2x1xf32>
    %685 = vector.broadcast %677 : vector<2x1xf32> to vector<2x40xf32>
    %686 = arith.subf %671, %685 : vector<2x40xf32>
    %cst_191 = arith.constant 9.99999974E-6 : f32
    %687 = vector.broadcast %cst_191 : f32 to vector<2x1xf32>
    %688 = arith.addf %684, %687 : vector<2x1xf32>
    %689 = math.rsqrt %688 : vector<2x1xf32>
    %690 = vector.broadcast %689 : vector<2x1xf32> to vector<2x40xf32>
    %691 = arith.mulf %686, %690 : vector<2x40xf32>
    %692 = vector.broadcast %672 : vector<1x40xf32> to vector<2x40xf32>
    %693 = arith.mulf %691, %692 : vector<2x40xf32>
    %694 = vector.broadcast %673 : vector<1x40xf32> to vector<2x40xf32>
    %695 = arith.addf %693, %694 : vector<2x40xf32>
    %696 = arith.truncf %695 : vector<2x40xf32> to vector<2x40xbf16>
    %697 = vector.extract_strided_slice %476 {offsets = [336, 0], sizes = [40, 8], strides = [1, 1]} : vector<384x40xbf16> to vector<40x8xbf16>
    %cst_192 = arith.constant dense<0.000000e+00> : vector<2x8xf32>
    %698 = tpu.matmul %696, %697, %cst_192 {dimension_numbers = #tpu.dot_dimension_numbers<[1], [0], [0], [1], [0, 0, 1, 1], [], []>} : vector<2x40xbf16>, vector<40x8xbf16>, vector<2x8xf32> -> vector<2x8xf32>
    %699 = vector.extract_strided_slice %478 {offsets = [15, 0], sizes = [1, 8], strides = [1, 1]} : vector<16x40xf32> to vector<1x8xf32>
    %700 = vector.broadcast %699 : vector<1x8xf32> to vector<2x8xf32>
    %701 = arith.addf %698, %700 : vector<2x8xf32>
    %c0_193 = arith.constant 0 : index
    %c0_194 = arith.constant 0 : index
    %702 = vector.load %arg7[%c0_193, %c0_194] : memref<2x8xf32, #tpu.memory_space<vmem>>, vector<2x8xf32>
    tpu.vector_store %arg7[%c0_193, %c0_194], %701 {strides = array<i32>} : memref<2x8xf32, #tpu.memory_space<vmem>>, vector<2x8xf32>,
    return
  }
}

</mosaic_0001>

<llo_original>
// kernel: graphnets_forward.1
$region0: #{graphnets_forward.1}
  #allocation0 [shape = 'u32[]', space=smem, size = 0x4, offset = 0x4, fixed_abs, tag = 'smem constant byte address 0x4 - core index']
  #allocation1 [shape = 'u32[144,128]{1,0:T(1,128)}', space=vmem, size = 0x12000, scoped, tag = 'internal scratch']
  %s0 = inlined_call_operand.vmem [shape: f32[16,40], index: 0, kind: input, shape index: {}]
  %s1 = inlined_call_operand.vmem [shape: f32[32,16], index: 1, kind: input, shape index: {}]
  %s2 = inlined_call_operand.vmem [shape: f32[2,8], index: 2, kind: input, shape index: {}]
  %s3 = inlined_call_operand.vmem [shape: bf16[240,48], index: 3, kind: input, shape index: {}]
  %s4 = inlined_call_operand.vmem [shape: bf16[3,40,144], index: 4, kind: input, shape index: {}]
  %s5 = inlined_call_operand.vmem [shape: bf16[3,384,40], index: 5, kind: input, shape index: {}]
  %s6 = inlined_call_operand.vmem [shape: f32[3,16,40], index: 6, kind: input, shape index: {}]
  %s7 = inlined_call_operand.hbm [shape: f32[2,8], index: 7, kind: output, shape index: {}]
  %s8 = sld [smem:[#allocation0]]
  $region38: #{graphnets_forward.1} parent=0
    _
  %s10 = ssub.s32 1, %s8
  %s11 = scalar_select 0, %s10, %s8
  $region1: #{graphnets_forward.1} parent=0
    #allocation2 [shape = 'u8[1024]{0}', space=vmem, size = 0x400, scoped, tag = 'output window, operand 0, single buffered']
    #allocation3 [shape = 's32[1]{0}', space=sflag, size = 0x4, scoped, tag = 'scoped memory for graphnets_forward.1']
    %12 = vsyncpa [#allocation3], 0
    // Predicated region
    $region2: #{graphnets_forward.1} parent=1 // pred_check
      _
    $region3: #{graphnets_forward.1} parent=1 // pred_check_branch
      %14 = sbr.rel (0) target = $region5
    $region4: #{graphnets_forward.1} parent=1 // pred_region
      _
    $region5: #{graphnets_forward.1} parent=1 // pred_fallthru
      _
    // Predicated region
    $region6: #{graphnets_forward.1} parent=1 // pred_check
      _
    $region7: #{graphnets_forward.1} parent=1 // pred_check_branch
      %16 = sbr.rel (0) target = $region9
    $region8: #{graphnets_forward.1} parent=1 // pred_region
      _
    $region9: #{graphnets_forward.1} parent=1 // pred_fallthru
      _
    // Predicated region
    $region10: #{graphnets_forward.1} parent=1 // pred_check
      _
    $region11: #{graphnets_forward.1} parent=1 // pred_check_branch
      %18 = sbr.rel (0) target = $region13
    $region12: #{graphnets_forward.1} parent=1 // pred_region
      _
    $region13: #{graphnets_forward.1} parent=1 // pred_fallthru
      _
    // Predicated region
    $region14: #{graphnets_forward.1} parent=1 // pred_check
      _
    $region15: #{graphnets_forward.1} parent=1 // pred_check_branch
      %20 = sbr.rel (0) target = $region17
    $region16: #{graphnets_forward.1} parent=1 // pred_region
      _
    $region17: #{graphnets_forward.1} parent=1 // pred_fallthru
      _
    // Predicated region
    $region18: #{graphnets_forward.1} parent=1 // pred_check
      _
    $region19: #{graphnets_forward.1} parent=1 // pred_check_branch
      %22 = sbr.rel (0) target = $region21
    $region20: #{graphnets_forward.1} parent=1 // pred_region
      _
    $region21: #{graphnets_forward.1} parent=1 // pred_fallthru
      _
    // Predicated region
    $region22: #{graphnets_forward.1} parent=1 // pred_check
      _
    $region23: #{graphnets_forward.1} parent=1 // pred_check_branch
      %24 = sbr.rel (0) target = $region25
    $region24: #{graphnets_forward.1} parent=1 // pred_region
      _
    $region25: #{graphnets_forward.1} parent=1 // pred_fallthru
      _
    // Predicated region
    $region26: #{graphnets_forward.1} parent=1 // pred_check
      _
    $region27: #{graphnets_forward.1} parent=1 // pred_check_branch
      %26 = sbr.rel (0) target = $region29
    $region28: #{graphnets_forward.1} parent=1 // pred_region
      _
    $region29: #{graphnets_forward.1} parent=1 // pred_fallthru
      _
    %v31 = vld [vmem:[%s3] sm:$0xf]
    %v32 = vld [vmem:[%s3 + $0x4] sm:$0xf]
    %v33 = vld [vmem:[%s3 + $0x8] sm:$0xf]
    %v34 = vld [vmem:[%s3 + $0xc] sm:$0xf]
    %v35 = vld [vmem:[%s3 + $0x10] sm:$0xf]
    %v36 = vld [vmem:[%s3 + $0x14] sm:$0xf]
    %v37 = vld [vmem:[%s3 + $0x18] sm:$0xf]
    %v38 = vld [vmem:[%s3 + $0x1c] sm:$0xf]
    %v39 = vld [vmem:[%s3 + $0x20] sm:$0xf]
    %v40 = vld [vmem:[%s3 + $0x24] sm:$0xf]
    %v41 = vld [vmem:[%s3 + $0x28] sm:$0xf]
    %v42 = vld [vmem:[%s3 + $0x2c] sm:$0xf]
    %v43 = vld [vmem:[%s3 + $0x30] sm:$0xf]
    %v44 = vld [vmem:[%s3 + $0x34] sm:$0xf]
    %v45 = vld [vmem:[%s3 + $0x38] sm:$0xf]
    %v46 = vld [vmem:[%s3 + $0x3c] sm:$0xf]
    %v47 = vld [vmem:[%s3 + $0x40] sm:$0xf]
    %v48 = vld [vmem:[%s3 + $0x44] sm:$0xf]
    %v49 = vld [vmem:[%s3 + $0x48] sm:$0xf]
    %v50 = vld [vmem:[%s3 + $0x4c] sm:$0xf]
    %v51 = vld [vmem:[%s3 + $0x60] sm:$0xf]
    %v52 = vld [vmem:[%s3 + $0x68] sm:$0xf]
    %v53 = vld [vmem:[%s3 + $0x6c] sm:$0xf]
    %v54 = vld [vmem:[%s3 + $0x70] sm:$0xf]
    %v55 = vld [vmem:[%s0] sm:$0xff]
    %v56 = vld [vmem:[%s0 + $0x8] sm:$0xff]
    %v57 = vld [vmem:[%s2] sm:$0x3]
    %vm58 = vcmp.gt.bf16.partialorder %v52, 1056980736
    %vm59 = vcmp.gt.bf16.partialorder %v53, 1056980736
    %v60 = vld [vmem:[%s4] sm:$0xff]
    %v61 = vld [vmem:[%s4 + $0x8] sm:$0xff]
    %v62 = vld [vmem:[%s4 + $0x10] sm:$0xff]
    %v63 = vld [vmem:[%s4 + $0x18] sm:$0xff]
    %v64 = vld [vmem:[%s4 + $0x20] sm:$0xff]
    %v65 = vld [vmem:[%s5 + $0x8] sm:$0xf]
    %v66 = vld [vmem:[%s5 + $0xc] sm:$0xf]
    %v67 = vld [vmem:[%s5 + $0x10] sm:$0xf]
    %v68 = vld [vmem:[%s5 + $0x14] sm:$0xf]
    %v69 = vld [vmem:[%s5 + $0x18] sm:$0xf]
    %v70 = vld [vmem:[%s5 + $0x20] sm:$0xf]
    %v71 = vld [vmem:[%s5 + $0x24] sm:$0xf]
    %v72 = vld [vmem:[%s5 + $0x28] sm:$0xf]
    %v73 = vld [vmem:[%s5 + $0x2c] sm:$0xf]
    %v74 = vld [vmem:[%s5 + $0x30] sm:$0xf]
    %v75 = vld [vmem:[%s5 + $0x38] sm:$0xf]
    %v76 = vld [vmem:[%s5 + $0x3c] sm:$0xf]
    %v77 = vld [vmem:[%s5 + $0x40] sm:$0xf]
    %v78 = vld [vmem:[%s5 + $0x44] sm:$0xf]
    %v79 = vld [vmem:[%s5 + $0x48] sm:$0xf]
    %v80 = vld [vmem:[%s5 + $0x50] sm:$0xf]
    %v81 = vld [vmem:[%s5 + $0x54] sm:$0xf]
    %v82 = vld [vmem:[%s5 + $0x58] sm:$0xf]
    %v83 = vld [vmem:[%s5 + $0x5c] sm:$0xf]
    %v84 = vld [vmem:[%s5 + $0x60] sm:$0xf]
    %v85 = vld [vmem:[%s5 + $0x64] sm:$0xf]
    %v86 = vld [vmem:[%s5 + $0x68] sm:$0xf]
    %v87 = vld [vmem:[%s5 + $0x6c] sm:$0xf]
    %v88 = vld [vmem:[%s5 + $0x70] sm:$0xf]
    %v89 = vld [vmem:[%s5 + $0x74] sm:$0xf]
    %v90 = vld [vmem:[%s5 + $0x78] sm:$0xf]
    %v91 = vld [vmem:[%s5 + $0x7c] sm:$0xf]
    %v92 = vld [vmem:[%s5 + $0x80] sm:$0xf]
    %v93 = vld [vmem:[%s5 + $0x84] sm:$0xf]
    %v94 = vld [vmem:[%s5 + $0x88] sm:$0xf]
    %v95 = vld [vmem:[%s5 + $0x8c] sm:$0xf]
    %v96 = vld [vmem:[%s5 + $0x90] sm:$0xf]
    %v97 = vld [vmem:[%s5 + $0x94] sm:$0xf]
    %v98 = vld [vmem:[%s5 + $0x98] sm:$0xf]
    %v99 = vld [vmem:[%s5 + $0x9c] sm:$0xf]
    %v100 = vld [vmem:[%s5 + $0xa0] sm:$0xf]
    %v101 = vld [vmem:[%s5 + $0xa8] sm:$0xf]
    %v102 = vld [vmem:[%s5 + $0xac] sm:$0xf]
    %v103 = vld [vmem:[%s5 + $0xb0] sm:$0xf]
    %v104 = vld [vmem:[%s5 + $0xb4] sm:$0xf]
    %v105 = vld [vmem:[%s5 + $0xb8] sm:$0xf]
    %v106 = vld [vmem:[%s6] sm:$0xff]
    %v107 = vld [vmem:[%s6 + $0x8] sm:$0xff]
    %v108 = vpack.c.bf16 %v56, %v55
    %v121 = vunpack.c.l.b16 %v31
    %v122 = vunpack.c.l.b16 %v32
    %v123 = vunpack.c.l.b16 %v33
    %v124 = vunpack.c.l.b16 %v34
    %v125 = vunpack.c.l.b16 %v35
    %v126 = vunpack.c.l.b16 %v36
    %v127 = vunpack.c.l.b16 %v37
    %v128 = vunpack.c.l.b16 %v38
    %v129 = vunpack.c.l.b16 %v39
    %v130 = vunpack.c.l.b16 %v40
    %v131 = vunpack.c.l.b16 %v41
    %v132 = vunpack.c.l.b16 %v42
    %v133 = vpack.c.b16 %v122, %v121
    %v134 = vpack.c.b16 %v124, %v123
    %v135 = vpack.c.b16 %v126, %v125
    %v136 = vpack.c.b16 %v128, %v127
    %v137 = vpack.c.b16 %v130, %v129
    %v138 = vpack.c.b16 %v132, %v131
    %vm139 = vcmask 130048
    %v141 = vsel %vm139, %v133, 0
    %v144 = vsel %vm139, %v134, 0
    %v147 = vsel %vm139, %v135, 0
    %v150 = vsel %vm139, %v136, 0
    %v153 = vsel %vm139, %v137, 0
    %v156 = vsel %vm139, %v138, 0
    %158 = vmatprep.subr.bf16.mxu0 0
    %159 = vmatpush1.bf16.msra.mxu0 %v108
    %160 = vmatprep.subr.bf16.mxu0 0
    %161 = vmatpush1.bf16.msra.mxu0 0
    %162 = vmatprep.subr.bf16.mxu0 0
    %163 = vmatpush1.bf16.msra.mxu0 0
    %164 = vmatprep.subr.bf16.mxu0 0
    %165 = vmatpush1.bf16.msra.mxu0 0
    %166 = vmatprep.subr.bf16.mxu0 0
    %167 = vmatpush1.bf16.msra.mxu0 0
    %168 = vmatprep.subr.bf16.mxu0 0
    %169 = vmatpush1.bf16.msra.mxu0 0
    %170 = vmatprep.subr.bf16.mxu0 0
    %171 = vmatpush1.bf16.msra.mxu0 0
    %172 = vmatprep.subr.bf16.mxu0 0
    %173 = vmatpush1.bf16.msra.mxu0 0
    %174 = vmatprep.subr.bf16.mxu0 0
    %175 = vmatpush1.bf16.msra.mxu0 0
    %176 = vmatprep.subr.bf16.mxu0 0
    %177 = vmatpush1.bf16.msra.mxu0 0
    %178 = vmatprep.subr.bf16.mxu0 0
    %179 = vmatpush1.bf16.msra.mxu0 0
    %180 = vmatprep.subr.bf16.mxu0 0
    %181 = vmatpush1.bf16.msra.mxu0 0
    %182 = vmatprep.subr.bf16.mxu0 0
    %183 = vmatpush1.bf16.msra.mxu0 0
    %184 = vmatprep.subr.bf16.mxu0 0
    %185 = vmatpush1.bf16.msra.mxu0 0
    %186 = vmatprep.subr.bf16.mxu0 0
    %187 = vmatpush1.bf16.msra.mxu0 0
    %188 = vmatprep.subr.bf16.mxu0 0
    %189 = vmatpush1.bf16.msra.mxu0 0
    %190 = vmatprep.mubr.bf16.mxu0 0
    %191 = vmatmul.mubr.bf16.gmra.mrb[0].mxu0 %v141
    %v192 = vpop.f32.mrb[0].mxu0
    %v193 = vadd.f32 0.0, %v192
    %v194 = vpop.f32.mrb[0].mxu0
    %v195 = vpop.f32.mrb[0].mxu0
    %v196 = vadd.f32 0.0, %v195
    %v197 = vpop.f32.mrb[0].mxu0
    %198 = vmatprep.mubr.bf16.mxu0 0
    %199 = vmatmul.mubr.bf16.gmra.mrb[0].mxu0 %v144
    %v200 = vpop.f32.mrb[0].mxu0
    %v201 = vadd.f32 0.0, %v200
    %v202 = vpop.f32.mrb[0].mxu0
    %v203 = vpop.f32.mrb[0].mxu0
    %v204 = vadd.f32 0.0, %v203
    %v205 = vpop.f32.mrb[0].mxu0
    %206 = vmatprep.mubr.bf16.mxu0 0
    %207 = vmatmul.mubr.bf16.gmra.mrb[0].mxu0 %v147
    %v208 = vpop.f32.mrb[0].mxu0
    %v209 = vadd.f32 0.0, %v208
    %v210 = vpop.f32.mrb[0].mxu0
    %v211 = vpop.f32.mrb[0].mxu0
    %v212 = vadd.f32 0.0, %v211
    %v213 = vpop.f32.mrb[0].mxu0
    %214 = vmatprep.mubr.bf16.mxu0 0
    %215 = vmatmul.mubr.bf16.gmra.mrb[0].mxu0 %v150
    %v216 = vpop.f32.mrb[0].mxu0
    %v217 = vadd.f32 0.0, %v216
    %v218 = vpop.f32.mrb[0].mxu0
    %v219 = vpop.f32.mrb[0].mxu0
    %v220 = vadd.f32 0.0, %v219
    %v221 = vpop.f32.mrb[0].mxu0
    %222 = vmatprep.mubr.bf16.mxu0 0
    %223 = vmatmul.mubr.bf16.gmra.mrb[0].mxu0 %v153
    %v224 = vpop.f32.mrb[0].mxu0
    %v225 = vadd.f32 0.0, %v224
    %v226 = vpop.f32.mrb[0].mxu0
    %v227 = vpop.f32.mrb[0].mxu0
    %v228 = vadd.f32 0.0, %v227
    %v229 = vpop.f32.mrb[0].mxu0
    %230 = vmatprep.mubr.bf16.mxu0 0
    %231 = vmatmul.mubr.bf16.gmra.mrb[0].mxu0 %v156
    %v232 = vpop.f32.mrb[0].mxu0
    %v233 = vadd.f32 0.0, %v232
    %v234 = vpop.f32.mrb[0].mxu0
    %v235 = vpop.f32.mrb[0].mxu0
    %v236 = vadd.f32 0.0, %v235
    %v237 = vpop.f32.mrb[0].mxu0
    %238 = vdwg.mxu0
    %v239 = vpack.c.bf16 %v196, %v193
    %v240 = vpack.c.bf16 %v204, %v201
    %v241 = vpack.c.bf16 %v212, %v209
    %v242 = vpack.c.bf16 %v220, %v217
    %v243 = vpack.c.bf16 %v228, %v225
    %v244 = vpack.c.bf16 %v236, %v233
    %v250 = vunpack.c.l.b16 %v60
    %v251 = vunpack.c.h.b16 %v60
    %v252 = vunpack.c.l.b16 %v61
    %v253 = vunpack.c.h.b16 %v61
    %v254 = vunpack.c.l.b16 %v62
    %v255 = vunpack.c.h.b16 %v62
    %v256 = vunpack.c.l.b16 %v63
    %v257 = vunpack.c.h.b16 %v63
    %v258 = vunpack.c.l.b16 %v64
    %v259 = vunpack.c.h.b16 %v64
    %v260 = vpack.c.b16 %v252, %v250
    %v261 = vpack.c.b16 %v253, %v251
    %v262 = vpack.c.b16 %v256, %v254
    %v263 = vpack.c.b16 %v257, %v255
    %v264 = vpack.c.b16 %v258, %v258
    %v265 = vpack.c.b16 %v259, %v259
    %vm270 = vcmask 326656
    %v272 = vsel %vm270, %v239, 0
    %v275 = vsel %vm270, %v240, 0
    %v278 = vsel %vm270, %v241, 0
    %v281 = vsel %vm270, %v242, 0
    %v284 = vsel %vm270, %v243, 0
    %v287 = vsel %vm270, %v244, 0
    %vm289 = vcmask 1043456
    %v291 = vsel %vm289, %v264, 0
    %v294 = vsel %vm289, %v265, 0
    %296 = vmatprep.subr.bf16.mxu0 %v261
    %297 = vmatpush1.bf16.msra.mxu0 %v260
    %298 = vmatprep.subr.bf16.mxu0 %v263
    %299 = vmatpush1.bf16.msra.mxu0 %v262
    %300 = vmatprep.subr.bf16.mxu0 %v294
    %301 = vmatpush1.bf16.msra.mxu0 %v291
    %302 = vmatprep.subr.bf16.mxu0 0
    %303 = vmatpush1.bf16.msra.mxu0 0
    %304 = vmatprep.subr.bf16.mxu0 0
    %305 = vmatpush1.bf16.msra.mxu0 0
    %306 = vmatprep.subr.bf16.mxu0 0
    %307 = vmatpush1.bf16.msra.mxu0 0
    %308 = vmatprep.subr.bf16.mxu0 0
    %309 = vmatpush1.bf16.msra.mxu0 0
    %310 = vmatprep.subr.bf16.mxu0 0
    %311 = vmatpush1.bf16.msra.mxu0 0
    %312 = vmatprep.subr.bf16.mxu0 0
    %313 = vmatpush1.bf16.msra.mxu0 0
    %314 = vmatprep.subr.bf16.mxu0 0
    %315 = vmatpush1.bf16.msra.mxu0 0
    %316 = vmatprep.subr.bf16.mxu0 0
    %317 = vmatpush1.bf16.msra.mxu0 0
    %318 = vmatprep.subr.bf16.mxu0 0
    %319 = vmatpush1.bf16.msra.mxu0 0
    %320 = vmatprep.subr.bf16.mxu0 0
    %321 = vmatpush1.bf16.msra.mxu0 0
    %322 = vmatprep.subr.bf16.mxu0 0
    %323 = vmatpush1.bf16.msra.mxu0 0
    %324 = vmatprep.subr.bf16.mxu0 0
    %325 = vmatpush1.bf16.msra.mxu0 0
    %326 = vmatprep.subr.bf16.mxu0 0
    %327 = vmatpush1.bf16.msra.mxu0 0
    %328 = vmatprep.mubr.bf16.mxu0 0
    %329 = vmatmul.mubr.bf16.gmra.mrb[0].mxu0 %v272
    %v330 = vpop.f32.mrb[0].mxu0
    %v331 = vadd.f32 0.0, %v330
    %v332 = vpop.f32.mrb[0].mxu0
    %v333 = vpop.f32.mrb[0].mxu0
    %v334 = vadd.f32 0.0, %v333
    %v335 = vpop.f32.mrb[0].mxu0
    %336 = vmatprep.mubr.bf16.mxu0 0
    %337 = vmatmul.mubr.bf16.gmra.mrb[0].mxu0 %v275
    %v338 = vpop.f32.mrb[0].mxu0
    %v339 = vadd.f32 0.0, %v338
    %v340 = vpop.f32.mrb[0].mxu0
    %v341 = vpop.f32.mrb[0].mxu0
    %v342 = vadd.f32 0.0, %v341
    %v343 = vpop.f32.mrb[0].mxu0
    %344 = vmatprep.mubr.bf16.mxu0 0
    %345 = vmatmul.mubr.bf16.gmra.mrb[0].mxu0 %v278
    %v346 = vpop.f32.mrb[0].mxu0
    %v347 = vadd.f32 0.0, %v346
    %v348 = vpop.f32.mrb[0].mxu0
    %v349 = vpop.f32.mrb[0].mxu0
    %v350 = vadd.f32 0.0, %v349
    %v351 = vpop.f32.mrb[0].mxu0
    %352 = vmatprep.mubr.bf16.mxu0 0
    %353 = vmatmul.mubr.bf16.gmra.mrb[0].mxu0 %v281
    %v354 = vpop.f32.mrb[0].mxu0
    %v355 = vadd.f32 0.0, %v354
    %v356 = vpop.f32.mrb[0].mxu0
    %v357 = vadd.f32 0.0, %v356
    %v358 = vpop.f32.mrb[0].mxu0
    %v359 = vadd.f32 0.0, %v358
    %v360 = vpop.f32.mrb[0].mxu0
    %v361 = vadd.f32 0.0, %v360
    %362 = vmatprep.mubr.bf16.mxu0 0
    %363 = vmatmul.mubr.bf16.gmra.mrb[0].mxu0 %v284
    %v364 = vpop.f32.mrb[0].mxu0
    %v365 = vadd.f32 0.0, %v364
    %v366 = vpop.f32.mrb[0].mxu0
    %v367 = vadd.f32 0.0, %v366
    %v368 = vpop.f32.mrb[0].mxu0
    %v369 = vadd.f32 0.0, %v368
    %v370 = vpop.f32.mrb[0].mxu0
    %v371 = vadd.f32 0.0, %v370
    %372 = vmatprep.mubr.bf16.mxu0 0
    %373 = vmatmul.mubr.bf16.gmra.mrb[0].mxu0 %v287
    %v374 = vpop.f32.mrb[0].mxu0
    %v375 = vadd.f32 0.0, %v374
    %v376 = vpop.f32.mrb[0].mxu0
    %v377 = vadd.f32 0.0, %v376
    %v378 = vpop.f32.mrb[0].mxu0
    %v379 = vadd.f32 0.0, %v378
    %v380 = vpop.f32.mrb[0].mxu0
    %v381 = vadd.f32 0.0, %v380
    %382 = vdwg.mxu0
    %v383 = vlaneseq
    %v384 = vshrl.u32 %v383, 7
    %v385 = vsub.s32 1, %v384
    %v386 = vrot.slane %v106, %v385
    %388 = vrot.lane.b32.xlu0 %v386, 64
    %v389 = vpop.permute.xlu0 %388
    %v391 = vadd.f32 %v331, %v389
    %v392 = vadd.f32 %v334, %v389
    %v393 = vadd.f32 %v339, %v389
    %v394 = vadd.f32 %v342, %v389
    %v395 = vadd.f32 %v347, %v389
    %v396 = vadd.f32 %v350, %v389
    %v397 = vlaneseq
    %v398 = vshrl.u32 %v397, 7
    %v399 = vsub.s32 2, %v398
    %v400 = vrot.slane %v106, %v399
    %402 = vrot.lane.b32.xlu0 %v400, 104
    %v403 = vpop.permute.xlu0 %402
    %v405 = vadd.f32 %v355, %v403
    %v406 = vadd.f32 %v357, %v403
    %v407 = vadd.f32 %v359, %v403
    %v408 = vadd.f32 %v361, %v403
    %v409 = vadd.f32 %v365, %v403
    %v410 = vadd.f32 %v367, %v403
    %v411 = vadd.f32 %v369, %v403
    %v412 = vadd.f32 %v371, %v403
    %v413 = vadd.f32 %v375, %v403
    %v414 = vadd.f32 %v377, %v403
    %v415 = vadd.f32 %v379, %v403
    %v416 = vadd.f32 %v381, %v403
    %423 = vrot.lane.b32.xlu0 %v391, 40
    %v424 = vpop.permute.xlu0 %423
    %425 = vrot.lane.b32.xlu0 %v392, 40
    %v426 = vpop.permute.xlu0 %425
    %427 = vrot.lane.b32.xlu0 %v393, 40
    %v428 = vpop.permute.xlu0 %427
    %429 = vrot.lane.b32.xlu0 %v394, 40
    %v430 = vpop.permute.xlu0 %429
    %431 = vrot.lane.b32.xlu0 %v395, 40
    %v432 = vpop.permute.xlu0 %431
    %433 = vrot.lane.b32.xlu0 %v396, 40
    %v434 = vpop.permute.xlu0 %433
    %v441 = vadd.f32 %v405, %v424
    %v442 = vadd.f32 %v406, %v424
    %v443 = vadd.f32 %v407, %v426
    %v444 = vadd.f32 %v408, %v426
    %v445 = vadd.f32 %v409, %v428
    %v446 = vadd.f32 %v410, %v428
    %v447 = vadd.f32 %v411, %v430
    %v448 = vadd.f32 %v412, %v430
    %v449 = vadd.f32 %v413, %v432
    %v450 = vadd.f32 %v414, %v432
    %v451 = vadd.f32 %v415, %v434
    %v452 = vadd.f32 %v416, %v434
    %vm453 = vcmp.gt.f32.partialorder %v441, 0.0
    %vm454 = vcmp.gt.f32.partialorder %v442, 0.0
    %vm455 = vcmp.gt.f32.partialorder %v443, 0.0
    %vm456 = vcmp.gt.f32.partialorder %v444, 0.0
    %vm457 = vcmp.gt.f32.partialorder %v445, 0.0
    %vm458 = vcmp.gt.f32.partialorder %v446, 0.0
    %vm459 = vcmp.gt.f32.partialorder %v447, 0.0
    %vm460 = vcmp.gt.f32.partialorder %v448, 0.0
    %vm461 = vcmp.gt.f32.partialorder %v449, 0.0
    %vm462 = vcmp.gt.f32.partialorder %v450, 0.0
    %vm463 = vcmp.gt.f32.partialorder %v451, 0.0
    %vm464 = vcmp.gt.f32.partialorder %v452, 0.0
    %v465 = vmul.f32 %v441, 0.2
    %v466 = vmul.f32 %v442, 0.2
    %v467 = vmul.f32 %v443, 0.2
    %v468 = vmul.f32 %v444, 0.2
    %v469 = vmul.f32 %v445, 0.2
    %v470 = vmul.f32 %v446, 0.2
    %v471 = vmul.f32 %v447, 0.2
    %v472 = vmul.f32 %v448, 0.2
    %v473 = vmul.f32 %v449, 0.2
    %v474 = vmul.f32 %v450, 0.2
    %v475 = vmul.f32 %v451, 0.2
    %v476 = vmul.f32 %v452, 0.2
    %v477 = vsel %vm453, %v441, %v465
    %v478 = vsel %vm454, %v442, %v466
    %v479 = vsel %vm455, %v443, %v467
    %v480 = vsel %vm456, %v444, %v468
    %v481 = vsel %vm457, %v445, %v469
    %v482 = vsel %vm458, %v446, %v470
    %v483 = vsel %vm459, %v447, %v471
    %v484 = vsel %vm460, %v448, %v472
    %v485 = vsel %vm461, %v449, %v473
    %v486 = vsel %vm462, %v450, %v474
    %v487 = vsel %vm463, %v451, %v475
    %v488 = vsel %vm464, %v452, %v476
    %v489 = vpack.c.bf16 %v479, %v477
    %v490 = vpack.c.bf16 %v480, %v478
    %v491 = vpack.c.bf16 %v483, %v481
    %v492 = vpack.c.bf16 %v484, %v482
    %v493 = vpack.c.bf16 %v487, %v485
    %v494 = vpack.c.bf16 %v488, %v486
    %501 = vrot.lane.b32.xlu0 %v489, 24
    %v502 = vpop.permute.xlu0 %501
    %503 = vrot.lane.b32.xlu0 %v490, 24
    %v504 = vpop.permute.xlu0 %503
    %505 = vrot.lane.b32.xlu0 %v491, 24
    %v506 = vpop.permute.xlu0 %505
    %507 = vrot.lane.b32.xlu0 %v492, 24
    %v508 = vpop.permute.xlu0 %507
    %509 = vrot.lane.b32.xlu0 %v493, 24
    %v510 = vpop.permute.xlu0 %509
    %511 = vrot.lane.b32.xlu0 %v494, 24
    %v512 = vpop.permute.xlu0 %511
    %vm513 = vcmask 195584
    %v514 = vsel %vm513, %v502, %v504
    %v515 = vsel %vm513, %v506, %v508
    %v516 = vsel %vm513, %v510, %v512
    %v522 = vunpack.c.l.b16 %v65
    %v523 = vunpack.c.l.b16 %v66
    %v524 = vunpack.c.l.b16 %v67
    %v525 = vunpack.c.l.b16 %v68
    %v526 = vunpack.c.l.b16 %v69
    %v527 = vpack.c.b16 %v523, %v522
    %v528 = vpack.c.b16 %v525, %v524
    %v529 = vpack.c.b16 %v526, %v526
    %v533 = vsel %vm270, %v514, 0
    %v536 = vsel %vm270, %v515, 0
    %v539 = vsel %vm270, %v516, 0
    %v542 = vsel %vm289, %v529, 0
    %544 = vmatprep.subr.bf16.mxu0 0
    %545 = vmatpush1.bf16.msra.mxu0 %v527
    %546 = vmatprep.subr.bf16.mxu0 0
    %547 = vmatpush1.bf16.msra.mxu0 %v528
    %548 = vmatprep.subr.bf16.mxu0 0
    %549 = vmatpush1.bf16.msra.mxu0 %v542
    %550 = vmatprep.subr.bf16.mxu0 0
    %551 = vmatpush1.bf16.msra.mxu0 0
    %552 = vmatprep.subr.bf16.mxu0 0
    %553 = vmatpush1.bf16.msra.mxu0 0
    %554 = vmatprep.subr.bf16.mxu0 0
    %555 = vmatpush1.bf16.msra.mxu0 0
    %556 = vmatprep.subr.bf16.mxu0 0
    %557 = vmatpush1.bf16.msra.mxu0 0
    %558 = vmatprep.subr.bf16.mxu0 0
    %559 = vmatpush1.bf16.msra.mxu0 0
    %560 = vmatprep.subr.bf16.mxu0 0
    %561 = vmatpush1.bf16.msra.mxu0 0
    %562 = vmatprep.subr.bf16.mxu0 0
    %563 = vmatpush1.bf16.msra.mxu0 0
    %564 = vmatprep.subr.bf16.mxu0 0
    %565 = vmatpush1.bf16.msra.mxu0 0
    %566 = vmatprep.subr.bf16.mxu0 0
    %567 = vmatpush1.bf16.msra.mxu0 0
    %568 = vmatprep.subr.bf16.mxu0 0
    %569 = vmatpush1.bf16.msra.mxu0 0
    %570 = vmatprep.subr.bf16.mxu0 0
    %571 = vmatpush1.bf16.msra.mxu0 0
    %572 = vmatprep.subr.bf16.mxu0 0
    %573 = vmatpush1.bf16.msra.mxu0 0
    %574 = vmatprep.subr.bf16.mxu0 0
    %575 = vmatpush1.bf16.msra.mxu0 0
    %576 = vmatprep.mubr.bf16.mxu0 0
    %577 = vmatmul.mubr.bf16.gmra.mrb[0].mxu0 %v533
    %v578 = vpop.f32.mrb[0].mxu0
    %v579 = vadd.f32 0.0, %v578
    %v580 = vpop.f32.mrb[0].mxu0
    %v581 = vpop.f32.mrb[0].mxu0
    %v582 = vadd.f32 0.0, %v581
    %v583 = vpop.f32.mrb[0].mxu0
    %584 = vmatprep.mubr.bf16.mxu0 0
    %585 = vmatmul.mubr.bf16.gmra.mrb[0].mxu0 %v536
    %v586 = vpop.f32.mrb[0].mxu0
    %v587 = vadd.f32 0.0, %v586
    %v588 = vpop.f32.mrb[0].mxu0
    %v589 = vpop.f32.mrb[0].mxu0
    %v590 = vadd.f32 0.0, %v589
    %v591 = vpop.f32.mrb[0].mxu0
    %592 = vmatprep.mubr.bf16.mxu0 0
    %593 = vmatmul.mubr.bf16.gmra.mrb[0].mxu0 %v539
    %v594 = vpop.f32.mrb[0].mxu0
    %v595 = vadd.f32 0.0, %v594
    %v596 = vpop.f32.mrb[0].mxu0
    %v597 = vpop.f32.mrb[0].mxu0
    %v598 = vadd.f32 0.0, %v597
    %v599 = vpop.f32.mrb[0].mxu0
    %600 = vdwg.mxu0
    %vm601 = vcmask 39936
    %v602 = vsel %vm601, %v579, -inf
    %v603 = vsel %vm601, %v582, -inf
    %v604 = vsel %vm601, %v587, -inf
    %v605 = vsel %vm601, %v590, -inf
    %v606 = vsel %vm601, %v595, -inf
    %v607 = vmax.f32 %v602, %v606
    %v608 = vsel %vm601, %v598, -inf
    %v609 = vmax.f32 %v603, %v608
    %v610 = vmax.f32 %v607, %v609
    %v611 = vmax.f32 %v604, %v605
    %v612 = vmax.f32 %v610, %v611
    %v613 = vrot.slane %v612, 4
    %v614 = vmax.f32 %v612, %v613
    %v615 = vrot.slane %v614, 2
    %v616 = vmax.f32 %v614, %v615
    %v617 = vrot.slane %v616, 1
    %v618 = vmax.f32 %v616, %v617
    %v619 = vsub.f32 %v579, %v618
    %v620 = vsub.f32 %v582, %v618
    %v621 = vsub.f32 %v587, %v618
    %v622 = vsub.f32 %v590, %v618
    %v623 = vsub.f32 %v595, %v618
    %v624 = vsub.f32 %v598, %v618
    %v625 = vmul.f32 %v619, 1.442695
    %v626 = vpow.pop %v625
    %v627 = vmul.f32 %v620, 1.442695
    %v628 = vpow.pop %v627
    %v629 = vmul.f32 %v621, 1.442695
    %v630 = vpow.pop %v629
    %v631 = vmul.f32 %v622, 1.442695
    %v632 = vpow.pop %v631
    %v633 = vmul.f32 %v623, 1.442695
    %v634 = vpow.pop %v633
    %v635 = vmul.f32 %v624, 1.442695
    %v636 = vpow.pop %v635
    %v637 = vpack.c.bf16 %v628, %v626
    %v638 = vpack.c.bf16 %v632, %v630
    %v639 = vpack.c.bf16 %v636, %v634
    %v642 = vunpack.c.l.b16 %v49
    %v643 = vunpack.c.l.b16 %v50
    %v644 = vpack.c.b16 %v643, %v642
    %vm645 = vcmask 392192
    %v647 = vsel %vm645, %v644, 0
    %649 = vmatprep.subr.bf16.mxu0 0
    %650 = vmatpush1.bf16.msra.mxu0 %v637
    %651 = vmatprep.subr.bf16.mxu0 0
    %652 = vmatpush1.bf16.msra.mxu0 %v638
    %653 = vmatprep.subr.bf16.mxu0 0
    %654 = vmatpush1.bf16.msra.mxu0 %v639
    %655 = vmatprep.subr.bf16.mxu0 0
    %656 = vmatpush1.bf16.msra.mxu0 0
    %657 = vmatprep.subr.bf16.mxu0 0
    %658 = vmatpush1.bf16.msra.mxu0 0
    %659 = vmatprep.subr.bf16.mxu0 0
    %660 = vmatpush1.bf16.msra.mxu0 0
    %661 = vmatprep.subr.bf16.mxu0 0
    %662 = vmatpush1.bf16.msra.mxu0 0
    %663 = vmatprep.subr.bf16.mxu0 0
    %664 = vmatpush1.bf16.msra.mxu0 0
    %665 = vmatprep.subr.bf16.mxu0 0
    %666 = vmatpush1.bf16.msra.mxu0 0
    %667 = vmatprep.subr.bf16.mxu0 0
    %668 = vmatpush1.bf16.msra.mxu0 0
    %669 = vmatprep.subr.bf16.mxu0 0
    %670 = vmatpush1.bf16.msra.mxu0 0
    %671 = vmatprep.subr.bf16.mxu0 0
    %672 = vmatpush1.bf16.msra.mxu0 0
    %673 = vmatprep.subr.bf16.mxu0 0
    %674 = vmatpush1.bf16.msra.mxu0 0
    %675 = vmatprep.subr.bf16.mxu0 0
    %676 = vmatpush1.bf16.msra.mxu0 0
    %677 = vmatprep.subr.bf16.mxu0 0
    %678 = vmatpush1.bf16.msra.mxu0 0
    %679 = vmatprep.subr.bf16.mxu0 0
    %680 = vmatpush1.bf16.msra.mxu0 0
    %681 = vmatprep.mubr.bf16.mxu0 0
    %682 = vmatmul.mubr.bf16.gmra.mrb[0].mxu0 %v647
    %v683 = vpop.f32.mrb[0].mxu0
    %v684 = vadd.f32 1e-16, %v683
    %v685 = vpop.f32.mrb[0].mxu0
    %v686 = vpop.f32.mrb[0].mxu0
    %v687 = vadd.f32 1e-16, %v686
    %v688 = vpop.f32.mrb[0].mxu0
    %689 = vdwg.mxu0
    %v690 = vpack.c.bf16 %v687, %v684
    %v697 = vunpack.c.l.b16 %v43
    %v698 = vunpack.c.l.b16 %v44
    %v699 = vunpack.c.l.b16 %v45
    %v700 = vunpack.c.l.b16 %v46
    %v701 = vunpack.c.l.b16 %v47
    %v702 = vunpack.c.l.b16 %v48
    %v703 = vpack.c.b16 %v698, %v697
    %v704 = vpack.c.b16 %v700, %v699
    %v705 = vpack.c.b16 %v702, %v701
    %v707 = vsel %vm139, %v703, 0
    %v710 = vsel %vm139, %v704, 0
    %v713 = vsel %vm139, %v705, 0
    %715 = vmatprep.subr.bf16.mxu0 0
    %716 = vmatpush1.bf16.msra.mxu0 %v690
    %717 = vmatprep.subr.bf16.mxu0 0
    %718 = vmatpush1.bf16.msra.mxu0 0
    %719 = vmatprep.subr.bf16.mxu0 0
    %720 = vmatpush1.bf16.msra.mxu0 0
    %721 = vmatprep.subr.bf16.mxu0 0
    %722 = vmatpush1.bf16.msra.mxu0 0
    %723 = vmatprep.subr.bf16.mxu0 0
    %724 = vmatpush1.bf16.msra.mxu0 0
    %725 = vmatprep.subr.bf16.mxu0 0
    %726 = vmatpush1.bf16.msra.mxu0 0
    %727 = vmatprep.subr.bf16.mxu0 0
    %728 = vmatpush1.bf16.msra.mxu0 0
    %729 = vmatprep.subr.bf16.mxu0 0
    %730 = vmatpush1.bf16.msra.mxu0 0
    %731 = vmatprep.subr.bf16.mxu0 0
    %732 = vmatpush1.bf16.msra.mxu0 0
    %733 = vmatprep.subr.bf16.mxu0 0
    %734 = vmatpush1.bf16.msra.mxu0 0
    %735 = vmatprep.subr.bf16.mxu0 0
    %736 = vmatpush1.bf16.msra.mxu0 0
    %737 = vmatprep.subr.bf16.mxu0 0
    %738 = vmatpush1.bf16.msra.mxu0 0
    %739 = vmatprep.subr.bf16.mxu0 0
    %740 = vmatpush1.bf16.msra.mxu0 0
    %741 = vmatprep.subr.bf16.mxu0 0
    %742 = vmatpush1.bf16.msra.mxu0 0
    %743 = vmatprep.subr.bf16.mxu0 0
    %744 = vmatpush1.bf16.msra.mxu0 0
    %745 = vmatprep.subr.bf16.mxu0 0
    %746 = vmatpush1.bf16.msra.mxu0 0
    %747 = vmatprep.mubr.bf16.mxu0 0
    %748 = vmatmul.mubr.bf16.gmra.mrb[0].mxu0 %v707
    %v749 = vpop.f32.mrb[0].mxu0
    %v750 = vadd.f32 0.0, %v749
    %v751 = vpop.f32.mrb[0].mxu0
    %v752 = vpop.f32.mrb[0].mxu0
    %v753 = vadd.f32 0.0, %v752
    %v754 = vpop.f32.mrb[0].mxu0
    %755 = vmatprep.mubr.bf16.mxu0 0
    %756 = vmatmul.mubr.bf16.gmra.mrb[0].mxu0 %v710
    %v757 = vpop.f32.mrb[0].mxu0
    %v758 = vadd.f32 0.0, %v757
    %v759 = vpop.f32.mrb[0].mxu0
    %v760 = vpop.f32.mrb[0].mxu0
    %v761 = vadd.f32 0.0, %v760
    %v762 = vpop.f32.mrb[0].mxu0
    %763 = vmatprep.mubr.bf16.mxu0 0
    %764 = vmatmul.mubr.bf16.gmra.mrb[0].mxu0 %v713
    %v765 = vpop.f32.mrb[0].mxu0
    %v766 = vadd.f32 0.0, %v765
    %v767 = vpop.f32.mrb[0].mxu0
    %v768 = vpop.f32.mrb[0].mxu0
    %v769 = vadd.f32 0.0, %v768
    %v770 = vpop.f32.mrb[0].mxu0
    %771 = vdwg.mxu0
    %v772 = vrcp.pop %v750
    %v773 = vrcp.pop %v753
    %v774 = vrcp.pop %v758
    %v775 = vrcp.pop %v761
    %v776 = vrcp.pop %v766
    %v777 = vrcp.pop %v769
    %v778 = vmul.f32 %v626, %v772
    %v779 = vmul.f32 %v628, %v773
    %v780 = vmul.f32 %v630, %v774
    %v781 = vmul.f32 %v632, %v775
    %v782 = vmul.f32 %v634, %v776
    %v783 = vmul.f32 %v636, %v777
    %v784 = vpack.c.bf16 %v779, %v778
    %v785 = vpack.c.bf16 %v781, %v780
    %v786 = vpack.c.bf16 %v783, %v782
    %v788 = vsel %vm601, %v784, 0
    %v791 = vsel %vm601, %v785, 0
    %v794 = vsel %vm601, %v786, 0
    %vm796 = vcmask 1041408
    %vm797 = vcmask 1042432
    %v798 = vsel %vm796, 4294967295, 65535
    %v799 = vsel %vm797, %v798, 0
    %v801 = vand.u32 %v51, %v799
    %803 = vmatprep.subr.bf16.mxu0 0
    %804 = vmatpush1.bf16.msra.mxu0 %v801
    %805 = vmatprep.subr.bf16.mxu0 0
    %806 = vmatpush1.bf16.msra.mxu0 0
    %807 = vmatprep.subr.bf16.mxu0 0
    %808 = vmatpush1.bf16.msra.mxu0 0
    %809 = vmatprep.subr.bf16.mxu0 0
    %810 = vmatpush1.bf16.msra.mxu0 0
    %811 = vmatprep.subr.bf16.mxu0 0
    %812 = vmatpush1.bf16.msra.mxu0 0
    %813 = vmatprep.subr.bf16.mxu0 0
    %814 = vmatpush1.bf16.msra.mxu0 0
    %815 = vmatprep.subr.bf16.mxu0 0
    %816 = vmatpush1.bf16.msra.mxu0 0
    %817 = vmatprep.subr.bf16.mxu0 0
    %818 = vmatpush1.bf16.msra.mxu0 0
    %819 = vmatprep.subr.bf16.mxu0 0
    %820 = vmatpush1.bf16.msra.mxu0 0
    %821 = vmatprep.subr.bf16.mxu0 0
    %822 = vmatpush1.bf16.msra.mxu0 0
    %823 = vmatprep.subr.bf16.mxu0 0
    %824 = vmatpush1.bf16.msra.mxu0 0
    %825 = vmatprep.subr.bf16.mxu0 0
    %826 = vmatpush1.bf16.msra.mxu0 0
    %827 = vmatprep.subr.bf16.mxu0 0
    %828 = vmatpush1.bf16.msra.mxu0 0
    %829 = vmatprep.subr.bf16.mxu0 0
    %830 = vmatpush1.bf16.msra.mxu0 0
    %831 = vmatprep.subr.bf16.mxu0 0
    %832 = vmatpush1.bf16.msra.mxu0 0
    %833 = vmatprep.subr.bf16.mxu0 0
    %834 = vmatpush1.bf16.msra.mxu0 0
    %835 = vmatprep.mubr.bf16.mxu0 0
    %836 = vmatmul.mubr.bf16.gmra.mrb[0].mxu0 %v788
    %v837 = vpop.f32.mrb[0].mxu0
    %v838 = vadd.f32 0.0, %v837
    %v839 = vpop.f32.mrb[0].mxu0
    %v840 = vpop.f32.mrb[0].mxu0
    %v841 = vadd.f32 0.0, %v840
    %v842 = vpop.f32.mrb[0].mxu0
    %843 = vmatprep.mubr.bf16.mxu0 0
    %844 = vmatmul.mubr.bf16.gmra.mrb[0].mxu0 %v791
    %v845 = vpop.f32.mrb[0].mxu0
    %v846 = vadd.f32 0.0, %v845
    %v847 = vpop.f32.mrb[0].mxu0
    %v848 = vpop.f32.mrb[0].mxu0
    %v849 = vadd.f32 0.0, %v848
    %v850 = vpop.f32.mrb[0].mxu0
    %851 = vmatprep.mubr.bf16.mxu0 0
    %852 = vmatmul.mubr.bf16.gmra.mrb[0].mxu0 %v794
    %v853 = vpop.f32.mrb[0].mxu0
    %v854 = vadd.f32 0.0, %v853
    %v855 = vpop.f32.mrb[0].mxu0
    %v856 = vpop.f32.mrb[0].mxu0
    %v857 = vadd.f32 0.0, %v856
    %v858 = vpop.f32.mrb[0].mxu0
    %859 = vdwg.mxu0
    %866 = vrot.lane.b32.xlu0 %v838, 64
    %v867 = vpop.permute.xlu0 %866
    %868 = vrot.lane.b32.xlu0 %v841, 64
    %v869 = vpop.permute.xlu0 %868
    %870 = vrot.lane.b32.xlu0 %v846, 64
    %v871 = vpop.permute.xlu0 %870
    %872 = vrot.lane.b32.xlu0 %v849, 64
    %v873 = vpop.permute.xlu0 %872
    %874 = vrot.lane.b32.xlu0 %v854, 64
    %v875 = vpop.permute.xlu0 %874
    %876 = vrot.lane.b32.xlu0 %v857, 64
    %v877 = vpop.permute.xlu0 %876
    %v884 = vmul.f32 %v391, %v867
    %v885 = vmul.f32 %v392, %v869
    %v886 = vmul.f32 %v393, %v871
    %v887 = vmul.f32 %v394, %v873
    %v888 = vmul.f32 %v395, %v875
    %v889 = vmul.f32 %v396, %v877
    %v890 = vpack.c.bf16 %v885, %v884
    %v891 = vpack.c.bf16 %v887, %v886
    %v892 = vpack.c.bf16 %v889, %v888
    %v893 = vlaneseq
    %v894 = vshrl.u32 %v893, 7
    %v895 = vsub.s32 3, %v894
    %v896 = vrot.slane %v106, %v895
    %900 = vrot.lane.b32.xlu0 %v890, 64
    %v901 = vpop.permute.xlu0 %900
    %902 = vrot.lane.b32.xlu0 %v891, 64
    %v903 = vpop.permute.xlu0 %902
    %904 = vrot.lane.b32.xlu0 %v892, 64
    %v905 = vpop.permute.xlu0 %904
    %909 = vmatprep.subr.bf16.mxu0 0
    %910 = vmatpush1.bf16.msra.mxu0 %v901
    %911 = vmatprep.subr.bf16.mxu0 0
    %912 = vmatpush1.bf16.msra.mxu0 %v903
    %913 = vmatprep.subr.bf16.mxu0 0
    %914 = vmatpush1.bf16.msra.mxu0 %v905
    %915 = vmatprep.subr.bf16.mxu0 0
    %916 = vmatpush1.bf16.msra.mxu0 0
    %917 = vmatprep.subr.bf16.mxu0 0
    %918 = vmatpush1.bf16.msra.mxu0 0
    %919 = vmatprep.subr.bf16.mxu0 0
    %920 = vmatpush1.bf16.msra.mxu0 0
    %921 = vmatprep.subr.bf16.mxu0 0
    %922 = vmatpush1.bf16.msra.mxu0 0
    %923 = vmatprep.subr.bf16.mxu0 0
    %924 = vmatpush1.bf16.msra.mxu0 0
    %925 = vmatprep.subr.bf16.mxu0 0
    %926 = vmatpush1.bf16.msra.mxu0 0
    %927 = vmatprep.subr.bf16.mxu0 0
    %928 = vmatpush1.bf16.msra.mxu0 0
    %929 = vmatprep.subr.bf16.mxu0 0
    %930 = vmatpush1.bf16.msra.mxu0 0
    %931 = vmatprep.subr.bf16.mxu0 0
    %932 = vmatpush1.bf16.msra.mxu0 0
    %933 = vmatprep.subr.bf16.mxu0 0
    %934 = vmatpush1.bf16.msra.mxu0 0
    %935 = vmatprep.subr.bf16.mxu0 0
    %936 = vmatpush1.bf16.msra.mxu0 0
    %937 = vmatprep.subr.bf16.mxu0 0
    %938 = vmatpush1.bf16.msra.mxu0 0
    %939 = vmatprep.subr.bf16.mxu0 0
    %940 = vmatpush1.bf16.msra.mxu0 0
    %941 = vmatprep.mubr.bf16.mxu0 0
    %942 = vmatmul.mubr.bf16.gmra.mrb[0].mxu0 %v647
    %v943 = vpop.f32.mrb[0].mxu0
    %v944 = vadd.f32 %v896, %v943
    %v945 = vpop.f32.mrb[0].mxu0
    %v946 = vpop.f32.mrb[0].mxu0
    %v947 = vadd.f32 %v896, %v946
    %v948 = vpop.f32.mrb[0].mxu0
    %949 = vdwg.mxu0
    %v950 = vadd.f32 %v55, %v944
    %v951 = vadd.f32 %v56, %v947
    %v952 = vsel %vm270, %v950, 0.0
    %953 = vadd.xlane.f32.xlu0 %v952
    %v954 = vpop.xlane.xlu0 %953
    %v955 = vsel %vm270, %v951, 0.0
    %956 = vadd.xlane.f32.xlu0 %v955
    %v957 = vpop.xlane.xlu0 %956
    %v958 = vrcp.pop 40.0
    %v959 = vmul.f32 %v954, %v958
    %v960 = vmul.f32 %v957, %v958
    %v961 = vsub.f32 %v950, %v959
    %v962 = vsub.f32 %v951, %v960
    %v963 = vmul.f32 %v961, %v961
    %v964 = vmul.f32 %v962, %v962
    %v965 = vsel %vm270, %v963, 0.0
    %966 = vadd.xlane.f32.xlu0 %v965
    %v967 = vpop.xlane.xlu0 %966
    %v968 = vsel %vm270, %v964, 0.0
    %969 = vadd.xlane.f32.xlu0 %v968
    %v970 = vpop.xlane.xlu0 %969
    %v971 = vmul.f32 %v967, %v958
    %v972 = vmul.f32 %v970, %v958
    %v973 = vadd.f32 %v971, 1e-05
    %v974 = vadd.f32 %v972, 1e-05
    %v975 = vrsqrt.pop %v973
    %v976 = vrsqrt.pop %v974
    %v977 = vmul.f32 %v961, %v975
    %v978 = vmul.f32 %v962, %v976
    %v979 = vlaneseq
    %v980 = vshrl.u32 %v979, 7
    %v981 = vsub.s32 4, %v980
    %v982 = vrot.slane %v106, %v981
    %v983 = vmul.f32 %v977, %v982
    %v984 = vmul.f32 %v978, %v982
    %v985 = vlaneseq
    %v986 = vshrl.u32 %v985, 7
    %v987 = vsub.s32 5, %v986
    %v988 = vrot.slane %v106, %v987
    %v989 = vadd.f32 %v983, %v988
    %v990 = vadd.f32 %v984, %v988
    %v991 = vpack.c.bf16 %v990, %v989
    %v992 = vlaneseq
    %v993 = vshrl.u32 %v992, 7
    %v994 = vsub.s32 6, %v993
    %v995 = vrot.slane %v106, %v994
    %v1001 = vunpack.c.l.b16 %v70
    %v1002 = vunpack.c.l.b16 %v71
    %v1003 = vunpack.c.l.b16 %v72
    %v1004 = vunpack.c.l.b16 %v73
    %v1005 = vunpack.c.l.b16 %v74
    %v1006 = vpack.c.b16 %v1002, %v1001
    %v1007 = vpack.c.b16 %v1004, %v1003
    %v1008 = vpack.c.b16 %v1005, %v1005
    %v1012 = vsel %vm270, %v991, 0
    %v1015 = vsel %vm289, %v1008, 0
    %1017 = vmatprep.subr.bf16.mxu0 0
    %1018 = vmatpush1.bf16.msra.mxu0 %v1006
    %1019 = vmatprep.subr.bf16.mxu0 0
    %1020 = vmatpush1.bf16.msra.mxu0 %v1007
    %1021 = vmatprep.subr.bf16.mxu0 0
    %1022 = vmatpush1.bf16.msra.mxu0 %v1015
    %1023 = vmatprep.subr.bf16.mxu0 0
    %1024 = vmatpush1.bf16.msra.mxu0 0
    %1025 = vmatprep.subr.bf16.mxu0 0
    %1026 = vmatpush1.bf16.msra.mxu0 0
    %1027 = vmatprep.subr.bf16.mxu0 0
    %1028 = vmatpush1.bf16.msra.mxu0 0
    %1029 = vmatprep.subr.bf16.mxu0 0
    %1030 = vmatpush1.bf16.msra.mxu0 0
    %1031 = vmatprep.subr.bf16.mxu0 0
    %1032 = vmatpush1.bf16.msra.mxu0 0
    %1033 = vmatprep.subr.bf16.mxu0 0
    %1034 = vmatpush1.bf16.msra.mxu0 0
    %1035 = vmatprep.subr.bf16.mxu0 0
    %1036 = vmatpush1.bf16.msra.mxu0 0
    %1037 = vmatprep.subr.bf16.mxu0 0
    %1038 = vmatpush1.bf16.msra.mxu0 0
    %1039 = vmatprep.subr.bf16.mxu0 0
    %1040 = vmatpush1.bf16.msra.mxu0 0
    %1041 = vmatprep.subr.bf16.mxu0 0
    %1042 = vmatpush1.bf16.msra.mxu0 0
    %1043 = vmatprep.subr.bf16.mxu0 0
    %1044 = vmatpush1.bf16.msra.mxu0 0
    %1045 = vmatprep.subr.bf16.mxu0 0
    %1046 = vmatpush1.bf16.msra.mxu0 0
    %1047 = vmatprep.subr.bf16.mxu0 0
    %1048 = vmatpush1.bf16.msra.mxu0 0
    %1049 = vmatprep.mubr.bf16.mxu0 0
    %1050 = vmatmul.mubr.bf16.gmra.mrb[0].mxu0 %v1012
    %v1051 = vpop.f32.mrb[0].mxu0
    %v1052 = vadd.f32 %v995, %v1051
    %v1053 = vpop.f32.mrb[0].mxu0
    %v1054 = vpop.f32.mrb[0].mxu0
    %v1055 = vadd.f32 %v995, %v1054
    %v1056 = vpop.f32.mrb[0].mxu0
    %1057 = vdwg.mxu0
    %vm1058 = vcmp.gt.f32.partialorder %v1052, 0.0
    %vm1059 = vcmp.gt.f32.partialorder %v1055, 0.0
    %v1060 = vmin.f32 %v1052, 0.0
    %v1061 = vmin.f32 %v1055, 0.0
    %v1062 = vmul.f32 %v1060, 1.442695
    %v1063 = vpow.pop %v1062
    %v1064 = vmul.f32 %v1061, 1.442695
    %v1065 = vpow.pop %v1064
    %v1066 = vsub.f32 %v1063, 1.0
    %v1067 = vsub.f32 %v1065, 1.0
    %v1068 = vmul.f32 %v1066, 1.6732632
    %v1069 = vmul.f32 %v1067, 1.6732632
    %v1070 = vsel %vm1058, %v1052, %v1068
    %v1071 = vsel %vm1059, %v1055, %v1069
    %v1072 = vmul.f32 %v1070, 1.050701
    %v1073 = vmul.f32 %v1071, 1.050701
    %v1074 = vsel %vm270, %v1072, 0.0
    %1075 = vadd.xlane.f32.xlu0 %v1074
    %v1076 = vpop.xlane.xlu0 %1075
    %v1077 = vsel %vm270, %v1073, 0.0
    %1078 = vadd.xlane.f32.xlu0 %v1077
    %v1079 = vpop.xlane.xlu0 %1078
    %v1080 = vmul.f32 %v1076, %v958
    %v1081 = vmul.f32 %v1079, %v958
    %v1082 = vsub.f32 %v1072, %v1080
    %v1083 = vsub.f32 %v1073, %v1081
    %v1084 = vmul.f32 %v1082, %v1082
    %v1085 = vmul.f32 %v1083, %v1083
    %v1086 = vsel %vm270, %v1084, 0.0
    %1087 = vadd.xlane.f32.xlu0 %v1086
    %v1088 = vpop.xlane.xlu0 %1087
    %v1089 = vsel %vm270, %v1085, 0.0
    %1090 = vadd.xlane.f32.xlu0 %v1089
    %v1091 = vpop.xlane.xlu0 %1090
    %v1092 = vmul.f32 %v1088, %v958
    %v1093 = vmul.f32 %v1091, %v958
    %v1094 = vadd.f32 %v1092, 1e-05
    %v1095 = vadd.f32 %v1093, 1e-05
    %v1096 = vrsqrt.pop %v1094
    %v1097 = vrsqrt.pop %v1095
    %v1098 = vmul.f32 %v1082, %v1096
    %v1099 = vmul.f32 %v1083, %v1097
    %v1100 = vlaneseq
    %v1101 = vshrl.u32 %v1100, 7
    %v1102 = vsub.s32 7, %v1101
    %v1103 = vrot.slane %v106, %v1102
    %v1104 = vmul.f32 %v1098, %v1103
    %v1105 = vmul.f32 %v1099, %v1103
    %v1106 = vlaneseq
    %v1107 = vshrl.u32 %v1106, 7
    %v1108 = vsub.s32 0, %v1107
    %v1109 = vrot.slane %v107, %v1108
    %v1110 = vadd.f32 %v1104, %v1109
    %v1111 = vadd.f32 %v1105, %v1109
    %v1112 = vpack.c.bf16 %v1111, %v1110
    %v1113 = vlaneseq
    %v1114 = vshrl.u32 %v1113, 7
    %v1115 = vsub.s32 1, %v1114
    %v1116 = vrot.slane %v107, %v1115
    %v1122 = vunpack.c.l.b16 %v75
    %v1123 = vunpack.c.l.b16 %v76
    %v1124 = vunpack.c.l.b16 %v77
    %v1125 = vunpack.c.l.b16 %v78
    %v1126 = vunpack.c.l.b16 %v79
    %v1127 = vpack.c.b16 %v1123, %v1122
    %v1128 = vpack.c.b16 %v1125, %v1124
    %v1129 = vpack.c.b16 %v1126, %v1126
    %v1133 = vsel %vm270, %v1112, 0
    %v1136 = vsel %vm289, %v1129, 0
    %1138 = vmatprep.subr.bf16.mxu0 0
    %1139 = vmatpush1.bf16.msra.mxu0 %v1127
    %1140 = vmatprep.subr.bf16.mxu0 0
    %1141 = vmatpush1.bf16.msra.mxu0 %v1128
    %1142 = vmatprep.subr.bf16.mxu0 0
    %1143 = vmatpush1.bf16.msra.mxu0 %v1136
    %1144 = vmatprep.subr.bf16.mxu0 0
    %1145 = vmatpush1.bf16.msra.mxu0 0
    %1146 = vmatprep.subr.bf16.mxu0 0
    %1147 = vmatpush1.bf16.msra.mxu0 0
    %1148 = vmatprep.subr.bf16.mxu0 0
    %1149 = vmatpush1.bf16.msra.mxu0 0
    %1150 = vmatprep.subr.bf16.mxu0 0
    %1151 = vmatpush1.bf16.msra.mxu0 0
    %1152 = vmatprep.subr.bf16.mxu0 0
    %1153 = vmatpush1.bf16.msra.mxu0 0
    %1154 = vmatprep.subr.bf16.mxu0 0
    %1155 = vmatpush1.bf16.msra.mxu0 0
    %1156 = vmatprep.subr.bf16.mxu0 0
    %1157 = vmatpush1.bf16.msra.mxu0 0
    %1158 = vmatprep.subr.bf16.mxu0 0
    %1159 = vmatpush1.bf16.msra.mxu0 0
    %1160 = vmatprep.subr.bf16.mxu0 0
    %1161 = vmatpush1.bf16.msra.mxu0 0
    %1162 = vmatprep.subr.bf16.mxu0 0
    %1163 = vmatpush1.bf16.msra.mxu0 0
    %1164 = vmatprep.subr.bf16.mxu0 0
    %1165 = vmatpush1.bf16.msra.mxu0 0
    %1166 = vmatprep.subr.bf16.mxu0 0
    %1167 = vmatpush1.bf16.msra.mxu0 0
    %1168 = vmatprep.subr.bf16.mxu0 0
    %1169 = vmatpush1.bf16.msra.mxu0 0
    %1170 = vmatprep.mubr.bf16.mxu0 0
    %1171 = vmatmul.mubr.bf16.gmra.mrb[0].mxu0 %v1133
    %v1172 = vpop.f32.mrb[0].mxu0
    %v1173 = vadd.f32 %v1116, %v1172
    %v1174 = vpop.f32.mrb[0].mxu0
    %v1175 = vpop.f32.mrb[0].mxu0
    %v1176 = vadd.f32 %v1116, %v1175
    %v1177 = vpop.f32.mrb[0].mxu0
    %1178 = vdwg.mxu0
    %v1179 = vadd.f32 %v989, %v1173
    %v1180 = vadd.f32 %v990, %v1176
    %v1181 = vsel %vm270, %v1179, 0.0
    %1182 = vadd.xlane.f32.xlu0 %v1181
    %v1183 = vpop.xlane.xlu0 %1182
    %v1184 = vsel %vm270, %v1180, 0.0
    %1185 = vadd.xlane.f32.xlu0 %v1184
    %v1186 = vpop.xlane.xlu0 %1185
    %v1187 = vmul.f32 %v1183, %v958
    %v1188 = vmul.f32 %v1186, %v958
    %v1189 = vsub.f32 %v1179, %v1187
    %v1190 = vsub.f32 %v1180, %v1188
    %v1191 = vmul.f32 %v1189, %v1189
    %v1192 = vmul.f32 %v1190, %v1190
    %v1193 = vsel %vm270, %v1191, 0.0
    %1194 = vadd.xlane.f32.xlu0 %v1193
    %v1195 = vpop.xlane.xlu0 %1194
    %v1196 = vsel %vm270, %v1192, 0.0
    %1197 = vadd.xlane.f32.xlu0 %v1196
    %v1198 = vpop.xlane.xlu0 %1197
    %v1199 = vmul.f32 %v1195, %v958
    %v1200 = vmul.f32 %v1198, %v958
    %v1201 = vadd.f32 %v1199, 1e-05
    %v1202 = vadd.f32 %v1200, 1e-05
    %v1203 = vrsqrt.pop %v1201
    %v1204 = vrsqrt.pop %v1202
    %v1205 = vmul.f32 %v1189, %v1203
    %v1206 = vmul.f32 %v1190, %v1204
    %v1207 = vlaneseq
    %v1208 = vshrl.u32 %v1207, 7
    %v1209 = vsub.s32 2, %v1208
    %v1210 = vrot.slane %v107, %v1209
    %v1211 = vmul.f32 %v1205, %v1210
    %v1212 = vmul.f32 %v1206, %v1210
    %v1213 = vlaneseq
    %v1214 = vshrl.u32 %v1213, 7
    %v1215 = vsub.s32 3, %v1214
    %v1216 = vrot.slane %v107, %v1215
    %v1217 = vadd.f32 %v1211, %v1216
    %v1218 = vadd.f32 %v1212, %v1216
    %v1219 = vpack.c.bf16 %v1218, %v1217
    %v1220 = vmul.f32 %v1217, %v1217
    %v1221 = vmul.f32 %v1218, %v1218
    %v1222 = vpack.c.bf16 %v1221, %v1220
    %vm1223 = vcmask 261120
    %v1225 = vsel %vm1223, %v54, 0
    %1227 = vmatprep.subr.bf16.mxu0 0
    %1228 = vmatpush1.bf16.msra.mxu0 %v1219
    %1229 = vmatprep.subr.bf16.mxu0 0
    %1230 = vmatpush1.bf16.msra.mxu0 %v1222
    %1231 = vmatprep.subr.bf16.mxu0 0
    %1232 = vmatpush1.bf16.msra.mxu0 0
    %1233 = vmatprep.subr.bf16.mxu0 0
    %1234 = vmatpush1.bf16.msra.mxu0 0
    %1235 = vmatprep.subr.bf16.mxu0 0
    %1236 = vmatpush1.bf16.msra.mxu0 0
    %1237 = vmatprep.subr.bf16.mxu0 0
    %1238 = vmatpush1.bf16.msra.mxu0 0
    %1239 = vmatprep.subr.bf16.mxu0 0
    %1240 = vmatpush1.bf16.msra.mxu0 0
    %1241 = vmatprep.subr.bf16.mxu0 0
    %1242 = vmatpush1.bf16.msra.mxu0 0
    %1243 = vmatprep.subr.bf16.mxu0 0
    %1244 = vmatpush1.bf16.msra.mxu0 0
    %1245 = vmatprep.subr.bf16.mxu0 0
    %1246 = vmatpush1.bf16.msra.mxu0 0
    %1247 = vmatprep.subr.bf16.mxu0 0
    %1248 = vmatpush1.bf16.msra.mxu0 0
    %1249 = vmatprep.subr.bf16.mxu0 0
    %1250 = vmatpush1.bf16.msra.mxu0 0
    %1251 = vmatprep.subr.bf16.mxu0 0
    %1252 = vmatpush1.bf16.msra.mxu0 0
    %1253 = vmatprep.subr.bf16.mxu0 0
    %1254 = vmatpush1.bf16.msra.mxu0 0
    %1255 = vmatprep.subr.bf16.mxu0 0
    %1256 = vmatpush1.bf16.msra.mxu0 0
    %1257 = vmatprep.subr.bf16.mxu0 0
    %1258 = vmatpush1.bf16.msra.mxu0 0
    %1259 = vmatprep.mubr.bf16.mxu0 0
    %1260 = vmatmul.mubr.bf16.gmra.mrb[0].mxu0 %v1225
    %v1261 = vpop.f32.mrb[0].mxu0
    %v1262 = vadd.f32 0.0, %v1261
    %v1263 = vpop.f32.mrb[0].mxu0
    %v1264 = vpop.f32.mrb[0].mxu0
    %v1265 = vpop.f32.mrb[0].mxu0
    %1266 = vdwg.mxu0
    %v1267 = vmul.f32 %v1262, %v1262
    %v1269 = vrot.slane %v1267, 6
    %v1271 = vsub.f32 %v1262, %v1269
    %v1272 = vmax.f32 %v1271, 0.0
    %v1273 = vadd.f32 %v1272, 1e-05
    %v1274 = vrsqrt.pop %v1273
    %v1275 = vmul.f32 %v1273, %v1274
    %vm1276 = vcmp.eq.f32.partialorder %v1273, inf
    %v1277 = vsel %vm1276, %v1273, %v1275
    %vm1278 = vcmp.eq.f32.partialorder %v1273, 0.0
    %v1279 = vand.u32 %v1273, 2147483648
    %v1280 = vsel %vm1278, %v1279, %v1277
    %v1281 = vsub.f32 0.0, %v1217
    %v1282 = vsub.f32 0.0, %v1218
    %1285 = vrot.lane.b32.xlu0 %v1281, 40
    %v1286 = vpop.permute.xlu0 %1285
    %1287 = vrot.lane.b32.xlu0 %v1282, 40
    %v1288 = vpop.permute.xlu0 %1287
    %v1291 = vsel %vm270, %v1217, %v1286
    %v1292 = vsel %vm270, %v1218, %v1288
    %v1293 = vsel %vm58, 65537, 0
    %v1294 = vsel %vm59, 65537, 0
    %v1295 = vunpack.c.l.b16 %v1293
    %v1296 = vunpack.c.l.b16 %v1294
    %vm1297 = vcmp.ne.s32.totalorder %v1295, 0
    %vm1298 = vcmp.ne.s32.totalorder %v1296, 0
    %v1299 = vsel %vm1297, 1, 0
    %v1300 = vsel %vm1298, 1, 0
    %1301 = vset.pattern.permute.xlu0 0
    %1302 = vperm.xlu0 %1301, %v1299
    %v1303 = vpop.permute.xlu0 %1302
    %1304 = vset.pattern.permute.xlu0 0
    %1305 = vperm.xlu0 %1304, %v1300
    %v1306 = vpop.permute.xlu0 %1305
    %vm1307 = vcmp.eq.s32.totalorder %v1303, 1
    %vm1308 = vcmp.eq.s32.totalorder %v1306, 1
    %v1309 = vsel %vm1307, %v1291, -1e+30
    %v1310 = vsel %vm1308, %v1292, -1e+30
    %vm1311 = vcmask 654336
    %v1312 = vsel %vm1311, %v1309, -inf
    %v1313 = vsel %vm1311, %v1310, -inf
    %v1314 = vmax.f32 %v1312, %v1313
    %v1315 = vrot.slane %v1314, 4
    %v1316 = vmax.f32 %v1314, %v1315
    %v1317 = vrot.slane %v1316, 2
    %v1318 = vmax.f32 %v1316, %v1317
    %v1319 = vrot.slane %v1318, 1
    %v1320 = vmax.f32 %v1318, %v1319
    %1321 = vrot.lane.b32.xlu0 %v1299, 127
    %v1322 = vpop.permute.xlu0 %1321
    %1323 = vrot.lane.b32.xlu0 %v1300, 127
    %v1324 = vpop.permute.xlu0 %1323
    %vm1325 = vcmp.ne.s32.totalorder %v1322, 0
    %vm1326 = vcmp.ne.s32.totalorder %v1324, 0
    %v1327 = vsel %vm1325, 1, 0
    %v1328 = vsel %vm1326, 1, 0
    %1329 = vset.pattern.permute.xlu0 0
    %1330 = vperm.xlu0 %1329, %v1327
    %v1331 = vpop.permute.xlu0 %1330
    %1332 = vset.pattern.permute.xlu0 0
    %1333 = vperm.xlu0 %1332, %v1328
    %v1334 = vpop.permute.xlu0 %1333
    %vm1335 = vcmp.eq.s32.totalorder %v1331, 1
    %vm1336 = vcmp.eq.s32.totalorder %v1334, 1
    %v1337 = vsel %vm1335, %v1291, -1e+30
    %v1338 = vsel %vm1336, %v1292, -1e+30
    %v1339 = vsel %vm1311, %v1337, -inf
    %v1340 = vsel %vm1311, %v1338, -inf
    %v1341 = vmax.f32 %v1339, %v1340
    %v1342 = vrot.slane %v1341, 4
    %v1343 = vmax.f32 %v1341, %v1342
    %v1344 = vrot.slane %v1343, 2
    %v1345 = vmax.f32 %v1343, %v1344
    %v1346 = vrot.slane %v1345, 1
    %v1347 = vmax.f32 %v1345, %v1346
    %vm1348 = vcmask 1040384
    %v1349 = vsel %vm1348, %v1320, %v1347
    %v1350 = vsub.f32 0.0, %v1349
    %1352 = vrot.lane.b32.xlu0 %v1262, 8
    %v1353 = vpop.permute.xlu0 %1352
    %v1356 = vrot.slane %v1280, 2
    %1357 = vrot.lane.b32.xlu0 %v1356, 48
    %v1358 = vpop.permute.xlu0 %1357
    %1361 = vrot.lane.b32.xlu0 %v1349, 88
    %v1362 = vpop.permute.xlu0 %1361
    %1365 = vrot.lane.b32.xlu0 %v1350, 88
    %v1366 = vpop.permute.xlu0 %1365
    %vm1368 = vcmask 64512
    %v1369 = vsel %vm1368, %v57, %v1353
    %v1370 = vsel %vm645, %v1369, %v1358
    %vm1371 = vcmask 719872
    %v1372 = vsel %vm1371, %v1370, %v1362
    %v1373 = vpack.c.bf16 %v1372, %v1372
    %v1374 = vpack.c.bf16 %v1366, %v1366
    %v1375 = vlaneseq
    %v1376 = vshrl.u32 %v1375, 7
    %v1377 = vsub.s32 4, %v1376
    %v1378 = vrot.slane %v107, %v1377
    %v1400 = vunpack.c.l.b16 %v80
    %v1401 = vunpack.c.l.b16 %v81
    %v1402 = vunpack.c.l.b16 %v82
    %v1403 = vunpack.c.l.b16 %v83
    %v1404 = vunpack.c.l.b16 %v84
    %v1405 = vunpack.c.l.b16 %v85
    %v1406 = vunpack.c.l.b16 %v86
    %v1407 = vunpack.c.l.b16 %v87
    %v1408 = vunpack.c.l.b16 %v88
    %v1409 = vunpack.c.l.b16 %v89
    %v1410 = vunpack.c.l.b16 %v90
    %v1411 = vunpack.c.l.b16 %v91
    %v1412 = vunpack.c.l.b16 %v92
    %v1413 = vunpack.c.l.b16 %v93
    %v1414 = vunpack.c.l.b16 %v94
    %v1415 = vunpack.c.l.b16 %v95
    %v1416 = vunpack.c.l.b16 %v96
    %v1417 = vunpack.c.l.b16 %v97
    %v1418 = vunpack.c.l.b16 %v98
    %v1419 = vunpack.c.l.b16 %v99
    %v1420 = vunpack.c.l.b16 %v100
    %v1421 = vpack.c.b16 %v1401, %v1400
    %v1422 = vpack.c.b16 %v1403, %v1402
    %v1423 = vpack.c.b16 %v1405, %v1404
    %v1424 = vpack.c.b16 %v1407, %v1406
    %v1425 = vpack.c.b16 %v1409, %v1408
    %v1426 = vpack.c.b16 %v1411, %v1410
    %v1427 = vpack.c.b16 %v1413, %v1412
    %v1428 = vpack.c.b16 %v1415, %v1414
    %v1429 = vpack.c.b16 %v1417, %v1416
    %v1430 = vpack.c.b16 %v1419, %v1418
    %v1431 = vpack.c.b16 %v1420, %v1420
    %v1443 = vsel %vm270, %v1374, 0
    %v1446 = vsel %vm289, %v1431, 0
    %1448 = vmatprep.subr.bf16.mxu0 0
    %1449 = vmatpush1.bf16.msra.mxu0 %v1421
    %1450 = vmatprep.subr.bf16.mxu0 0
    %1451 = vmatpush1.bf16.msra.mxu0 %v1422
    %1452 = vmatprep.subr.bf16.mxu0 0
    %1453 = vmatpush1.bf16.msra.mxu0 %v1423
    %1454 = vmatprep.subr.bf16.mxu0 0
    %1455 = vmatpush1.bf16.msra.mxu0 %v1424
    %1456 = vmatprep.subr.bf16.mxu0 0
    %1457 = vmatpush1.bf16.msra.mxu0 %v1425
    %1458 = vmatprep.subr.bf16.mxu0 0
    %1459 = vmatpush1.bf16.msra.mxu0 %v1426
    %1460 = vmatprep.subr.bf16.mxu0 0
    %1461 = vmatpush1.bf16.msra.mxu0 %v1427
    %1462 = vmatprep.subr.bf16.mxu0 0
    %1463 = vmatpush1.bf16.msra.mxu0 %v1428
    %1464 = vmatprep.subr.bf16.mxu0 0
    %1465 = vmatpush1.bf16.msra.mxu0 %v1429
    %1466 = vmatprep.subr.bf16.mxu0 0
    %1467 = vmatpush1.bf16.msra.mxu0 %v1430
    %1468 = vmatprep.subr.bf16.mxu0 0
    %1469 = vmatpush1.bf16.msra.mxu0 %v1446
    %1470 = vmatprep.subr.bf16.mxu0 0
    %1471 = vmatpush1.bf16.msra.mxu0 0
    %1472 = vmatprep.subr.bf16.mxu0 0
    %1473 = vmatpush1.bf16.msra.mxu0 0
    %1474 = vmatprep.subr.bf16.mxu0 0
    %1475 = vmatpush1.bf16.msra.mxu0 0
    %1476 = vmatprep.subr.bf16.mxu0 0
    %1477 = vmatpush1.bf16.msra.mxu0 0
    %1478 = vmatprep.subr.bf16.mxu0 0
    %1479 = vmatpush1.bf16.msra.mxu0 0
    %1480 = vmatprep.mubr.bf16.mxu0 %v1443
    %1481 = vmatmul.mubr.bf16.gmra.mrb[0].mxu0 %v1373
    %v1482 = vpop.f32.mrb[0].mxu0
    %v1483 = vadd.f32 %v1378, %v1482
    %v1484 = vpop.f32.mrb[0].mxu0
    %v1485 = vpop.f32.mrb[0].mxu0
    %v1486 = vpop.f32.mrb[0].mxu0
    %1487 = vdwg.mxu0
    %vm1488 = vcmp.gt.f32.partialorder %v1483, 0.0
    %v1489 = vmin.f32 %v1483, 0.0
    %v1490 = vmul.f32 %v1489, 1.442695
    %v1491 = vpow.pop %v1490
    %v1492 = vsub.f32 %v1491, 1.0
    %v1493 = vmul.f32 %v1492, 1.6732632
    %v1494 = vsel %vm1488, %v1483, %v1493
    %v1495 = vmul.f32 %v1494, 1.050701
    %vm1496 = vcmask 320512
    %v1497 = vsel %vm1496, %v1495, 0.0
    %1498 = vadd.xlane.f32.xlu0 %v1497
    %v1499 = vpop.xlane.xlu0 %1498
    %v1500 = vmul.f32 %v1499, %v958
    %v1501 = vsub.f32 %v1495, %v1500
    %v1502 = vmul.f32 %v1501, %v1501
    %v1503 = vsel %vm1496, %v1502, 0.0
    %1504 = vadd.xlane.f32.xlu0 %v1503
    %v1505 = vpop.xlane.xlu0 %1504
    %v1506 = vmul.f32 %v1505, %v958
    %v1507 = vadd.f32 %v1506, 1e-05
    %v1508 = vrsqrt.pop %v1507
    %v1509 = vmul.f32 %v1501, %v1508
    %v1510 = vlaneseq
    %v1511 = vshrl.u32 %v1510, 7
    %v1512 = vsub.s32 5, %v1511
    %v1513 = vrot.slane %v107, %v1512
    %v1514 = vmul.f32 %v1509, %v1513
    %v1515 = vlaneseq
    %v1516 = vshrl.u32 %v1515, 7
    %v1517 = vsub.s32 6, %v1516
    %v1518 = vrot.slane %v107, %v1517
    %v1519 = vadd.f32 %v1514, %v1518
    %v1520 = vpack.c.bf16 %v1519, %v1519
    %v1521 = vlaneseq
    %v1522 = vshrl.u32 %v1521, 7
    %v1523 = vsub.s32 7, %v1522
    %v1524 = vrot.slane %v107, %v1523
    %v1530 = vunpack.c.l.b16 %v101
    %v1531 = vunpack.c.l.b16 %v102
    %v1532 = vunpack.c.l.b16 %v103
    %v1533 = vunpack.c.l.b16 %v104
    %v1534 = vunpack.c.l.b16 %v105
    %v1535 = vpack.c.b16 %v1531, %v1530
    %v1536 = vpack.c.b16 %v1533, %v1532
    %v1537 = vpack.c.b16 %v1534, %v1534
    %v1541 = vsel %vm270, %v1520, 0
    %v1544 = vsel %vm289, %v1537, 0
    %1546 = vmatprep.subr.bf16.mxu0 0
    %1547 = vmatpush1.bf16.msra.mxu0 %v1535
    %1548 = vmatprep.subr.bf16.mxu0 0
    %1549 = vmatpush1.bf16.msra.mxu0 %v1536
    %1550 = vmatprep.subr.bf16.mxu0 0
    %1551 = vmatpush1.bf16.msra.mxu0 %v1544
    %1552 = vmatprep.subr.bf16.mxu0 0
    %1553 = vmatpush1.bf16.msra.mxu0 0
    %1554 = vmatprep.subr.bf16.mxu0 0
    %1555 = vmatpush1.bf16.msra.mxu0 0
    %1556 = vmatprep.subr.bf16.mxu0 0
    %1557 = vmatpush1.bf16.msra.mxu0 0
    %1558 = vmatprep.subr.bf16.mxu0 0
    %1559 = vmatpush1.bf16.msra.mxu0 0
    %1560 = vmatprep.subr.bf16.mxu0 0
    %1561 = vmatpush1.bf16.msra.mxu0 0
    %1562 = vmatprep.subr.bf16.mxu0 0
    %1563 = vmatpush1.bf16.msra.mxu0 0
    %1564 = vmatprep.subr.bf16.mxu0 0
    %1565 = vmatpush1.bf16.msra.mxu0 0
    %1566 = vmatprep.subr.bf16.mxu0 0
    %1567 = vmatpush1.bf16.msra.mxu0 0
    %1568 = vmatprep.subr.bf16.mxu0 0
    %1569 = vmatpush1.bf16.msra.mxu0 0
    %1570 = vmatprep.subr.bf16.mxu0 0
    %1571 = vmatpush1.bf16.msra.mxu0 0
    %1572 = vmatprep.subr.bf16.mxu0 0
    %1573 = vmatpush1.bf16.msra.mxu0 0
    %1574 = vmatprep.subr.bf16.mxu0 0
    %1575 = vmatpush1.bf16.msra.mxu0 0
    %1576 = vmatprep.subr.bf16.mxu0 0
    %1577 = vmatpush1.bf16.msra.mxu0 0
    %1578 = vmatprep.mubr.bf16.mxu0 0
    %1579 = vmatmul.mubr.bf16.gmra.mrb[0].mxu0 %v1541
    %v1580 = vpop.f32.mrb[0].mxu0
    %v1581 = vadd.f32 %v1524, %v1580
    %v1582 = vpop.f32.mrb[0].mxu0
    %v1583 = vpop.f32.mrb[0].mxu0
    %v1584 = vpop.f32.mrb[0].mxu0
    %1585 = vdwg.mxu0
    %s1586 = scalar_lea.vmem %s4, 40
    %v1587 = vld [vmem:[%s1586] sm:$0xff]
    %v1588 = vld [vmem:[%s1586 + $0x8] sm:$0xff]
    %v1589 = vld [vmem:[%s1586 + $0x10] sm:$0xff]
    %v1590 = vld [vmem:[%s1586 + $0x18] sm:$0xff]
    %v1591 = vld [vmem:[%s1586 + $0x20] sm:$0xff]
    %s1592 = scalar_lea.vmem %s5, 192
    %v1593 = vld [vmem:[%s1592 + $0x8] sm:$0xf]
    %v1594 = vld [vmem:[%s1592 + $0xc] sm:$0xf]
    %v1595 = vld [vmem:[%s1592 + $0x10] sm:$0xf]
    %v1596 = vld [vmem:[%s1592 + $0x14] sm:$0xf]
    %v1597 = vld [vmem:[%s1592 + $0x18] sm:$0xf]
    %v1598 = vld [vmem:[%s1592 + $0x20] sm:$0xf]
    %v1599 = vld [vmem:[%s1592 + $0x24] sm:$0xf]
    %v1600 = vld [vmem:[%s1592 + $0x28] sm:$0xf]
    %v1601 = vld [vmem:[%s1592 + $0x2c] sm:$0xf]
    %v1602 = vld [vmem:[%s1592 + $0x30] sm:$0xf]
    %v1603 = vld [vmem:[%s1592 + $0x38] sm:$0xf]
    %v1604 = vld [vmem:[%s1592 + $0x3c] sm:$0xf]
    %v1605 = vld [vmem:[%s1592 + $0x40] sm:$0xf]
    %v1606 = vld [vmem:[%s1592 + $0x44] sm:$0xf]
    %v1607 = vld [vmem:[%s1592 + $0x48] sm:$0xf]
    %v1608 = vld [vmem:[%s1592 + $0x50] sm:$0xf]
    %v1609 = vld [vmem:[%s1592 + $0x54] sm:$0xf]
    %v1610 = vld [vmem:[%s1592 + $0x58] sm:$0xf]
    %v1611 = vld [vmem:[%s1592 + $0x5c] sm:$0xf]
    %v1612 = vld [vmem:[%s1592 + $0x60] sm:$0xf]
    %v1613 = vld [vmem:[%s1592 + $0x64] sm:$0xf]
    %v1614 = vld [vmem:[%s1592 + $0x68] sm:$0xf]
    %v1615 = vld [vmem:[%s1592 + $0x6c] sm:$0xf]
    %v1616 = vld [vmem:[%s1592 + $0x70] sm:$0xf]
    %v1617 = vld [vmem:[%s1592 + $0x74] sm:$0xf]
    %v1618 = vld [vmem:[%s1592 + $0x78] sm:$0xf]
    %v1619 = vld [vmem:[%s1592 + $0x7c] sm:$0xf]
    %v1620 = vld [vmem:[%s1592 + $0x80] sm:$0xf]
    %v1621 = vld [vmem:[%s1592 + $0x84] sm:$0xf]
    %v1622 = vld [vmem:[%s1592 + $0x88] sm:$0xf]
    %v1623 = vld [vmem:[%s1592 + $0x8c] sm:$0xf]
    %v1624 = vld [vmem:[%s1592 + $0x90] sm:$0xf]
    %v1625 = vld [vmem:[%s1592 + $0x94] sm:$0xf]
    %v1626 = vld [vmem:[%s1592 + $0x98] sm:$0xf]
    %v1627 = vld [vmem:[%s1592 + $0x9c] sm:$0xf]
    %v1628 = vld [vmem:[%s1592 + $0xa0] sm:$0xf]
    %v1629 = vld [vmem:[%s1592 + $0xa8] sm:$0xf]
    %v1630 = vld [vmem:[%s1592 + $0xac] sm:$0xf]
    %v1631 = vld [vmem:[%s1592 + $0xb0] sm:$0xf]
    %v1632 = vld [vmem:[%s1592 + $0xb4] sm:$0xf]
    %v1633 = vld [vmem:[%s1592 + $0xb8] sm:$0xf]
    %s1634 = scalar_lea.vmem %s6, 16
    %v1635 = vld [vmem:[%s1634] sm:$0xff]
    %v1636 = vld [vmem:[%s1634 + $0x8] sm:$0xff]
    %1637 = vmatprep.subr.bf16.mxu0 0
    %1638 = vmatpush1.bf16.msra.mxu0 %v1219
    %1639 = vmatprep.subr.bf16.mxu0 0
    %1640 = vmatpush1.bf16.msra.mxu0 0
    %1641 = vmatprep.subr.bf16.mxu0 0
    %1642 = vmatpush1.bf16.msra.mxu0 0
    %1643 = vmatprep.subr.bf16.mxu0 0
    %1644 = vmatpush1.bf16.msra.mxu0 0
    %1645 = vmatprep.subr.bf16.mxu0 0
    %1646 = vmatpush1.bf16.msra.mxu0 0
    %1647 = vmatprep.subr.bf16.mxu0 0
    %1648 = vmatpush1.bf16.msra.mxu0 0
    %1649 = vmatprep.subr.bf16.mxu0 0
    %1650 = vmatpush1.bf16.msra.mxu0 0
    %1651 = vmatprep.subr.bf16.mxu0 0
    %1652 = vmatpush1.bf16.msra.mxu0 0
    %1653 = vmatprep.subr.bf16.mxu0 0
    %1654 = vmatpush1.bf16.msra.mxu0 0
    %1655 = vmatprep.subr.bf16.mxu0 0
    %1656 = vmatpush1.bf16.msra.mxu0 0
    %1657 = vmatprep.subr.bf16.mxu0 0
    %1658 = vmatpush1.bf16.msra.mxu0 0
    %1659 = vmatprep.subr.bf16.mxu0 0
    %1660 = vmatpush1.bf16.msra.mxu0 0
    %1661 = vmatprep.subr.bf16.mxu0 0
    %1662 = vmatpush1.bf16.msra.mxu0 0
    %1663 = vmatprep.subr.bf16.mxu0 0
    %1664 = vmatpush1.bf16.msra.mxu0 0
    %1665 = vmatprep.subr.bf16.mxu0 0
    %1666 = vmatpush1.bf16.msra.mxu0 0
    %1667 = vmatprep.subr.bf16.mxu0 0
    %1668 = vmatpush1.bf16.msra.mxu0 0
    %1669 = vmatprep.mubr.bf16.mxu0 0
    %1670 = vmatmul.mubr.bf16.gmra.mrb[0].mxu0 %v141
    %v1671 = vpop.f32.mrb[0].mxu0
    %v1672 = vadd.f32 0.0, %v1671
    %v1673 = vpop.f32.mrb[0].mxu0
    %v1674 = vpop.f32.mrb[0].mxu0
    %v1675 = vadd.f32 0.0, %v1674
    %v1676 = vpop.f32.mrb[0].mxu0
    %1677 = vmatprep.mubr.bf16.mxu0 0
    %1678 = vmatmul.mubr.bf16.gmra.mrb[0].mxu0 %v144
    %v1679 = vpop.f32.mrb[0].mxu0
    %v1680 = vadd.f32 0.0, %v1679
    %v1681 = vpop.f32.mrb[0].mxu0
    %v1682 = vpop.f32.mrb[0].mxu0
    %v1683 = vadd.f32 0.0, %v1682
    %v1684 = vpop.f32.mrb[0].mxu0
    %1685 = vmatprep.mubr.bf16.mxu0 0
    %1686 = vmatmul.mubr.bf16.gmra.mrb[0].mxu0 %v147
    %v1687 = vpop.f32.mrb[0].mxu0
    %v1688 = vadd.f32 0.0, %v1687
    %v1689 = vpop.f32.mrb[0].mxu0
    %v1690 = vpop.f32.mrb[0].mxu0
    %v1691 = vadd.f32 0.0, %v1690
    %v1692 = vpop.f32.mrb[0].mxu0
    %1693 = vmatprep.mubr.bf16.mxu0 0
    %1694 = vmatmul.mubr.bf16.gmra.mrb[0].mxu0 %v150
    %v1695 = vpop.f32.mrb[0].mxu0
    %v1696 = vadd.f32 0.0, %v1695
    %v1697 = vpop.f32.mrb[0].mxu0
    %v1698 = vpop.f32.mrb[0].mxu0
    %v1699 = vadd.f32 0.0, %v1698
    %v1700 = vpop.f32.mrb[0].mxu0
    %1701 = vmatprep.mubr.bf16.mxu0 0
    %1702 = vmatmul.mubr.bf16.gmra.mrb[0].mxu0 %v153
    %v1703 = vpop.f32.mrb[0].mxu0
    %v1704 = vadd.f32 0.0, %v1703
    %v1705 = vpop.f32.mrb[0].mxu0
    %v1706 = vpop.f32.mrb[0].mxu0
    %v1707 = vadd.f32 0.0, %v1706
    %v1708 = vpop.f32.mrb[0].mxu0
    %1709 = vmatprep.mubr.bf16.mxu0 0
    %1710 = vmatmul.mubr.bf16.gmra.mrb[0].mxu0 %v156
    %v1711 = vpop.f32.mrb[0].mxu0
    %v1712 = vadd.f32 0.0, %v1711
    %v1713 = vpop.f32.mrb[0].mxu0
    %v1714 = vpop.f32.mrb[0].mxu0
    %v1715 = vadd.f32 0.0, %v1714
    %v1716 = vpop.f32.mrb[0].mxu0
    %1717 = vdwg.mxu0
    %v1718 = vpack.c.bf16 %v1675, %v1672
    %v1719 = vpack.c.bf16 %v1683, %v1680
    %v1720 = vpack.c.bf16 %v1691, %v1688
    %v1721 = vpack.c.bf16 %v1699, %v1696
    %v1722 = vpack.c.bf16 %v1707, %v1704
    %v1723 = vpack.c.bf16 %v1715, %v1712
    %v1729 = vunpack.c.l.b16 %v1587
    %v1730 = vunpack.c.h.b16 %v1587
    %v1731 = vunpack.c.l.b16 %v1588
    %v1732 = vunpack.c.h.b16 %v1588
    %v1733 = vunpack.c.l.b16 %v1589
    %v1734 = vunpack.c.h.b16 %v1589
    %v1735 = vunpack.c.l.b16 %v1590
    %v1736 = vunpack.c.h.b16 %v1590
    %v1737 = vunpack.c.l.b16 %v1591
    %v1738 = vunpack.c.h.b16 %v1591
    %v1739 = vpack.c.b16 %v1731, %v1729
    %v1740 = vpack.c.b16 %v1732, %v1730
    %v1741 = vpack.c.b16 %v1735, %v1733
    %v1742 = vpack.c.b16 %v1736, %v1734
    %v1743 = vpack.c.b16 %v1737, %v1737
    %v1744 = vpack.c.b16 %v1738, %v1738
    %v1750 = vsel %vm270, %v1718, 0
    %v1753 = vsel %vm270, %v1719, 0
    %v1756 = vsel %vm270, %v1720, 0
    %v1759 = vsel %vm270, %v1721, 0
    %v1762 = vsel %vm270, %v1722, 0
    %v1765 = vsel %vm270, %v1723, 0
    %v1768 = vsel %vm289, %v1743, 0
    %v1771 = vsel %vm289, %v1744, 0
    %1773 = vmatprep.subr.bf16.mxu0 %v1740
    %1774 = vmatpush1.bf16.msra.mxu0 %v1739
    %1775 = vmatprep.subr.bf16.mxu0 %v1742
    %1776 = vmatpush1.bf16.msra.mxu0 %v1741
    %1777 = vmatprep.subr.bf16.mxu0 %v1771
    %1778 = vmatpush1.bf16.msra.mxu0 %v1768
    %1779 = vmatprep.subr.bf16.mxu0 0
    %1780 = vmatpush1.bf16.msra.mxu0 0
    %1781 = vmatprep.subr.bf16.mxu0 0
    %1782 = vmatpush1.bf16.msra.mxu0 0
    %1783 = vmatprep.subr.bf16.mxu0 0
    %1784 = vmatpush1.bf16.msra.mxu0 0
    %1785 = vmatprep.subr.bf16.mxu0 0
    %1786 = vmatpush1.bf16.msra.mxu0 0
    %1787 = vmatprep.subr.bf16.mxu0 0
    %1788 = vmatpush1.bf16.msra.mxu0 0
    %1789 = vmatprep.subr.bf16.mxu0 0
    %1790 = vmatpush1.bf16.msra.mxu0 0
    %1791 = vmatprep.subr.bf16.mxu0 0
    %1792 = vmatpush1.bf16.msra.mxu0 0
    %1793 = vmatprep.subr.bf16.mxu0 0
    %1794 = vmatpush1.bf16.msra.mxu0 0
    %1795 = vmatprep.subr.bf16.mxu0 0
    %1796 = vmatpush1.bf16.msra.mxu0 0
    %1797 = vmatprep.subr.bf16.mxu0 0
    %1798 = vmatpush1.bf16.msra.mxu0 0
    %1799 = vmatprep.subr.bf16.mxu0 0
    %1800 = vmatpush1.bf16.msra.mxu0 0
    %1801 = vmatprep.subr.bf16.mxu0 0
    %1802 = vmatpush1.bf16.msra.mxu0 0
    %1803 = vmatprep.subr.bf16.mxu0 0
    %1804 = vmatpush1.bf16.msra.mxu0 0
    %1805 = vmatprep.mubr.bf16.mxu0 0
    %1806 = vmatmul.mubr.bf16.gmra.mrb[0].mxu0 %v1750
    %v1807 = vpop.f32.mrb[0].mxu0
    %v1808 = vadd.f32 0.0, %v1807
    %v1809 = vpop.f32.mrb[0].mxu0
    %v1810 = vpop.f32.mrb[0].mxu0
    %v1811 = vadd.f32 0.0, %v1810
    %v1812 = vpop.f32.mrb[0].mxu0
    %1813 = vmatprep.mubr.bf16.mxu0 0
    %1814 = vmatmul.mubr.bf16.gmra.mrb[0].mxu0 %v1753
    %v1815 = vpop.f32.mrb[0].mxu0
    %v1816 = vadd.f32 0.0, %v1815
    %v1817 = vpop.f32.mrb[0].mxu0
    %v1818 = vpop.f32.mrb[0].mxu0
    %v1819 = vadd.f32 0.0, %v1818
    %v1820 = vpop.f32.mrb[0].mxu0
    %1821 = vmatprep.mubr.bf16.mxu0 0
    %1822 = vmatmul.mubr.bf16.gmra.mrb[0].mxu0 %v1756
    %v1823 = vpop.f32.mrb[0].mxu0
    %v1824 = vadd.f32 0.0, %v1823
    %v1825 = vpop.f32.mrb[0].mxu0
    %v1826 = vpop.f32.mrb[0].mxu0
    %v1827 = vadd.f32 0.0, %v1826
    %v1828 = vpop.f32.mrb[0].mxu0
    %1829 = vmatprep.mubr.bf16.mxu0 0
    %1830 = vmatmul.mubr.bf16.gmra.mrb[0].mxu0 %v1759
    %v1831 = vpop.f32.mrb[0].mxu0
    %v1832 = vadd.f32 0.0, %v1831
    %v1833 = vpop.f32.mrb[0].mxu0
    %v1834 = vadd.f32 0.0, %v1833
    %v1835 = vpop.f32.mrb[0].mxu0
    %v1836 = vadd.f32 0.0, %v1835
    %v1837 = vpop.f32.mrb[0].mxu0
    %v1838 = vadd.f32 0.0, %v1837
    %1839 = vmatprep.mubr.bf16.mxu0 0
    %1840 = vmatmul.mubr.bf16.gmra.mrb[0].mxu0 %v1762
    %v1841 = vpop.f32.mrb[0].mxu0
    %v1842 = vadd.f32 0.0, %v1841
    %v1843 = vpop.f32.mrb[0].mxu0
    %v1844 = vadd.f32 0.0, %v1843
    %v1845 = vpop.f32.mrb[0].mxu0
    %v1846 = vadd.f32 0.0, %v1845
    %v1847 = vpop.f32.mrb[0].mxu0
    %v1848 = vadd.f32 0.0, %v1847
    %1849 = vmatprep.mubr.bf16.mxu0 0
    %1850 = vmatmul.mubr.bf16.gmra.mrb[0].mxu0 %v1765
    %v1851 = vpop.f32.mrb[0].mxu0
    %v1852 = vadd.f32 0.0, %v1851
    %v1853 = vpop.f32.mrb[0].mxu0
    %v1854 = vadd.f32 0.0, %v1853
    %v1855 = vpop.f32.mrb[0].mxu0
    %v1856 = vadd.f32 0.0, %v1855
    %v1857 = vpop.f32.mrb[0].mxu0
    %v1858 = vadd.f32 0.0, %v1857
    %1859 = vdwg.mxu0
    %v1860 = vlaneseq
    %v1861 = vshrl.u32 %v1860, 7
    %v1862 = vsub.s32 1, %v1861
    %v1863 = vrot.slane %v1635, %v1862
    %1865 = vrot.lane.b32.xlu0 %v1863, 64
    %v1866 = vpop.permute.xlu0 %1865
    %v1868 = vadd.f32 %v1808, %v1866
    %v1869 = vadd.f32 %v1811, %v1866
    %v1870 = vadd.f32 %v1816, %v1866
    %v1871 = vadd.f32 %v1819, %v1866
    %v1872 = vadd.f32 %v1824, %v1866
    %v1873 = vadd.f32 %v1827, %v1866
    %v1874 = vlaneseq
    %v1875 = vshrl.u32 %v1874, 7
    %v1876 = vsub.s32 2, %v1875
    %v1877 = vrot.slane %v1635, %v1876
    %1879 = vrot.lane.b32.xlu0 %v1877, 104
    %v1880 = vpop.permute.xlu0 %1879
    %v1882 = vadd.f32 %v1832, %v1880
    %v1883 = vadd.f32 %v1834, %v1880
    %v1884 = vadd.f32 %v1836, %v1880
    %v1885 = vadd.f32 %v1838, %v1880
    %v1886 = vadd.f32 %v1842, %v1880
    %v1887 = vadd.f32 %v1844, %v1880
    %v1888 = vadd.f32 %v1846, %v1880
    %v1889 = vadd.f32 %v1848, %v1880
    %v1890 = vadd.f32 %v1852, %v1880
    %v1891 = vadd.f32 %v1854, %v1880
    %v1892 = vadd.f32 %v1856, %v1880
    %v1893 = vadd.f32 %v1858, %v1880
    %1900 = vrot.lane.b32.xlu0 %v1868, 40
    %v1901 = vpop.permute.xlu0 %1900
    %1902 = vrot.lane.b32.xlu0 %v1869, 40
    %v1903 = vpop.permute.xlu0 %1902
    %1904 = vrot.lane.b32.xlu0 %v1870, 40
    %v1905 = vpop.permute.xlu0 %1904
    %1906 = vrot.lane.b32.xlu0 %v1871, 40
    %v1907 = vpop.permute.xlu0 %1906
    %1908 = vrot.lane.b32.xlu0 %v1872, 40
    %v1909 = vpop.permute.xlu0 %1908
    %1910 = vrot.lane.b32.xlu0 %v1873, 40
    %v1911 = vpop.permute.xlu0 %1910
    %v1918 = vadd.f32 %v1882, %v1901
    %v1919 = vadd.f32 %v1883, %v1901
    %v1920 = vadd.f32 %v1884, %v1903
    %v1921 = vadd.f32 %v1885, %v1903
    %v1922 = vadd.f32 %v1886, %v1905
    %v1923 = vadd.f32 %v1887, %v1905
    %v1924 = vadd.f32 %v1888, %v1907
    %v1925 = vadd.f32 %v1889, %v1907
    %v1926 = vadd.f32 %v1890, %v1909
    %v1927 = vadd.f32 %v1891, %v1909
    %v1928 = vadd.f32 %v1892, %v1911
    %v1929 = vadd.f32 %v1893, %v1911
    %vm1930 = vcmp.gt.f32.partialorder %v1918, 0.0
    %vm1931 = vcmp.gt.f32.partialorder %v1919, 0.0
    %vm1932 = vcmp.gt.f32.partialorder %v1920, 0.0
    %vm1933 = vcmp.gt.f32.partialorder %v1921, 0.0
    %vm1934 = vcmp.gt.f32.partialorder %v1922, 0.0
    %vm1935 = vcmp.gt.f32.partialorder %v1923, 0.0
    %vm1936 = vcmp.gt.f32.partialorder %v1924, 0.0
    %vm1937 = vcmp.gt.f32.partialorder %v1925, 0.0
    %vm1938 = vcmp.gt.f32.partialorder %v1926, 0.0
    %vm1939 = vcmp.gt.f32.partialorder %v1927, 0.0
    %vm1940 = vcmp.gt.f32.partialorder %v1928, 0.0
    %vm1941 = vcmp.gt.f32.partialorder %v1929, 0.0
    %v1942 = vmul.f32 %v1918, 0.2
    %v1943 = vmul.f32 %v1919, 0.2
    %v1944 = vmul.f32 %v1920, 0.2
    %v1945 = vmul.f32 %v1921, 0.2
    %v1946 = vmul.f32 %v1922, 0.2
    %v1947 = vmul.f32 %v1923, 0.2
    %v1948 = vmul.f32 %v1924, 0.2
    %v1949 = vmul.f32 %v1925, 0.2
    %v1950 = vmul.f32 %v1926, 0.2
    %v1951 = vmul.f32 %v1927, 0.2
    %v1952 = vmul.f32 %v1928, 0.2
    %v1953 = vmul.f32 %v1929, 0.2
    %v1954 = vsel %vm1930, %v1918, %v1942
    %v1955 = vsel %vm1931, %v1919, %v1943
    %v1956 = vsel %vm1932, %v1920, %v1944
    %v1957 = vsel %vm1933, %v1921, %v1945
    %v1958 = vsel %vm1934, %v1922, %v1946
    %v1959 = vsel %vm1935, %v1923, %v1947
    %v1960 = vsel %vm1936, %v1924, %v1948
    %v1961 = vsel %vm1937, %v1925, %v1949
    %v1962 = vsel %vm1938, %v1926, %v1950
    %v1963 = vsel %vm1939, %v1927, %v1951
    %v1964 = vsel %vm1940, %v1928, %v1952
    %v1965 = vsel %vm1941, %v1929, %v1953
    %v1966 = vpack.c.bf16 %v1956, %v1954
    %v1967 = vpack.c.bf16 %v1957, %v1955
    %v1968 = vpack.c.bf16 %v1960, %v1958
    %v1969 = vpack.c.bf16 %v1961, %v1959
    %v1970 = vpack.c.bf16 %v1964, %v1962
    %v1971 = vpack.c.bf16 %v1965, %v1963
    %1978 = vrot.lane.b32.xlu0 %v1966, 24
    %v1979 = vpop.permute.xlu0 %1978
    %1980 = vrot.lane.b32.xlu0 %v1967, 24
    %v1981 = vpop.permute.xlu0 %1980
    %1982 = vrot.lane.b32.xlu0 %v1968, 24
    %v1983 = vpop.permute.xlu0 %1982
    %1984 = vrot.lane.b32.xlu0 %v1969, 24
    %v1985 = vpop.permute.xlu0 %1984
    %1986 = vrot.lane.b32.xlu0 %v1970, 24
    %v1987 = vpop.permute.xlu0 %1986
    %1988 = vrot.lane.b32.xlu0 %v1971, 24
    %v1989 = vpop.permute.xlu0 %1988
    %v1990 = vsel %vm513, %v1979, %v1981
    %v1991 = vsel %vm513, %v1983, %v1985
    %v1992 = vsel %vm513, %v1987, %v1989
    %v1998 = vunpack.c.l.b16 %v1593
    %v1999 = vunpack.c.l.b16 %v1594
    %v2000 = vunpack.c.l.b16 %v1595
    %v2001 = vunpack.c.l.b16 %v1596
    %v2002 = vunpack.c.l.b16 %v1597
    %v2003 = vpack.c.b16 %v1999, %v1998
    %v2004 = vpack.c.b16 %v2001, %v2000
    %v2005 = vpack.c.b16 %v2002, %v2002
    %v2009 = vsel %vm270, %v1990, 0
    %v2012 = vsel %vm270, %v1991, 0
    %v2015 = vsel %vm270, %v1992, 0
    %v2018 = vsel %vm289, %v2005, 0
    %2020 = vmatprep.subr.bf16.mxu0 0
    %2021 = vmatpush1.bf16.msra.mxu0 %v2003
    %2022 = vmatprep.subr.bf16.mxu0 0
    %2023 = vmatpush1.bf16.msra.mxu0 %v2004
    %2024 = vmatprep.subr.bf16.mxu0 0
    %2025 = vmatpush1.bf16.msra.mxu0 %v2018
    %2026 = vmatprep.subr.bf16.mxu0 0
    %2027 = vmatpush1.bf16.msra.mxu0 0
    %2028 = vmatprep.subr.bf16.mxu0 0
    %2029 = vmatpush1.bf16.msra.mxu0 0
    %2030 = vmatprep.subr.bf16.mxu0 0
    %2031 = vmatpush1.bf16.msra.mxu0 0
    %2032 = vmatprep.subr.bf16.mxu0 0
    %2033 = vmatpush1.bf16.msra.mxu0 0
    %2034 = vmatprep.subr.bf16.mxu0 0
    %2035 = vmatpush1.bf16.msra.mxu0 0
    %2036 = vmatprep.subr.bf16.mxu0 0
    %2037 = vmatpush1.bf16.msra.mxu0 0
    %2038 = vmatprep.subr.bf16.mxu0 0
    %2039 = vmatpush1.bf16.msra.mxu0 0
    %2040 = vmatprep.subr.bf16.mxu0 0
    %2041 = vmatpush1.bf16.msra.mxu0 0
    %2042 = vmatprep.subr.bf16.mxu0 0
    %2043 = vmatpush1.bf16.msra.mxu0 0
    %2044 = vmatprep.subr.bf16.mxu0 0
    %2045 = vmatpush1.bf16.msra.mxu0 0
    %2046 = vmatprep.subr.bf16.mxu0 0
    %2047 = vmatpush1.bf16.msra.mxu0 0
    %2048 = vmatprep.subr.bf16.mxu0 0
    %2049 = vmatpush1.bf16.msra.mxu0 0
    %2050 = vmatprep.subr.bf16.mxu0 0
    %2051 = vmatpush1.bf16.msra.mxu0 0
    %2052 = vmatprep.mubr.bf16.mxu0 0
    %2053 = vmatmul.mubr.bf16.gmra.mrb[0].mxu0 %v2009
    %v2054 = vpop.f32.mrb[0].mxu0
    %v2055 = vadd.f32 0.0, %v2054
    %v2056 = vpop.f32.mrb[0].mxu0
    %v2057 = vpop.f32.mrb[0].mxu0
    %v2058 = vadd.f32 0.0, %v2057
    %v2059 = vpop.f32.mrb[0].mxu0
    %2060 = vmatprep.mubr.bf16.mxu0 0
    %2061 = vmatmul.mubr.bf16.gmra.mrb[0].mxu0 %v2012
    %v2062 = vpop.f32.mrb[0].mxu0
    %v2063 = vadd.f32 0.0, %v2062
    %v2064 = vpop.f32.mrb[0].mxu0
    %v2065 = vpop.f32.mrb[0].mxu0
    %v2066 = vadd.f32 0.0, %v2065
    %v2067 = vpop.f32.mrb[0].mxu0
    %2068 = vmatprep.mubr.bf16.mxu0 0
    %2069 = vmatmul.mubr.bf16.gmra.mrb[0].mxu0 %v2015
    %v2070 = vpop.f32.mrb[0].mxu0
    %v2071 = vadd.f32 0.0, %v2070
    %v2072 = vpop.f32.mrb[0].mxu0
    %v2073 = vpop.f32.mrb[0].mxu0
    %v2074 = vadd.f32 0.0, %v2073
    %v2075 = vpop.f32.mrb[0].mxu0
    %2076 = vdwg.mxu0
    %v2077 = vsel %vm601, %v2055, -inf
    %v2078 = vsel %vm601, %v2058, -inf
    %v2079 = vsel %vm601, %v2063, -inf
    %v2080 = vsel %vm601, %v2066, -inf
    %v2081 = vsel %vm601, %v2071, -inf
    %v2082 = vmax.f32 %v2077, %v2081
    %v2083 = vsel %vm601, %v2074, -inf
    %v2084 = vmax.f32 %v2078, %v2083
    %v2085 = vmax.f32 %v2082, %v2084
    %v2086 = vmax.f32 %v2079, %v2080
    %v2087 = vmax.f32 %v2085, %v2086
    %v2088 = vrot.slane %v2087, 4
    %v2089 = vmax.f32 %v2087, %v2088
    %v2090 = vrot.slane %v2089, 2
    %v2091 = vmax.f32 %v2089, %v2090
    %v2092 = vrot.slane %v2091, 1
    %v2093 = vmax.f32 %v2091, %v2092
    %v2094 = vsub.f32 %v2055, %v2093
    %v2095 = vsub.f32 %v2058, %v2093
    %v2096 = vsub.f32 %v2063, %v2093
    %v2097 = vsub.f32 %v2066, %v2093
    %v2098 = vsub.f32 %v2071, %v2093
    %v2099 = vsub.f32 %v2074, %v2093
    %v2100 = vmul.f32 %v2094, 1.442695
    %v2101 = vpow.pop %v2100
    %v2102 = vmul.f32 %v2095, 1.442695
    %v2103 = vpow.pop %v2102
    %v2104 = vmul.f32 %v2096, 1.442695
    %v2105 = vpow.pop %v2104
    %v2106 = vmul.f32 %v2097, 1.442695
    %v2107 = vpow.pop %v2106
    %v2108 = vmul.f32 %v2098, 1.442695
    %v2109 = vpow.pop %v2108
    %v2110 = vmul.f32 %v2099, 1.442695
    %v2111 = vpow.pop %v2110
    %v2112 = vpack.c.bf16 %v2103, %v2101
    %v2113 = vpack.c.bf16 %v2107, %v2105
    %v2114 = vpack.c.bf16 %v2111, %v2109
    %2115 = vmatprep.subr.bf16.mxu0 0
    %2116 = vmatpush1.bf16.msra.mxu0 %v2112
    %2117 = vmatprep.subr.bf16.mxu0 0
    %2118 = vmatpush1.bf16.msra.mxu0 %v2113
    %2119 = vmatprep.subr.bf16.mxu0 0
    %2120 = vmatpush1.bf16.msra.mxu0 %v2114
    %2121 = vmatprep.subr.bf16.mxu0 0
    %2122 = vmatpush1.bf16.msra.mxu0 0
    %2123 = vmatprep.subr.bf16.mxu0 0
    %2124 = vmatpush1.bf16.msra.mxu0 0
    %2125 = vmatprep.subr.bf16.mxu0 0
    %2126 = vmatpush1.bf16.msra.mxu0 0
    %2127 = vmatprep.subr.bf16.mxu0 0
    %2128 = vmatpush1.bf16.msra.mxu0 0
    %2129 = vmatprep.subr.bf16.mxu0 0
    %2130 = vmatpush1.bf16.msra.mxu0 0
    %2131 = vmatprep.subr.bf16.mxu0 0
    %2132 = vmatpush1.bf16.msra.mxu0 0
    %2133 = vmatprep.subr.bf16.mxu0 0
    %2134 = vmatpush1.bf16.msra.mxu0 0
    %2135 = vmatprep.subr.bf16.mxu0 0
    %2136 = vmatpush1.bf16.msra.mxu0 0
    %2137 = vmatprep.subr.bf16.mxu0 0
    %2138 = vmatpush1.bf16.msra.mxu0 0
    %2139 = vmatprep.subr.bf16.mxu0 0
    %2140 = vmatpush1.bf16.msra.mxu0 0
    %2141 = vmatprep.subr.bf16.mxu0 0
    %2142 = vmatpush1.bf16.msra.mxu0 0
    %2143 = vmatprep.subr.bf16.mxu0 0
    %2144 = vmatpush1.bf16.msra.mxu0 0
    %2145 = vmatprep.subr.bf16.mxu0 0
    %2146 = vmatpush1.bf16.msra.mxu0 0
    %2147 = vmatprep.mubr.bf16.mxu0 0
    %2148 = vmatmul.mubr.bf16.gmra.mrb[0].mxu0 %v647
    %v2149 = vpop.f32.mrb[0].mxu0
    %v2150 = vadd.f32 1e-16, %v2149
    %v2151 = vpop.f32.mrb[0].mxu0
    %v2152 = vpop.f32.mrb[0].mxu0
    %v2153 = vadd.f32 1e-16, %v2152
    %v2154 = vpop.f32.mrb[0].mxu0
    %2155 = vdwg.mxu0
    %v2156 = vpack.c.bf16 %v2153, %v2150
    %2157 = vmatprep.subr.bf16.mxu0 0
    %2158 = vmatpush1.bf16.msra.mxu0 %v2156
    %2159 = vmatprep.subr.bf16.mxu0 0
    %2160 = vmatpush1.bf16.msra.mxu0 0
    %2161 = vmatprep.subr.bf16.mxu0 0
    %2162 = vmatpush1.bf16.msra.mxu0 0
    %2163 = vmatprep.subr.bf16.mxu0 0
    %2164 = vmatpush1.bf16.msra.mxu0 0
    %2165 = vmatprep.subr.bf16.mxu0 0
    %2166 = vmatpush1.bf16.msra.mxu0 0
    %2167 = vmatprep.subr.bf16.mxu0 0
    %2168 = vmatpush1.bf16.msra.mxu0 0
    %2169 = vmatprep.subr.bf16.mxu0 0
    %2170 = vmatpush1.bf16.msra.mxu0 0
    %2171 = vmatprep.subr.bf16.mxu0 0
    %2172 = vmatpush1.bf16.msra.mxu0 0
    %2173 = vmatprep.subr.bf16.mxu0 0
    %2174 = vmatpush1.bf16.msra.mxu0 0
    %2175 = vmatprep.subr.bf16.mxu0 0
    %2176 = vmatpush1.bf16.msra.mxu0 0
    %2177 = vmatprep.subr.bf16.mxu0 0
    %2178 = vmatpush1.bf16.msra.mxu0 0
    %2179 = vmatprep.subr.bf16.mxu0 0
    %2180 = vmatpush1.bf16.msra.mxu0 0
    %2181 = vmatprep.subr.bf16.mxu0 0
    %2182 = vmatpush1.bf16.msra.mxu0 0
    %2183 = vmatprep.subr.bf16.mxu0 0
    %2184 = vmatpush1.bf16.msra.mxu0 0
    %2185 = vmatprep.subr.bf16.mxu0 0
    %2186 = vmatpush1.bf16.msra.mxu0 0
    %2187 = vmatprep.subr.bf16.mxu0 0
    %2188 = vmatpush1.bf16.msra.mxu0 0
    %2189 = vmatprep.mubr.bf16.mxu0 0
    %2190 = vmatmul.mubr.bf16.gmra.mrb[0].mxu0 %v707
    %v2191 = vpop.f32.mrb[0].mxu0
    %v2192 = vadd.f32 0.0, %v2191
    %v2193 = vpop.f32.mrb[0].mxu0
    %v2194 = vpop.f32.mrb[0].mxu0
    %v2195 = vadd.f32 0.0, %v2194
    %v2196 = vpop.f32.mrb[0].mxu0
    %2197 = vmatprep.mubr.bf16.mxu0 0
    %2198 = vmatmul.mubr.bf16.gmra.mrb[0].mxu0 %v710
    %v2199 = vpop.f32.mrb[0].mxu0
    %v2200 = vadd.f32 0.0, %v2199
    %v2201 = vpop.f32.mrb[0].mxu0
    %v2202 = vpop.f32.mrb[0].mxu0
    %v2203 = vadd.f32 0.0, %v2202
    %v2204 = vpop.f32.mrb[0].mxu0
    %2205 = vmatprep.mubr.bf16.mxu0 0
    %2206 = vmatmul.mubr.bf16.gmra.mrb[0].mxu0 %v713
    %v2207 = vpop.f32.mrb[0].mxu0
    %v2208 = vadd.f32 0.0, %v2207
    %v2209 = vpop.f32.mrb[0].mxu0
    %v2210 = vpop.f32.mrb[0].mxu0
    %v2211 = vadd.f32 0.0, %v2210
    %v2212 = vpop.f32.mrb[0].mxu0
    %2213 = vdwg.mxu0
    %v2214 = vrcp.pop %v2192
    %v2215 = vrcp.pop %v2195
    %v2216 = vrcp.pop %v2200
    %v2217 = vrcp.pop %v2203
    %v2218 = vrcp.pop %v2208
    %v2219 = vrcp.pop %v2211
    %v2220 = vmul.f32 %v2101, %v2214
    %v2221 = vmul.f32 %v2103, %v2215
    %v2222 = vmul.f32 %v2105, %v2216
    %v2223 = vmul.f32 %v2107, %v2217
    %v2224 = vmul.f32 %v2109, %v2218
    %v2225 = vmul.f32 %v2111, %v2219
    %v2226 = vpack.c.bf16 %v2221, %v2220
    %v2227 = vpack.c.bf16 %v2223, %v2222
    %v2228 = vpack.c.bf16 %v2225, %v2224
    %v2230 = vsel %vm601, %v2226, 0
    %v2233 = vsel %vm601, %v2227, 0
    %v2236 = vsel %vm601, %v2228, 0
    %2238 = vmatprep.subr.bf16.mxu0 0
    %2239 = vmatpush1.bf16.msra.mxu0 %v801
    %2240 = vmatprep.subr.bf16.mxu0 0
    %2241 = vmatpush1.bf16.msra.mxu0 0
    %2242 = vmatprep.subr.bf16.mxu0 0
    %2243 = vmatpush1.bf16.msra.mxu0 0
    %2244 = vmatprep.subr.bf16.mxu0 0
    %2245 = vmatpush1.bf16.msra.mxu0 0
    %2246 = vmatprep.subr.bf16.mxu0 0
    %2247 = vmatpush1.bf16.msra.mxu0 0
    %2248 = vmatprep.subr.bf16.mxu0 0
    %2249 = vmatpush1.bf16.msra.mxu0 0
    %2250 = vmatprep.subr.bf16.mxu0 0
    %2251 = vmatpush1.bf16.msra.mxu0 0
    %2252 = vmatprep.subr.bf16.mxu0 0
    %2253 = vmatpush1.bf16.msra.mxu0 0
    %2254 = vmatprep.subr.bf16.mxu0 0
    %2255 = vmatpush1.bf16.msra.mxu0 0
    %2256 = vmatprep.subr.bf16.mxu0 0
    %2257 = vmatpush1.bf16.msra.mxu0 0
    %2258 = vmatprep.subr.bf16.mxu0 0
    %2259 = vmatpush1.bf16.msra.mxu0 0
    %2260 = vmatprep.subr.bf16.mxu0 0
    %2261 = vmatpush1.bf16.msra.mxu0 0
    %2262 = vmatprep.subr.bf16.mxu0 0
    %2263 = vmatpush1.bf16.msra.mxu0 0
    %2264 = vmatprep.subr.bf16.mxu0 0
    %2265 = vmatpush1.bf16.msra.mxu0 0
    %2266 = vmatprep.subr.bf16.mxu0 0
    %2267 = vmatpush1.bf16.msra.mxu0 0
    %2268 = vmatprep.subr.bf16.mxu0 0
    %2269 = vmatpush1.bf16.msra.mxu0 0
    %2270 = vmatprep.mubr.bf16.mxu0 0
    %2271 = vmatmul.mubr.bf16.gmra.mrb[0].mxu0 %v2230
    %v2272 = vpop.f32.mrb[0].mxu0
    %v2273 = vadd.f32 0.0, %v2272
    %v2274 = vpop.f32.mrb[0].mxu0
    %v2275 = vpop.f32.mrb[0].mxu0
    %v2276 = vadd.f32 0.0, %v2275
    %v2277 = vpop.f32.mrb[0].mxu0
    %2278 = vmatprep.mubr.bf16.mxu0 0
    %2279 = vmatmul.mubr.bf16.gmra.mrb[0].mxu0 %v2233
    %v2280 = vpop.f32.mrb[0].mxu0
    %v2281 = vadd.f32 0.0, %v2280
    %v2282 = vpop.f32.mrb[0].mxu0
    %v2283 = vpop.f32.mrb[0].mxu0
    %v2284 = vadd.f32 0.0, %v2283
    %v2285 = vpop.f32.mrb[0].mxu0
    %2286 = vmatprep.mubr.bf16.mxu0 0
    %2287 = vmatmul.mubr.bf16.gmra.mrb[0].mxu0 %v2236
    %v2288 = vpop.f32.mrb[0].mxu0
    %v2289 = vadd.f32 0.0, %v2288
    %v2290 = vpop.f32.mrb[0].mxu0
    %v2291 = vpop.f32.mrb[0].mxu0
    %v2292 = vadd.f32 0.0, %v2291
    %v2293 = vpop.f32.mrb[0].mxu0
    %2294 = vdwg.mxu0
    %2301 = vrot.lane.b32.xlu0 %v2273, 64
    %v2302 = vpop.permute.xlu0 %2301
    %2303 = vrot.lane.b32.xlu0 %v2276, 64
    %v2304 = vpop.permute.xlu0 %2303
    %2305 = vrot.lane.b32.xlu0 %v2281, 64
    %v2306 = vpop.permute.xlu0 %2305
    %2307 = vrot.lane.b32.xlu0 %v2284, 64
    %v2308 = vpop.permute.xlu0 %2307
    %2309 = vrot.lane.b32.xlu0 %v2289, 64
    %v2310 = vpop.permute.xlu0 %2309
    %2311 = vrot.lane.b32.xlu0 %v2292, 64
    %v2312 = vpop.permute.xlu0 %2311
    %v2319 = vmul.f32 %v1868, %v2302
    %v2320 = vmul.f32 %v1869, %v2304
    %v2321 = vmul.f32 %v1870, %v2306
    %v2322 = vmul.f32 %v1871, %v2308
    %v2323 = vmul.f32 %v1872, %v2310
    %v2324 = vmul.f32 %v1873, %v2312
    %v2325 = vpack.c.bf16 %v2320, %v2319
    %v2326 = vpack.c.bf16 %v2322, %v2321
    %v2327 = vpack.c.bf16 %v2324, %v2323
    %v2328 = vlaneseq
    %v2329 = vshrl.u32 %v2328, 7
    %v2330 = vsub.s32 3, %v2329
    %v2331 = vrot.slane %v1635, %v2330
    %2335 = vrot.lane.b32.xlu0 %v2325, 64
    %v2336 = vpop.permute.xlu0 %2335
    %2337 = vrot.lane.b32.xlu0 %v2326, 64
    %v2338 = vpop.permute.xlu0 %2337
    %2339 = vrot.lane.b32.xlu0 %v2327, 64
    %v2340 = vpop.permute.xlu0 %2339
    %2344 = vmatprep.subr.bf16.mxu0 0
    %2345 = vmatpush1.bf16.msra.mxu0 %v2336
    %2346 = vmatprep.subr.bf16.mxu0 0
    %2347 = vmatpush1.bf16.msra.mxu0 %v2338
    %2348 = vmatprep.subr.bf16.mxu0 0
    %2349 = vmatpush1.bf16.msra.mxu0 %v2340
    %2350 = vmatprep.subr.bf16.mxu0 0
    %2351 = vmatpush1.bf16.msra.mxu0 0
    %2352 = vmatprep.subr.bf16.mxu0 0
    %2353 = vmatpush1.bf16.msra.mxu0 0
    %2354 = vmatprep.subr.bf16.mxu0 0
    %2355 = vmatpush1.bf16.msra.mxu0 0
    %2356 = vmatprep.subr.bf16.mxu0 0
    %2357 = vmatpush1.bf16.msra.mxu0 0
    %2358 = vmatprep.subr.bf16.mxu0 0
    %2359 = vmatpush1.bf16.msra.mxu0 0
    %2360 = vmatprep.subr.bf16.mxu0 0
    %2361 = vmatpush1.bf16.msra.mxu0 0
    %2362 = vmatprep.subr.bf16.mxu0 0
    %2363 = vmatpush1.bf16.msra.mxu0 0
    %2364 = vmatprep.subr.bf16.mxu0 0
    %2365 = vmatpush1.bf16.msra.mxu0 0
    %2366 = vmatprep.subr.bf16.mxu0 0
    %2367 = vmatpush1.bf16.msra.mxu0 0
    %2368 = vmatprep.subr.bf16.mxu0 0
    %2369 = vmatpush1.bf16.msra.mxu0 0
    %2370 = vmatprep.subr.bf16.mxu0 0
    %2371 = vmatpush1.bf16.msra.mxu0 0
    %2372 = vmatprep.subr.bf16.mxu0 0
    %2373 = vmatpush1.bf16.msra.mxu0 0
    %2374 = vmatprep.subr.bf16.mxu0 0
    %2375 = vmatpush1.bf16.msra.mxu0 0
    %2376 = vmatprep.mubr.bf16.mxu0 0
    %2377 = vmatmul.mubr.bf16.gmra.mrb[0].mxu0 %v647
    %v2378 = vpop.f32.mrb[0].mxu0
    %v2379 = vadd.f32 %v2331, %v2378
    %v2380 = vpop.f32.mrb[0].mxu0
    %v2381 = vpop.f32.mrb[0].mxu0
    %v2382 = vadd.f32 %v2331, %v2381
    %v2383 = vpop.f32.mrb[0].mxu0
    %2384 = vdwg.mxu0
    %v2385 = vadd.f32 %v1217, %v2379
    %v2386 = vadd.f32 %v1218, %v2382
    %v2387 = vsel %vm270, %v2385, 0.0
    %2388 = vadd.xlane.f32.xlu0 %v2387
    %v2389 = vpop.xlane.xlu0 %2388
    %v2390 = vsel %vm270, %v2386, 0.0
    %2391 = vadd.xlane.f32.xlu0 %v2390
    %v2392 = vpop.xlane.xlu0 %2391
    %v2393 = vmul.f32 %v2389, %v958
    %v2394 = vmul.f32 %v2392, %v958
    %v2395 = vsub.f32 %v2385, %v2393
    %v2396 = vsub.f32 %v2386, %v2394
    %v2397 = vmul.f32 %v2395, %v2395
    %v2398 = vmul.f32 %v2396, %v2396
    %v2399 = vsel %vm270, %v2397, 0.0
    %2400 = vadd.xlane.f32.xlu0 %v2399
    %v2401 = vpop.xlane.xlu0 %2400
    %v2402 = vsel %vm270, %v2398, 0.0
    %2403 = vadd.xlane.f32.xlu0 %v2402
    %v2404 = vpop.xlane.xlu0 %2403
    %v2405 = vmul.f32 %v2401, %v958
    %v2406 = vmul.f32 %v2404, %v958
    %v2407 = vadd.f32 %v2405, 1e-05
    %v2408 = vadd.f32 %v2406, 1e-05
    %v2409 = vrsqrt.pop %v2407
    %v2410 = vrsqrt.pop %v2408
    %v2411 = vmul.f32 %v2395, %v2409
    %v2412 = vmul.f32 %v2396, %v2410
    %v2413 = vlaneseq
    %v2414 = vshrl.u32 %v2413, 7
    %v2415 = vsub.s32 4, %v2414
    %v2416 = vrot.slane %v1635, %v2415
    %v2417 = vmul.f32 %v2411, %v2416
    %v2418 = vmul.f32 %v2412, %v2416
    %v2419 = vlaneseq
    %v2420 = vshrl.u32 %v2419, 7
    %v2421 = vsub.s32 5, %v2420
    %v2422 = vrot.slane %v1635, %v2421
    %v2423 = vadd.f32 %v2417, %v2422
    %v2424 = vadd.f32 %v2418, %v2422
    %v2425 = vpack.c.bf16 %v2424, %v2423
    %v2426 = vlaneseq
    %v2427 = vshrl.u32 %v2426, 7
    %v2428 = vsub.s32 6, %v2427
    %v2429 = vrot.slane %v1635, %v2428
    %v2435 = vunpack.c.l.b16 %v1598
    %v2436 = vunpack.c.l.b16 %v1599
    %v2437 = vunpack.c.l.b16 %v1600
    %v2438 = vunpack.c.l.b16 %v1601
    %v2439 = vunpack.c.l.b16 %v1602
    %v2440 = vpack.c.b16 %v2436, %v2435
    %v2441 = vpack.c.b16 %v2438, %v2437
    %v2442 = vpack.c.b16 %v2439, %v2439
    %v2446 = vsel %vm270, %v2425, 0
    %v2449 = vsel %vm289, %v2442, 0
    %2451 = vmatprep.subr.bf16.mxu0 0
    %2452 = vmatpush1.bf16.msra.mxu0 %v2440
    %2453 = vmatprep.subr.bf16.mxu0 0
    %2454 = vmatpush1.bf16.msra.mxu0 %v2441
    %2455 = vmatprep.subr.bf16.mxu0 0
    %2456 = vmatpush1.bf16.msra.mxu0 %v2449
    %2457 = vmatprep.subr.bf16.mxu0 0
    %2458 = vmatpush1.bf16.msra.mxu0 0
    %2459 = vmatprep.subr.bf16.mxu0 0
    %2460 = vmatpush1.bf16.msra.mxu0 0
    %2461 = vmatprep.subr.bf16.mxu0 0
    %2462 = vmatpush1.bf16.msra.mxu0 0
    %2463 = vmatprep.subr.bf16.mxu0 0
    %2464 = vmatpush1.bf16.msra.mxu0 0
    %2465 = vmatprep.subr.bf16.mxu0 0
    %2466 = vmatpush1.bf16.msra.mxu0 0
    %2467 = vmatprep.subr.bf16.mxu0 0
    %2468 = vmatpush1.bf16.msra.mxu0 0
    %2469 = vmatprep.subr.bf16.mxu0 0
    %2470 = vmatpush1.bf16.msra.mxu0 0
    %2471 = vmatprep.subr.bf16.mxu0 0
    %2472 = vmatpush1.bf16.msra.mxu0 0
    %2473 = vmatprep.subr.bf16.mxu0 0
    %2474 = vmatpush1.bf16.msra.mxu0 0
    %2475 = vmatprep.subr.bf16.mxu0 0
    %2476 = vmatpush1.bf16.msra.mxu0 0
    %2477 = vmatprep.subr.bf16.mxu0 0
    %2478 = vmatpush1.bf16.msra.mxu0 0
    %2479 = vmatprep.subr.bf16.mxu0 0
    %2480 = vmatpush1.bf16.msra.mxu0 0
    %2481 = vmatprep.subr.bf16.mxu0 0
    %2482 = vmatpush1.bf16.msra.mxu0 0
    %2483 = vmatprep.mubr.bf16.mxu0 0
    %2484 = vmatmul.mubr.bf16.gmra.mrb[0].mxu0 %v2446
    %v2485 = vpop.f32.mrb[0].mxu0
    %v2486 = vadd.f32 %v2429, %v2485
    %v2487 = vpop.f32.mrb[0].mxu0
    %v2488 = vpop.f32.mrb[0].mxu0
    %v2489 = vadd.f32 %v2429, %v2488
    %v2490 = vpop.f32.mrb[0].mxu0
    %2491 = vdwg.mxu0
    %vm2492 = vcmp.gt.f32.partialorder %v2486, 0.0
    %vm2493 = vcmp.gt.f32.partialorder %v2489, 0.0
    %v2494 = vmin.f32 %v2486, 0.0
    %v2495 = vmin.f32 %v2489, 0.0
    %v2496 = vmul.f32 %v2494, 1.442695
    %v2497 = vpow.pop %v2496
    %v2498 = vmul.f32 %v2495, 1.442695
    %v2499 = vpow.pop %v2498
    %v2500 = vsub.f32 %v2497, 1.0
    %v2501 = vsub.f32 %v2499, 1.0
    %v2502 = vmul.f32 %v2500, 1.6732632
    %v2503 = vmul.f32 %v2501, 1.6732632
    %v2504 = vsel %vm2492, %v2486, %v2502
    %v2505 = vsel %vm2493, %v2489, %v2503
    %v2506 = vmul.f32 %v2504, 1.050701
    %v2507 = vmul.f32 %v2505, 1.050701
    %v2508 = vsel %vm270, %v2506, 0.0
    %2509 = vadd.xlane.f32.xlu0 %v2508
    %v2510 = vpop.xlane.xlu0 %2509
    %v2511 = vsel %vm270, %v2507, 0.0
    %2512 = vadd.xlane.f32.xlu0 %v2511
    %v2513 = vpop.xlane.xlu0 %2512
    %v2514 = vmul.f32 %v2510, %v958
    %v2515 = vmul.f32 %v2513, %v958
    %v2516 = vsub.f32 %v2506, %v2514
    %v2517 = vsub.f32 %v2507, %v2515
    %v2518 = vmul.f32 %v2516, %v2516
    %v2519 = vmul.f32 %v2517, %v2517
    %v2520 = vsel %vm270, %v2518, 0.0
    %2521 = vadd.xlane.f32.xlu0 %v2520
    %v2522 = vpop.xlane.xlu0 %2521
    %v2523 = vsel %vm270, %v2519, 0.0
    %2524 = vadd.xlane.f32.xlu0 %v2523
    %v2525 = vpop.xlane.xlu0 %2524
    %v2526 = vmul.f32 %v2522, %v958
    %v2527 = vmul.f32 %v2525, %v958
    %v2528 = vadd.f32 %v2526, 1e-05
    %v2529 = vadd.f32 %v2527, 1e-05
    %v2530 = vrsqrt.pop %v2528
    %v2531 = vrsqrt.pop %v2529
    %v2532 = vmul.f32 %v2516, %v2530
    %v2533 = vmul.f32 %v2517, %v2531
    %v2534 = vlaneseq
    %v2535 = vshrl.u32 %v2534, 7
    %v2536 = vsub.s32 7, %v2535
    %v2537 = vrot.slane %v1635, %v2536
    %v2538 = vmul.f32 %v2532, %v2537
    %v2539 = vmul.f32 %v2533, %v2537
    %v2540 = vlaneseq
    %v2541 = vshrl.u32 %v2540, 7
    %v2542 = vsub.s32 0, %v2541
    %v2543 = vrot.slane %v1636, %v2542
    %v2544 = vadd.f32 %v2538, %v2543
    %v2545 = vadd.f32 %v2539, %v2543
    %v2546 = vpack.c.bf16 %v2545, %v2544
    %v2547 = vlaneseq
    %v2548 = vshrl.u32 %v2547, 7
    %v2549 = vsub.s32 1, %v2548
    %v2550 = vrot.slane %v1636, %v2549
    %v2556 = vunpack.c.l.b16 %v1603
    %v2557 = vunpack.c.l.b16 %v1604
    %v2558 = vunpack.c.l.b16 %v1605
    %v2559 = vunpack.c.l.b16 %v1606
    %v2560 = vunpack.c.l.b16 %v1607
    %v2561 = vpack.c.b16 %v2557, %v2556
    %v2562 = vpack.c.b16 %v2559, %v2558
    %v2563 = vpack.c.b16 %v2560, %v2560
    %v2567 = vsel %vm270, %v2546, 0
    %v2570 = vsel %vm289, %v2563, 0
    %2572 = vmatprep.subr.bf16.mxu0 0
    %2573 = vmatpush1.bf16.msra.mxu0 %v2561
    %2574 = vmatprep.subr.bf16.mxu0 0
    %2575 = vmatpush1.bf16.msra.mxu0 %v2562
    %2576 = vmatprep.subr.bf16.mxu0 0
    %2577 = vmatpush1.bf16.msra.mxu0 %v2570
    %2578 = vmatprep.subr.bf16.mxu0 0
    %2579 = vmatpush1.bf16.msra.mxu0 0
    %2580 = vmatprep.subr.bf16.mxu0 0
    %2581 = vmatpush1.bf16.msra.mxu0 0
    %2582 = vmatprep.subr.bf16.mxu0 0
    %2583 = vmatpush1.bf16.msra.mxu0 0
    %2584 = vmatprep.subr.bf16.mxu0 0
    %2585 = vmatpush1.bf16.msra.mxu0 0
    %2586 = vmatprep.subr.bf16.mxu0 0
    %2587 = vmatpush1.bf16.msra.mxu0 0
    %2588 = vmatprep.subr.bf16.mxu0 0
    %2589 = vmatpush1.bf16.msra.mxu0 0
    %2590 = vmatprep.subr.bf16.mxu0 0
    %2591 = vmatpush1.bf16.msra.mxu0 0
    %2592 = vmatprep.subr.bf16.mxu0 0
    %2593 = vmatpush1.bf16.msra.mxu0 0
    %2594 = vmatprep.subr.bf16.mxu0 0
    %2595 = vmatpush1.bf16.msra.mxu0 0
    %2596 = vmatprep.subr.bf16.mxu0 0
    %2597 = vmatpush1.bf16.msra.mxu0 0
    %2598 = vmatprep.subr.bf16.mxu0 0
    %2599 = vmatpush1.bf16.msra.mxu0 0
    %2600 = vmatprep.subr.bf16.mxu0 0
    %2601 = vmatpush1.bf16.msra.mxu0 0
    %2602 = vmatprep.subr.bf16.mxu0 0
    %2603 = vmatpush1.bf16.msra.mxu0 0
    %2604 = vmatprep.mubr.bf16.mxu0 0
    %2605 = vmatmul.mubr.bf16.gmra.mrb[0].mxu0 %v2567
    %v2606 = vpop.f32.mrb[0].mxu0
    %v2607 = vadd.f32 %v2550, %v2606
    %v2608 = vpop.f32.mrb[0].mxu0
    %v2609 = vpop.f32.mrb[0].mxu0
    %v2610 = vadd.f32 %v2550, %v2609
    %v2611 = vpop.f32.mrb[0].mxu0
    %2612 = vdwg.mxu0
    %v2613 = vadd.f32 %v2423, %v2607
    %v2614 = vadd.f32 %v2424, %v2610
    %v2615 = vsel %vm270, %v2613, 0.0
    %2616 = vadd.xlane.f32.xlu0 %v2615
    %v2617 = vpop.xlane.xlu0 %2616
    %v2618 = vsel %vm270, %v2614, 0.0
    %2619 = vadd.xlane.f32.xlu0 %v2618
    %v2620 = vpop.xlane.xlu0 %2619
    %v2621 = vmul.f32 %v2617, %v958
    %v2622 = vmul.f32 %v2620, %v958
    %v2623 = vsub.f32 %v2613, %v2621
    %v2624 = vsub.f32 %v2614, %v2622
    %v2625 = vmul.f32 %v2623, %v2623
    %v2626 = vmul.f32 %v2624, %v2624
    %v2627 = vsel %vm270, %v2625, 0.0
    %2628 = vadd.xlane.f32.xlu0 %v2627
    %v2629 = vpop.xlane.xlu0 %2628
    %v2630 = vsel %vm270, %v2626, 0.0
    %2631 = vadd.xlane.f32.xlu0 %v2630
    %v2632 = vpop.xlane.xlu0 %2631
    %v2633 = vmul.f32 %v2629, %v958
    %v2634 = vmul.f32 %v2632, %v958
    %v2635 = vadd.f32 %v2633, 1e-05
    %v2636 = vadd.f32 %v2634, 1e-05
    %v2637 = vrsqrt.pop %v2635
    %v2638 = vrsqrt.pop %v2636
    %v2639 = vmul.f32 %v2623, %v2637
    %v2640 = vmul.f32 %v2624, %v2638
    %v2641 = vlaneseq
    %v2642 = vshrl.u32 %v2641, 7
    %v2643 = vsub.s32 2, %v2642
    %v2644 = vrot.slane %v1636, %v2643
    %v2645 = vmul.f32 %v2639, %v2644
    %v2646 = vmul.f32 %v2640, %v2644
    %v2647 = vlaneseq
    %v2648 = vshrl.u32 %v2647, 7
    %v2649 = vsub.s32 3, %v2648
    %v2650 = vrot.slane %v1636, %v2649
    %v2651 = vadd.f32 %v2645, %v2650
    %v2652 = vadd.f32 %v2646, %v2650
    %v2653 = vpack.c.bf16 %v2652, %v2651
    %v2654 = vmul.f32 %v2651, %v2651
    %v2655 = vmul.f32 %v2652, %v2652
    %v2656 = vpack.c.bf16 %v2655, %v2654
    %2657 = vmatprep.subr.bf16.mxu0 0
    %2658 = vmatpush1.bf16.msra.mxu0 %v2653
    %2659 = vmatprep.subr.bf16.mxu0 0
    %2660 = vmatpush1.bf16.msra.mxu0 %v2656
    %2661 = vmatprep.subr.bf16.mxu0 0
    %2662 = vmatpush1.bf16.msra.mxu0 0
    %2663 = vmatprep.subr.bf16.mxu0 0
    %2664 = vmatpush1.bf16.msra.mxu0 0
    %2665 = vmatprep.subr.bf16.mxu0 0
    %2666 = vmatpush1.bf16.msra.mxu0 0
    %2667 = vmatprep.subr.bf16.mxu0 0
    %2668 = vmatpush1.bf16.msra.mxu0 0
    %2669 = vmatprep.subr.bf16.mxu0 0
    %2670 = vmatpush1.bf16.msra.mxu0 0
    %2671 = vmatprep.subr.bf16.mxu0 0
    %2672 = vmatpush1.bf16.msra.mxu0 0
    %2673 = vmatprep.subr.bf16.mxu0 0
    %2674 = vmatpush1.bf16.msra.mxu0 0
    %2675 = vmatprep.subr.bf16.mxu0 0
    %2676 = vmatpush1.bf16.msra.mxu0 0
    %2677 = vmatprep.subr.bf16.mxu0 0
    %2678 = vmatpush1.bf16.msra.mxu0 0
    %2679 = vmatprep.subr.bf16.mxu0 0
    %2680 = vmatpush1.bf16.msra.mxu0 0
    %2681 = vmatprep.subr.bf16.mxu0 0
    %2682 = vmatpush1.bf16.msra.mxu0 0
    %2683 = vmatprep.subr.bf16.mxu0 0
    %2684 = vmatpush1.bf16.msra.mxu0 0
    %2685 = vmatprep.subr.bf16.mxu0 0
    %2686 = vmatpush1.bf16.msra.mxu0 0
    %2687 = vmatprep.subr.bf16.mxu0 0
    %2688 = vmatpush1.bf16.msra.mxu0 0
    %2689 = vmatprep.mubr.bf16.mxu0 0
    %2690 = vmatmul.mubr.bf16.gmra.mrb[0].mxu0 %v1225
    %v2691 = vpop.f32.mrb[0].mxu0
    %v2692 = vadd.f32 0.0, %v2691
    %v2693 = vpop.f32.mrb[0].mxu0
    %v2694 = vpop.f32.mrb[0].mxu0
    %v2695 = vpop.f32.mrb[0].mxu0
    %2696 = vdwg.mxu0
    %v2697 = vmul.f32 %v2692, %v2692
    %v2699 = vrot.slane %v2697, 6
    %v2701 = vsub.f32 %v2692, %v2699
    %v2702 = vmax.f32 %v2701, 0.0
    %v2703 = vadd.f32 %v2702, 1e-05
    %v2704 = vrsqrt.pop %v2703
    %v2705 = vmul.f32 %v2703, %v2704
    %vm2706 = vcmp.eq.f32.partialorder %v2703, inf
    %v2707 = vsel %vm2706, %v2703, %v2705
    %vm2708 = vcmp.eq.f32.partialorder %v2703, 0.0
    %v2709 = vand.u32 %v2703, 2147483648
    %v2710 = vsel %vm2708, %v2709, %v2707
    %v2711 = vsub.f32 0.0, %v2651
    %v2712 = vsub.f32 0.0, %v2652
    %2715 = vrot.lane.b32.xlu0 %v2711, 40
    %v2716 = vpop.permute.xlu0 %2715
    %2717 = vrot.lane.b32.xlu0 %v2712, 40
    %v2718 = vpop.permute.xlu0 %2717
    %v2721 = vsel %vm270, %v2651, %v2716
    %v2722 = vsel %vm270, %v2652, %v2718
    %v2723 = vsel %vm1307, %v2721, -1e+30
    %v2724 = vsel %vm1308, %v2722, -1e+30
    %v2725 = vsel %vm1311, %v2723, -inf
    %v2726 = vsel %vm1311, %v2724, -inf
    %v2727 = vmax.f32 %v2725, %v2726
    %v2728 = vrot.slane %v2727, 4
    %v2729 = vmax.f32 %v2727, %v2728
    %v2730 = vrot.slane %v2729, 2
    %v2731 = vmax.f32 %v2729, %v2730
    %v2732 = vrot.slane %v2731, 1
    %v2733 = vmax.f32 %v2731, %v2732
    %v2734 = vsel %vm1335, %v2721, -1e+30
    %v2735 = vsel %vm1336, %v2722, -1e+30
    %v2736 = vsel %vm1311, %v2734, -inf
    %v2737 = vsel %vm1311, %v2735, -inf
    %v2738 = vmax.f32 %v2736, %v2737
    %v2739 = vrot.slane %v2738, 4
    %v2740 = vmax.f32 %v2738, %v2739
    %v2741 = vrot.slane %v2740, 2
    %v2742 = vmax.f32 %v2740, %v2741
    %v2743 = vrot.slane %v2742, 1
    %v2744 = vmax.f32 %v2742, %v2743
    %v2745 = vsel %vm1348, %v2733, %v2744
    %v2746 = vsub.f32 0.0, %v2745
    %2748 = vrot.lane.b32.xlu0 %v2692, 8
    %v2749 = vpop.permute.xlu0 %2748
    %v2752 = vrot.slane %v2710, 2
    %2753 = vrot.lane.b32.xlu0 %v2752, 48
    %v2754 = vpop.permute.xlu0 %2753
    %2757 = vrot.lane.b32.xlu0 %v2745, 88
    %v2758 = vpop.permute.xlu0 %2757
    %2761 = vrot.lane.b32.xlu0 %v2746, 88
    %v2762 = vpop.permute.xlu0 %2761
    %v2764 = vsel %vm1368, %v1581, %v2749
    %v2765 = vsel %vm645, %v2764, %v2754
    %v2766 = vsel %vm1371, %v2765, %v2758
    %v2767 = vpack.c.bf16 %v2766, %v2766
    %v2768 = vpack.c.bf16 %v2762, %v2762
    %v2769 = vlaneseq
    %v2770 = vshrl.u32 %v2769, 7
    %v2771 = vsub.s32 4, %v2770
    %v2772 = vrot.slane %v1636, %v2771
    %v2794 = vunpack.c.l.b16 %v1608
    %v2795 = vunpack.c.l.b16 %v1609
    %v2796 = vunpack.c.l.b16 %v1610
    %v2797 = vunpack.c.l.b16 %v1611
    %v2798 = vunpack.c.l.b16 %v1612
    %v2799 = vunpack.c.l.b16 %v1613
    %v2800 = vunpack.c.l.b16 %v1614
    %v2801 = vunpack.c.l.b16 %v1615
    %v2802 = vunpack.c.l.b16 %v1616
    %v2803 = vunpack.c.l.b16 %v1617
    %v2804 = vunpack.c.l.b16 %v1618
    %v2805 = vunpack.c.l.b16 %v1619
    %v2806 = vunpack.c.l.b16 %v1620
    %v2807 = vunpack.c.l.b16 %v1621
    %v2808 = vunpack.c.l.b16 %v1622
    %v2809 = vunpack.c.l.b16 %v1623
    %v2810 = vunpack.c.l.b16 %v1624
    %v2811 = vunpack.c.l.b16 %v1625
    %v2812 = vunpack.c.l.b16 %v1626
    %v2813 = vunpack.c.l.b16 %v1627
    %v2814 = vunpack.c.l.b16 %v1628
    %v2815 = vpack.c.b16 %v2795, %v2794
    %v2816 = vpack.c.b16 %v2797, %v2796
    %v2817 = vpack.c.b16 %v2799, %v2798
    %v2818 = vpack.c.b16 %v2801, %v2800
    %v2819 = vpack.c.b16 %v2803, %v2802
    %v2820 = vpack.c.b16 %v2805, %v2804
    %v2821 = vpack.c.b16 %v2807, %v2806
    %v2822 = vpack.c.b16 %v2809, %v2808
    %v2823 = vpack.c.b16 %v2811, %v2810
    %v2824 = vpack.c.b16 %v2813, %v2812
    %v2825 = vpack.c.b16 %v2814, %v2814
    %v2837 = vsel %vm270, %v2768, 0
    %v2840 = vsel %vm289, %v2825, 0
    %2842 = vmatprep.subr.bf16.mxu0 0
    %2843 = vmatpush1.bf16.msra.mxu0 %v2815
    %2844 = vmatprep.subr.bf16.mxu0 0
    %2845 = vmatpush1.bf16.msra.mxu0 %v2816
    %2846 = vmatprep.subr.bf16.mxu0 0
    %2847 = vmatpush1.bf16.msra.mxu0 %v2817
    %2848 = vmatprep.subr.bf16.mxu0 0
    %2849 = vmatpush1.bf16.msra.mxu0 %v2818
    %2850 = vmatprep.subr.bf16.mxu0 0
    %2851 = vmatpush1.bf16.msra.mxu0 %v2819
    %2852 = vmatprep.subr.bf16.mxu0 0
    %2853 = vmatpush1.bf16.msra.mxu0 %v2820
    %2854 = vmatprep.subr.bf16.mxu0 0
    %2855 = vmatpush1.bf16.msra.mxu0 %v2821
    %2856 = vmatprep.subr.bf16.mxu0 0
    %2857 = vmatpush1.bf16.msra.mxu0 %v2822
    %2858 = vmatprep.subr.bf16.mxu0 0
    %2859 = vmatpush1.bf16.msra.mxu0 %v2823
    %2860 = vmatprep.subr.bf16.mxu0 0
    %2861 = vmatpush1.bf16.msra.mxu0 %v2824
    %2862 = vmatprep.subr.bf16.mxu0 0
    %2863 = vmatpush1.bf16.msra.mxu0 %v2840
    %2864 = vmatprep.subr.bf16.mxu0 0
    %2865 = vmatpush1.bf16.msra.mxu0 0
    %2866 = vmatprep.subr.bf16.mxu0 0
    %2867 = vmatpush1.bf16.msra.mxu0 0
    %2868 = vmatprep.subr.bf16.mxu0 0
    %2869 = vmatpush1.bf16.msra.mxu0 0
    %2870 = vmatprep.subr.bf16.mxu0 0
    %2871 = vmatpush1.bf16.msra.mxu0 0
    %2872 = vmatprep.subr.bf16.mxu0 0
    %2873 = vmatpush1.bf16.msra.mxu0 0
    %2874 = vmatprep.mubr.bf16.mxu0 %v2837
    %2875 = vmatmul.mubr.bf16.gmra.mrb[0].mxu0 %v2767
    %v2876 = vpop.f32.mrb[0].mxu0
    %v2877 = vadd.f32 %v2772, %v2876
    %v2878 = vpop.f32.mrb[0].mxu0
    %v2879 = vpop.f32.mrb[0].mxu0
    %v2880 = vpop.f32.mrb[0].mxu0
    %2881 = vdwg.mxu0
    %vm2882 = vcmp.gt.f32.partialorder %v2877, 0.0
    %v2883 = vmin.f32 %v2877, 0.0
    %v2884 = vmul.f32 %v2883, 1.442695
    %v2885 = vpow.pop %v2884
    %v2886 = vsub.f32 %v2885, 1.0
    %v2887 = vmul.f32 %v2886, 1.6732632
    %v2888 = vsel %vm2882, %v2877, %v2887
    %v2889 = vmul.f32 %v2888, 1.050701
    %v2890 = vsel %vm1496, %v2889, 0.0
    %2891 = vadd.xlane.f32.xlu0 %v2890
    %v2892 = vpop.xlane.xlu0 %2891
    %v2893 = vmul.f32 %v2892, %v958
    %v2894 = vsub.f32 %v2889, %v2893
    %v2895 = vmul.f32 %v2894, %v2894
    %v2896 = vsel %vm1496, %v2895, 0.0
    %2897 = vadd.xlane.f32.xlu0 %v2896
    %v2898 = vpop.xlane.xlu0 %2897
    %v2899 = vmul.f32 %v2898, %v958
    %v2900 = vadd.f32 %v2899, 1e-05
    %v2901 = vrsqrt.pop %v2900
    %v2902 = vmul.f32 %v2894, %v2901
    %v2903 = vlaneseq
    %v2904 = vshrl.u32 %v2903, 7
    %v2905 = vsub.s32 5, %v2904
    %v2906 = vrot.slane %v1636, %v2905
    %v2907 = vmul.f32 %v2902, %v2906
    %v2908 = vlaneseq
    %v2909 = vshrl.u32 %v2908, 7
    %v2910 = vsub.s32 6, %v2909
    %v2911 = vrot.slane %v1636, %v2910
    %v2912 = vadd.f32 %v2907, %v2911
    %v2913 = vpack.c.bf16 %v2912, %v2912
    %v2914 = vlaneseq
    %v2915 = vshrl.u32 %v2914, 7
    %v2916 = vsub.s32 7, %v2915
    %v2917 = vrot.slane %v1636, %v2916
    %v2923 = vunpack.c.l.b16 %v1629
    %v2924 = vunpack.c.l.b16 %v1630
    %v2925 = vunpack.c.l.b16 %v1631
    %v2926 = vunpack.c.l.b16 %v1632
    %v2927 = vunpack.c.l.b16 %v1633
    %v2928 = vpack.c.b16 %v2924, %v2923
    %v2929 = vpack.c.b16 %v2926, %v2925
    %v2930 = vpack.c.b16 %v2927, %v2927
    %v2934 = vsel %vm270, %v2913, 0
    %v2937 = vsel %vm289, %v2930, 0
    %2939 = vmatprep.subr.bf16.mxu0 0
    %2940 = vmatpush1.bf16.msra.mxu0 %v2928
    %2941 = vmatprep.subr.bf16.mxu0 0
    %2942 = vmatpush1.bf16.msra.mxu0 %v2929
    %2943 = vmatprep.subr.bf16.mxu0 0
    %2944 = vmatpush1.bf16.msra.mxu0 %v2937
    %2945 = vmatprep.subr.bf16.mxu0 0
    %2946 = vmatpush1.bf16.msra.mxu0 0
    %2947 = vmatprep.subr.bf16.mxu0 0
    %2948 = vmatpush1.bf16.msra.mxu0 0
    %2949 = vmatprep.subr.bf16.mxu0 0
    %2950 = vmatpush1.bf16.msra.mxu0 0
    %2951 = vmatprep.subr.bf16.mxu0 0
    %2952 = vmatpush1.bf16.msra.mxu0 0
    %2953 = vmatprep.subr.bf16.mxu0 0
    %2954 = vmatpush1.bf16.msra.mxu0 0
    %2955 = vmatprep.subr.bf16.mxu0 0
    %2956 = vmatpush1.bf16.msra.mxu0 0
    %2957 = vmatprep.subr.bf16.mxu0 0
    %2958 = vmatpush1.bf16.msra.mxu0 0
    %2959 = vmatprep.subr.bf16.mxu0 0
    %2960 = vmatpush1.bf16.msra.mxu0 0
    %2961 = vmatprep.subr.bf16.mxu0 0
    %2962 = vmatpush1.bf16.msra.mxu0 0
    %2963 = vmatprep.subr.bf16.mxu0 0
    %2964 = vmatpush1.bf16.msra.mxu0 0
    %2965 = vmatprep.subr.bf16.mxu0 0
    %2966 = vmatpush1.bf16.msra.mxu0 0
    %2967 = vmatprep.subr.bf16.mxu0 0
    %2968 = vmatpush1.bf16.msra.mxu0 0
    %2969 = vmatprep.subr.bf16.mxu0 0
    %2970 = vmatpush1.bf16.msra.mxu0 0
    %2971 = vmatprep.mubr.bf16.mxu0 0
    %2972 = vmatmul.mubr.bf16.gmra.mrb[0].mxu0 %v2934
    %v2973 = vpop.f32.mrb[0].mxu0
    %v2974 = vadd.f32 %v2917, %v2973
    %v2975 = vpop.f32.mrb[0].mxu0
    %v2976 = vpop.f32.mrb[0].mxu0
    %v2977 = vpop.f32.mrb[0].mxu0
    %2978 = vdwg.mxu0
    %s2979 = scalar_lea.vmem %s4, 80
    %v2980 = vld [vmem:[%s2979] sm:$0xff]
    %v2981 = vld [vmem:[%s2979 + $0x8] sm:$0xff]
    %v2982 = vld [vmem:[%s2979 + $0x10] sm:$0xff]
    %v2983 = vld [vmem:[%s2979 + $0x18] sm:$0xff]
    %v2984 = vld [vmem:[%s2979 + $0x20] sm:$0xff]
    %s2985 = scalar_lea.vmem %s5, 384
    %v2986 = vld [vmem:[%s2985 + $0x8] sm:$0xf]
    %v2987 = vld [vmem:[%s2985 + $0xc] sm:$0xf]
    %v2988 = vld [vmem:[%s2985 + $0x10] sm:$0xf]
    %v2989 = vld [vmem:[%s2985 + $0x14] sm:$0xf]
    %v2990 = vld [vmem:[%s2985 + $0x18] sm:$0xf]
    %v2991 = vld [vmem:[%s2985 + $0x20] sm:$0xf]
    %v2992 = vld [vmem:[%s2985 + $0x24] sm:$0xf]
    %v2993 = vld [vmem:[%s2985 + $0x28] sm:$0xf]
    %v2994 = vld [vmem:[%s2985 + $0x2c] sm:$0xf]
    %v2995 = vld [vmem:[%s2985 + $0x30] sm:$0xf]
    %v2996 = vld [vmem:[%s2985 + $0x38] sm:$0xf]
    %v2997 = vld [vmem:[%s2985 + $0x3c] sm:$0xf]
    %v2998 = vld [vmem:[%s2985 + $0x40] sm:$0xf]
    %v2999 = vld [vmem:[%s2985 + $0x44] sm:$0xf]
    %v3000 = vld [vmem:[%s2985 + $0x48] sm:$0xf]
    %v3001 = vld [vmem:[%s2985 + $0x50] sm:$0xf]
    %v3002 = vld [vmem:[%s2985 + $0x54] sm:$0xf]
    %v3003 = vld [vmem:[%s2985 + $0x58] sm:$0xf]
    %v3004 = vld [vmem:[%s2985 + $0x5c] sm:$0xf]
    %v3005 = vld [vmem:[%s2985 + $0x60] sm:$0xf]
    %v3006 = vld [vmem:[%s2985 + $0x64] sm:$0xf]
    %v3007 = vld [vmem:[%s2985 + $0x68] sm:$0xf]
    %v3008 = vld [vmem:[%s2985 + $0x6c] sm:$0xf]
    %v3009 = vld [vmem:[%s2985 + $0x70] sm:$0xf]
    %v3010 = vld [vmem:[%s2985 + $0x74] sm:$0xf]
    %v3011 = vld [vmem:[%s2985 + $0x78] sm:$0xf]
    %v3012 = vld [vmem:[%s2985 + $0x7c] sm:$0xf]
    %v3013 = vld [vmem:[%s2985 + $0x80] sm:$0xf]
    %v3014 = vld [vmem:[%s2985 + $0x84] sm:$0xf]
    %v3015 = vld [vmem:[%s2985 + $0x88] sm:$0xf]
    %v3016 = vld [vmem:[%s2985 + $0x8c] sm:$0xf]
    %v3017 = vld [vmem:[%s2985 + $0x90] sm:$0xf]
    %v3018 = vld [vmem:[%s2985 + $0x94] sm:$0xf]
    %v3019 = vld [vmem:[%s2985 + $0x98] sm:$0xf]
    %v3020 = vld [vmem:[%s2985 + $0x9c] sm:$0xf]
    %v3021 = vld [vmem:[%s2985 + $0xa0] sm:$0xf]
    %v3022 = vld [vmem:[%s2985 + $0xa8] sm:$0xf]
    %v3023 = vld [vmem:[%s2985 + $0xac] sm:$0xf]
    %v3024 = vld [vmem:[%s2985 + $0xb0] sm:$0xf]
    %v3025 = vld [vmem:[%s2985 + $0xb4] sm:$0xf]
    %v3026 = vld [vmem:[%s2985 + $0xb8] sm:$0xf]
    %s3027 = scalar_lea.vmem %s6, 32
    %v3028 = vld [vmem:[%s3027] sm:$0xff]
    %v3029 = vld [vmem:[%s3027 + $0x8] sm:$0xff]
    %3030 = vmatprep.subr.bf16.mxu0 0
    %3031 = vmatpush1.bf16.msra.mxu0 %v2653
    %3032 = vmatprep.subr.bf16.mxu0 0
    %3033 = vmatpush1.bf16.msra.mxu0 0
    %3034 = vmatprep.subr.bf16.mxu0 0
    %3035 = vmatpush1.bf16.msra.mxu0 0
    %3036 = vmatprep.subr.bf16.mxu0 0
    %3037 = vmatpush1.bf16.msra.mxu0 0
    %3038 = vmatprep.subr.bf16.mxu0 0
    %3039 = vmatpush1.bf16.msra.mxu0 0
    %3040 = vmatprep.subr.bf16.mxu0 0
    %3041 = vmatpush1.bf16.msra.mxu0 0
    %3042 = vmatprep.subr.bf16.mxu0 0
    %3043 = vmatpush1.bf16.msra.mxu0 0
    %3044 = vmatprep.subr.bf16.mxu0 0
    %3045 = vmatpush1.bf16.msra.mxu0 0
    %3046 = vmatprep.subr.bf16.mxu0 0
    %3047 = vmatpush1.bf16.msra.mxu0 0
    %3048 = vmatprep.subr.bf16.mxu0 0
    %3049 = vmatpush1.bf16.msra.mxu0 0
    %3050 = vmatprep.subr.bf16.mxu0 0
    %3051 = vmatpush1.bf16.msra.mxu0 0
    %3052 = vmatprep.subr.bf16.mxu0 0
    %3053 = vmatpush1.bf16.msra.mxu0 0
    %3054 = vmatprep.subr.bf16.mxu0 0
    %3055 = vmatpush1.bf16.msra.mxu0 0
    %3056 = vmatprep.subr.bf16.mxu0 0
    %3057 = vmatpush1.bf16.msra.mxu0 0
    %3058 = vmatprep.subr.bf16.mxu0 0
    %3059 = vmatpush1.bf16.msra.mxu0 0
    %3060 = vmatprep.subr.bf16.mxu0 0
    %3061 = vmatpush1.bf16.msra.mxu0 0
    %3062 = vmatprep.mubr.bf16.mxu0 0
    %3063 = vmatmul.mubr.bf16.gmra.mrb[0].mxu0 %v141
    %v3064 = vpop.f32.mrb[0].mxu0
    %v3065 = vadd.f32 0.0, %v3064
    %v3066 = vpop.f32.mrb[0].mxu0
    %v3067 = vpop.f32.mrb[0].mxu0
    %v3068 = vadd.f32 0.0, %v3067
    %v3069 = vpop.f32.mrb[0].mxu0
    %3070 = vmatprep.mubr.bf16.mxu0 0
    %3071 = vmatmul.mubr.bf16.gmra.mrb[0].mxu0 %v144
    %v3072 = vpop.f32.mrb[0].mxu0
    %v3073 = vadd.f32 0.0, %v3072
    %v3074 = vpop.f32.mrb[0].mxu0
    %v3075 = vpop.f32.mrb[0].mxu0
    %v3076 = vadd.f32 0.0, %v3075
    %v3077 = vpop.f32.mrb[0].mxu0
    %3078 = vmatprep.mubr.bf16.mxu0 0
    %3079 = vmatmul.mubr.bf16.gmra.mrb[0].mxu0 %v147
    %v3080 = vpop.f32.mrb[0].mxu0
    %v3081 = vadd.f32 0.0, %v3080
    %v3082 = vpop.f32.mrb[0].mxu0
    %v3083 = vpop.f32.mrb[0].mxu0
    %v3084 = vadd.f32 0.0, %v3083
    %v3085 = vpop.f32.mrb[0].mxu0
    %3086 = vmatprep.mubr.bf16.mxu0 0
    %3087 = vmatmul.mubr.bf16.gmra.mrb[0].mxu0 %v150
    %v3088 = vpop.f32.mrb[0].mxu0
    %v3089 = vadd.f32 0.0, %v3088
    %v3090 = vpop.f32.mrb[0].mxu0
    %v3091 = vpop.f32.mrb[0].mxu0
    %v3092 = vadd.f32 0.0, %v3091
    %v3093 = vpop.f32.mrb[0].mxu0
    %3094 = vmatprep.mubr.bf16.mxu0 0
    %3095 = vmatmul.mubr.bf16.gmra.mrb[0].mxu0 %v153
    %v3096 = vpop.f32.mrb[0].mxu0
    %v3097 = vadd.f32 0.0, %v3096
    %v3098 = vpop.f32.mrb[0].mxu0
    %v3099 = vpop.f32.mrb[0].mxu0
    %v3100 = vadd.f32 0.0, %v3099
    %v3101 = vpop.f32.mrb[0].mxu0
    %3102 = vmatprep.mubr.bf16.mxu0 0
    %3103 = vmatmul.mubr.bf16.gmra.mrb[0].mxu0 %v156
    %v3104 = vpop.f32.mrb[0].mxu0
    %v3105 = vadd.f32 0.0, %v3104
    %v3106 = vpop.f32.mrb[0].mxu0
    %v3107 = vpop.f32.mrb[0].mxu0
    %v3108 = vadd.f32 0.0, %v3107
    %v3109 = vpop.f32.mrb[0].mxu0
    %3110 = vdwg.mxu0
    %v3111 = vpack.c.bf16 %v3068, %v3065
    %v3112 = vpack.c.bf16 %v3076, %v3073
    %v3113 = vpack.c.bf16 %v3084, %v3081
    %v3114 = vpack.c.bf16 %v3092, %v3089
    %v3115 = vpack.c.bf16 %v3100, %v3097
    %v3116 = vpack.c.bf16 %v3108, %v3105
    %v3122 = vunpack.c.l.b16 %v2980
    %v3123 = vunpack.c.h.b16 %v2980
    %v3124 = vunpack.c.l.b16 %v2981
    %v3125 = vunpack.c.h.b16 %v2981
    %v3126 = vunpack.c.l.b16 %v2982
    %v3127 = vunpack.c.h.b16 %v2982
    %v3128 = vunpack.c.l.b16 %v2983
    %v3129 = vunpack.c.h.b16 %v2983
    %v3130 = vunpack.c.l.b16 %v2984
    %v3131 = vunpack.c.h.b16 %v2984
    %v3132 = vpack.c.b16 %v3124, %v3122
    %v3133 = vpack.c.b16 %v3125, %v3123
    %v3134 = vpack.c.b16 %v3128, %v3126
    %v3135 = vpack.c.b16 %v3129, %v3127
    %v3136 = vpack.c.b16 %v3130, %v3130
    %v3137 = vpack.c.b16 %v3131, %v3131
    %v3143 = vsel %vm270, %v3111, 0
    %v3146 = vsel %vm270, %v3112, 0
    %v3149 = vsel %vm270, %v3113, 0
    %v3152 = vsel %vm270, %v3114, 0
    %v3155 = vsel %vm270, %v3115, 0
    %v3158 = vsel %vm270, %v3116, 0
    %v3161 = vsel %vm289, %v3136, 0
    %v3164 = vsel %vm289, %v3137, 0
    %3166 = vmatprep.subr.bf16.mxu0 %v3133
    %3167 = vmatpush1.bf16.msra.mxu0 %v3132
    %3168 = vmatprep.subr.bf16.mxu0 %v3135
    %3169 = vmatpush1.bf16.msra.mxu0 %v3134
    %3170 = vmatprep.subr.bf16.mxu0 %v3164
    %3171 = vmatpush1.bf16.msra.mxu0 %v3161
    %3172 = vmatprep.subr.bf16.mxu0 0
    %3173 = vmatpush1.bf16.msra.mxu0 0
    %3174 = vmatprep.subr.bf16.mxu0 0
    %3175 = vmatpush1.bf16.msra.mxu0 0
    %3176 = vmatprep.subr.bf16.mxu0 0
    %3177 = vmatpush1.bf16.msra.mxu0 0
    %3178 = vmatprep.subr.bf16.mxu0 0
    %3179 = vmatpush1.bf16.msra.mxu0 0
    %3180 = vmatprep.subr.bf16.mxu0 0
    %3181 = vmatpush1.bf16.msra.mxu0 0
    %3182 = vmatprep.subr.bf16.mxu0 0
    %3183 = vmatpush1.bf16.msra.mxu0 0
    %3184 = vmatprep.subr.bf16.mxu0 0
    %3185 = vmatpush1.bf16.msra.mxu0 0
    %3186 = vmatprep.subr.bf16.mxu0 0
    %3187 = vmatpush1.bf16.msra.mxu0 0
    %3188 = vmatprep.subr.bf16.mxu0 0
    %3189 = vmatpush1.bf16.msra.mxu0 0
    %3190 = vmatprep.subr.bf16.mxu0 0
    %3191 = vmatpush1.bf16.msra.mxu0 0
    %3192 = vmatprep.subr.bf16.mxu0 0
    %3193 = vmatpush1.bf16.msra.mxu0 0
    %3194 = vmatprep.subr.bf16.mxu0 0
    %3195 = vmatpush1.bf16.msra.mxu0 0
    %3196 = vmatprep.subr.bf16.mxu0 0
    %3197 = vmatpush1.bf16.msra.mxu0 0
    %3198 = vmatprep.mubr.bf16.mxu0 0
    %3199 = vmatmul.mubr.bf16.gmra.mrb[0].mxu0 %v3143
    %v3200 = vpop.f32.mrb[0].mxu0
    %v3201 = vadd.f32 0.0, %v3200
    %v3202 = vpop.f32.mrb[0].mxu0
    %v3203 = vpop.f32.mrb[0].mxu0
    %v3204 = vadd.f32 0.0, %v3203
    %v3205 = vpop.f32.mrb[0].mxu0
    %3206 = vmatprep.mubr.bf16.mxu0 0
    %3207 = vmatmul.mubr.bf16.gmra.mrb[0].mxu0 %v3146
    %v3208 = vpop.f32.mrb[0].mxu0
    %v3209 = vadd.f32 0.0, %v3208
    %v3210 = vpop.f32.mrb[0].mxu0
    %v3211 = vpop.f32.mrb[0].mxu0
    %v3212 = vadd.f32 0.0, %v3211
    %v3213 = vpop.f32.mrb[0].mxu0
    %3214 = vmatprep.mubr.bf16.mxu0 0
    %3215 = vmatmul.mubr.bf16.gmra.mrb[0].mxu0 %v3149
    %v3216 = vpop.f32.mrb[0].mxu0
    %v3217 = vadd.f32 0.0, %v3216
    %v3218 = vpop.f32.mrb[0].mxu0
    %v3219 = vpop.f32.mrb[0].mxu0
    %v3220 = vadd.f32 0.0, %v3219
    %v3221 = vpop.f32.mrb[0].mxu0
    %3222 = vmatprep.mubr.bf16.mxu0 0
    %3223 = vmatmul.mubr.bf16.gmra.mrb[0].mxu0 %v3152
    %v3224 = vpop.f32.mrb[0].mxu0
    %v3225 = vadd.f32 0.0, %v3224
    %v3226 = vpop.f32.mrb[0].mxu0
    %v3227 = vadd.f32 0.0, %v3226
    %v3228 = vpop.f32.mrb[0].mxu0
    %v3229 = vadd.f32 0.0, %v3228
    %v3230 = vpop.f32.mrb[0].mxu0
    %v3231 = vadd.f32 0.0, %v3230
    %3232 = vmatprep.mubr.bf16.mxu0 0
    %3233 = vmatmul.mubr.bf16.gmra.mrb[0].mxu0 %v3155
    %v3234 = vpop.f32.mrb[0].mxu0
    %v3235 = vadd.f32 0.0, %v3234
    %v3236 = vpop.f32.mrb[0].mxu0
    %v3237 = vadd.f32 0.0, %v3236
    %v3238 = vpop.f32.mrb[0].mxu0
    %v3239 = vadd.f32 0.0, %v3238
    %v3240 = vpop.f32.mrb[0].mxu0
    %v3241 = vadd.f32 0.0, %v3240
    %3242 = vmatprep.mubr.bf16.mxu0 0
    %3243 = vmatmul.mubr.bf16.gmra.mrb[0].mxu0 %v3158
    %v3244 = vpop.f32.mrb[0].mxu0
    %v3245 = vadd.f32 0.0, %v3244
    %v3246 = vpop.f32.mrb[0].mxu0
    %v3247 = vadd.f32 0.0, %v3246
    %v3248 = vpop.f32.mrb[0].mxu0
    %v3249 = vadd.f32 0.0, %v3248
    %v3250 = vpop.f32.mrb[0].mxu0
    %v3251 = vadd.f32 0.0, %v3250
    %3252 = vdwg.mxu0
    %v3253 = vlaneseq
    %v3254 = vshrl.u32 %v3253, 7
    %v3255 = vsub.s32 1, %v3254
    %v3256 = vrot.slane %v3028, %v3255
    %3258 = vrot.lane.b32.xlu0 %v3256, 64
    %v3259 = vpop.permute.xlu0 %3258
    %v3261 = vadd.f32 %v3201, %v3259
    %v3262 = vadd.f32 %v3204, %v3259
    %v3263 = vadd.f32 %v3209, %v3259
    %v3264 = vadd.f32 %v3212, %v3259
    %v3265 = vadd.f32 %v3217, %v3259
    %v3266 = vadd.f32 %v3220, %v3259
    %v3267 = vlaneseq
    %v3268 = vshrl.u32 %v3267, 7
    %v3269 = vsub.s32 2, %v3268
    %v3270 = vrot.slane %v3028, %v3269
    %3272 = vrot.lane.b32.xlu0 %v3270, 104
    %v3273 = vpop.permute.xlu0 %3272
    %v3275 = vadd.f32 %v3225, %v3273
    %v3276 = vadd.f32 %v3227, %v3273
    %v3277 = vadd.f32 %v3229, %v3273
    %v3278 = vadd.f32 %v3231, %v3273
    %v3279 = vadd.f32 %v3235, %v3273
    %v3280 = vadd.f32 %v3237, %v3273
    %v3281 = vadd.f32 %v3239, %v3273
    %v3282 = vadd.f32 %v3241, %v3273
    %v3283 = vadd.f32 %v3245, %v3273
    %v3284 = vadd.f32 %v3247, %v3273
    %v3285 = vadd.f32 %v3249, %v3273
    %v3286 = vadd.f32 %v3251, %v3273
    %3293 = vrot.lane.b32.xlu0 %v3261, 40
    %v3294 = vpop.permute.xlu0 %3293
    %3295 = vrot.lane.b32.xlu0 %v3262, 40
    %v3296 = vpop.permute.xlu0 %3295
    %3297 = vrot.lane.b32.xlu0 %v3263, 40
    %v3298 = vpop.permute.xlu0 %3297
    %3299 = vrot.lane.b32.xlu0 %v3264, 40
    %v3300 = vpop.permute.xlu0 %3299
    %3301 = vrot.lane.b32.xlu0 %v3265, 40
    %v3302 = vpop.permute.xlu0 %3301
    %3303 = vrot.lane.b32.xlu0 %v3266, 40
    %v3304 = vpop.permute.xlu0 %3303
    %v3311 = vadd.f32 %v3275, %v3294
    %v3312 = vadd.f32 %v3276, %v3294
    %v3313 = vadd.f32 %v3277, %v3296
    %v3314 = vadd.f32 %v3278, %v3296
    %v3315 = vadd.f32 %v3279, %v3298
    %v3316 = vadd.f32 %v3280, %v3298
    %v3317 = vadd.f32 %v3281, %v3300
    %v3318 = vadd.f32 %v3282, %v3300
    %v3319 = vadd.f32 %v3283, %v3302
    %v3320 = vadd.f32 %v3284, %v3302
    %v3321 = vadd.f32 %v3285, %v3304
    %v3322 = vadd.f32 %v3286, %v3304
    %vm3323 = vcmp.gt.f32.partialorder %v3311, 0.0
    %vm3324 = vcmp.gt.f32.partialorder %v3312, 0.0
    %vm3325 = vcmp.gt.f32.partialorder %v3313, 0.0
    %vm3326 = vcmp.gt.f32.partialorder %v3314, 0.0
    %vm3327 = vcmp.gt.f32.partialorder %v3315, 0.0
    %vm3328 = vcmp.gt.f32.partialorder %v3316, 0.0
    %vm3329 = vcmp.gt.f32.partialorder %v3317, 0.0
    %vm3330 = vcmp.gt.f32.partialorder %v3318, 0.0
    %vm3331 = vcmp.gt.f32.partialorder %v3319, 0.0
    %vm3332 = vcmp.gt.f32.partialorder %v3320, 0.0
    %vm3333 = vcmp.gt.f32.partialorder %v3321, 0.0
    %vm3334 = vcmp.gt.f32.partialorder %v3322, 0.0
    %v3335 = vmul.f32 %v3311, 0.2
    %v3336 = vmul.f32 %v3312, 0.2
    %v3337 = vmul.f32 %v3313, 0.2
    %v3338 = vmul.f32 %v3314, 0.2
    %v3339 = vmul.f32 %v3315, 0.2
    %v3340 = vmul.f32 %v3316, 0.2
    %v3341 = vmul.f32 %v3317, 0.2
    %v3342 = vmul.f32 %v3318, 0.2
    %v3343 = vmul.f32 %v3319, 0.2
    %v3344 = vmul.f32 %v3320, 0.2
    %v3345 = vmul.f32 %v3321, 0.2
    %v3346 = vmul.f32 %v3322, 0.2
    %v3347 = vsel %vm3323, %v3311, %v3335
    %v3348 = vsel %vm3324, %v3312, %v3336
    %v3349 = vsel %vm3325, %v3313, %v3337
    %v3350 = vsel %vm3326, %v3314, %v3338
    %v3351 = vsel %vm3327, %v3315, %v3339
    %v3352 = vsel %vm3328, %v3316, %v3340
    %v3353 = vsel %vm3329, %v3317, %v3341
    %v3354 = vsel %vm3330, %v3318, %v3342
    %v3355 = vsel %vm3331, %v3319, %v3343
    %v3356 = vsel %vm3332, %v3320, %v3344
    %v3357 = vsel %vm3333, %v3321, %v3345
    %v3358 = vsel %vm3334, %v3322, %v3346
    %v3359 = vpack.c.bf16 %v3349, %v3347
    %v3360 = vpack.c.bf16 %v3350, %v3348
    %v3361 = vpack.c.bf16 %v3353, %v3351
    %v3362 = vpack.c.bf16 %v3354, %v3352
    %v3363 = vpack.c.bf16 %v3357, %v3355
    %v3364 = vpack.c.bf16 %v3358, %v3356
    %3371 = vrot.lane.b32.xlu0 %v3359, 24
    %v3372 = vpop.permute.xlu0 %3371
    %3373 = vrot.lane.b32.xlu0 %v3360, 24
    %v3374 = vpop.permute.xlu0 %3373
    %3375 = vrot.lane.b32.xlu0 %v3361, 24
    %v3376 = vpop.permute.xlu0 %3375
    %3377 = vrot.lane.b32.xlu0 %v3362, 24
    %v3378 = vpop.permute.xlu0 %3377
    %3379 = vrot.lane.b32.xlu0 %v3363, 24
    %v3380 = vpop.permute.xlu0 %3379
    %3381 = vrot.lane.b32.xlu0 %v3364, 24
    %v3382 = vpop.permute.xlu0 %3381
    %v3383 = vsel %vm513, %v3372, %v3374
    %v3384 = vsel %vm513, %v3376, %v3378
    %v3385 = vsel %vm513, %v3380, %v3382
    %v3391 = vunpack.c.l.b16 %v2986
    %v3392 = vunpack.c.l.b16 %v2987
    %v3393 = vunpack.c.l.b16 %v2988
    %v3394 = vunpack.c.l.b16 %v2989
    %v3395 = vunpack.c.l.b16 %v2990
    %v3396 = vpack.c.b16 %v3392, %v3391
    %v3397 = vpack.c.b16 %v3394, %v3393
    %v3398 = vpack.c.b16 %v3395, %v3395
    %v3402 = vsel %vm270, %v3383, 0
    %v3405 = vsel %vm270, %v3384, 0
    %v3408 = vsel %vm270, %v3385, 0
    %v3411 = vsel %vm289, %v3398, 0
    %3413 = vmatprep.subr.bf16.mxu0 0
    %3414 = vmatpush1.bf16.msra.mxu0 %v3396
    %3415 = vmatprep.subr.bf16.mxu0 0
    %3416 = vmatpush1.bf16.msra.mxu0 %v3397
    %3417 = vmatprep.subr.bf16.mxu0 0
    %3418 = vmatpush1.bf16.msra.mxu0 %v3411
    %3419 = vmatprep.subr.bf16.mxu0 0
    %3420 = vmatpush1.bf16.msra.mxu0 0
    %3421 = vmatprep.subr.bf16.mxu0 0
    %3422 = vmatpush1.bf16.msra.mxu0 0
    %3423 = vmatprep.subr.bf16.mxu0 0
    %3424 = vmatpush1.bf16.msra.mxu0 0
    %3425 = vmatprep.subr.bf16.mxu0 0
    %3426 = vmatpush1.bf16.msra.mxu0 0
    %3427 = vmatprep.subr.bf16.mxu0 0
    %3428 = vmatpush1.bf16.msra.mxu0 0
    %3429 = vmatprep.subr.bf16.mxu0 0
    %3430 = vmatpush1.bf16.msra.mxu0 0
    %3431 = vmatprep.subr.bf16.mxu0 0
    %3432 = vmatpush1.bf16.msra.mxu0 0
    %3433 = vmatprep.subr.bf16.mxu0 0
    %3434 = vmatpush1.bf16.msra.mxu0 0
    %3435 = vmatprep.subr.bf16.mxu0 0
    %3436 = vmatpush1.bf16.msra.mxu0 0
    %3437 = vmatprep.subr.bf16.mxu0 0
    %3438 = vmatpush1.bf16.msra.mxu0 0
    %3439 = vmatprep.subr.bf16.mxu0 0
    %3440 = vmatpush1.bf16.msra.mxu0 0
    %3441 = vmatprep.subr.bf16.mxu0 0
    %3442 = vmatpush1.bf16.msra.mxu0 0
    %3443 = vmatprep.subr.bf16.mxu0 0
    %3444 = vmatpush1.bf16.msra.mxu0 0
    %3445 = vmatprep.mubr.bf16.mxu0 0
    %3446 = vmatmul.mubr.bf16.gmra.mrb[0].mxu0 %v3402
    %v3447 = vpop.f32.mrb[0].mxu0
    %v3448 = vadd.f32 0.0, %v3447
    %v3449 = vpop.f32.mrb[0].mxu0
    %v3450 = vpop.f32.mrb[0].mxu0
    %v3451 = vadd.f32 0.0, %v3450
    %v3452 = vpop.f32.mrb[0].mxu0
    %3453 = vmatprep.mubr.bf16.mxu0 0
    %3454 = vmatmul.mubr.bf16.gmra.mrb[0].mxu0 %v3405
    %v3455 = vpop.f32.mrb[0].mxu0
    %v3456 = vadd.f32 0.0, %v3455
    %v3457 = vpop.f32.mrb[0].mxu0
    %v3458 = vpop.f32.mrb[0].mxu0
    %v3459 = vadd.f32 0.0, %v3458
    %v3460 = vpop.f32.mrb[0].mxu0
    %3461 = vmatprep.mubr.bf16.mxu0 0
    %3462 = vmatmul.mubr.bf16.gmra.mrb[0].mxu0 %v3408
    %v3463 = vpop.f32.mrb[0].mxu0
    %v3464 = vadd.f32 0.0, %v3463
    %v3465 = vpop.f32.mrb[0].mxu0
    %v3466 = vpop.f32.mrb[0].mxu0
    %v3467 = vadd.f32 0.0, %v3466
    %v3468 = vpop.f32.mrb[0].mxu0
    %3469 = vdwg.mxu0
    %v3470 = vsel %vm601, %v3448, -inf
    %v3471 = vsel %vm601, %v3451, -inf
    %v3472 = vsel %vm601, %v3456, -inf
    %v3473 = vsel %vm601, %v3459, -inf
    %v3474 = vsel %vm601, %v3464, -inf
    %v3475 = vmax.f32 %v3470, %v3474
    %v3476 = vsel %vm601, %v3467, -inf
    %v3477 = vmax.f32 %v3471, %v3476
    %v3478 = vmax.f32 %v3475, %v3477
    %v3479 = vmax.f32 %v3472, %v3473
    %v3480 = vmax.f32 %v3478, %v3479
    %v3481 = vrot.slane %v3480, 4
    %v3482 = vmax.f32 %v3480, %v3481
    %v3483 = vrot.slane %v3482, 2
    %v3484 = vmax.f32 %v3482, %v3483
    %v3485 = vrot.slane %v3484, 1
    %v3486 = vmax.f32 %v3484, %v3485
    %v3487 = vsub.f32 %v3448, %v3486
    %v3488 = vsub.f32 %v3451, %v3486
    %v3489 = vsub.f32 %v3456, %v3486
    %v3490 = vsub.f32 %v3459, %v3486
    %v3491 = vsub.f32 %v3464, %v3486
    %v3492 = vsub.f32 %v3467, %v3486
    %v3493 = vmul.f32 %v3487, 1.442695
    %v3494 = vpow.pop %v3493
    %v3495 = vmul.f32 %v3488, 1.442695
    %v3496 = vpow.pop %v3495
    %v3497 = vmul.f32 %v3489, 1.442695
    %v3498 = vpow.pop %v3497
    %v3499 = vmul.f32 %v3490, 1.442695
    %v3500 = vpow.pop %v3499
    %v3501 = vmul.f32 %v3491, 1.442695
    %v3502 = vpow.pop %v3501
    %v3503 = vmul.f32 %v3492, 1.442695
    %v3504 = vpow.pop %v3503
    %v3505 = vpack.c.bf16 %v3496, %v3494
    %v3506 = vpack.c.bf16 %v3500, %v3498
    %v3507 = vpack.c.bf16 %v3504, %v3502
    %3508 = vmatprep.subr.bf16.mxu0 0
    %3509 = vmatpush1.bf16.msra.mxu0 %v3505
    %3510 = vmatprep.subr.bf16.mxu0 0
    %3511 = vmatpush1.bf16.msra.mxu0 %v3506
    %3512 = vmatprep.subr.bf16.mxu0 0
    %3513 = vmatpush1.bf16.msra.mxu0 %v3507
    %3514 = vmatprep.subr.bf16.mxu0 0
    %3515 = vmatpush1.bf16.msra.mxu0 0
    %3516 = vmatprep.subr.bf16.mxu0 0
    %3517 = vmatpush1.bf16.msra.mxu0 0
    %3518 = vmatprep.subr.bf16.mxu0 0
    %3519 = vmatpush1.bf16.msra.mxu0 0
    %3520 = vmatprep.subr.bf16.mxu0 0
    %3521 = vmatpush1.bf16.msra.mxu0 0
    %3522 = vmatprep.subr.bf16.mxu0 0
    %3523 = vmatpush1.bf16.msra.mxu0 0
    %3524 = vmatprep.subr.bf16.mxu0 0
    %3525 = vmatpush1.bf16.msra.mxu0 0
    %3526 = vmatprep.subr.bf16.mxu0 0
    %3527 = vmatpush1.bf16.msra.mxu0 0
    %3528 = vmatprep.subr.bf16.mxu0 0
    %3529 = vmatpush1.bf16.msra.mxu0 0
    %3530 = vmatprep.subr.bf16.mxu0 0
    %3531 = vmatpush1.bf16.msra.mxu0 0
    %3532 = vmatprep.subr.bf16.mxu0 0
    %3533 = vmatpush1.bf16.msra.mxu0 0
    %3534 = vmatprep.subr.bf16.mxu0 0
    %3535 = vmatpush1.bf16.msra.mxu0 0
    %3536 = vmatprep.subr.bf16.mxu0 0
    %3537 = vmatpush1.bf16.msra.mxu0 0
    %3538 = vmatprep.subr.bf16.mxu0 0
    %3539 = vmatpush1.bf16.msra.mxu0 0
    %3540 = vmatprep.mubr.bf16.mxu0 0
    %3541 = vmatmul.mubr.bf16.gmra.mrb[0].mxu0 %v647
    %v3542 = vpop.f32.mrb[0].mxu0
    %v3543 = vadd.f32 1e-16, %v3542
    %v3544 = vpop.f32.mrb[0].mxu0
    %v3545 = vpop.f32.mrb[0].mxu0
    %v3546 = vadd.f32 1e-16, %v3545
    %v3547 = vpop.f32.mrb[0].mxu0
    %3548 = vdwg.mxu0
    %v3549 = vpack.c.bf16 %v3546, %v3543
    %3550 = vmatprep.subr.bf16.mxu0 0
    %3551 = vmatpush1.bf16.msra.mxu0 %v3549
    %3552 = vmatprep.subr.bf16.mxu0 0
    %3553 = vmatpush1.bf16.msra.mxu0 0
    %3554 = vmatprep.subr.bf16.mxu0 0
    %3555 = vmatpush1.bf16.msra.mxu0 0
    %3556 = vmatprep.subr.bf16.mxu0 0
    %3557 = vmatpush1.bf16.msra.mxu0 0
    %3558 = vmatprep.subr.bf16.mxu0 0
    %3559 = vmatpush1.bf16.msra.mxu0 0
    %3560 = vmatprep.subr.bf16.mxu0 0
    %3561 = vmatpush1.bf16.msra.mxu0 0
    %3562 = vmatprep.subr.bf16.mxu0 0
    %3563 = vmatpush1.bf16.msra.mxu0 0
    %3564 = vmatprep.subr.bf16.mxu0 0
    %3565 = vmatpush1.bf16.msra.mxu0 0
    %3566 = vmatprep.subr.bf16.mxu0 0
    %3567 = vmatpush1.bf16.msra.mxu0 0
    %3568 = vmatprep.subr.bf16.mxu0 0
    %3569 = vmatpush1.bf16.msra.mxu0 0
    %3570 = vmatprep.subr.bf16.mxu0 0
    %3571 = vmatpush1.bf16.msra.mxu0 0
    %3572 = vmatprep.subr.bf16.mxu0 0
    %3573 = vmatpush1.bf16.msra.mxu0 0
    %3574 = vmatprep.subr.bf16.mxu0 0
    %3575 = vmatpush1.bf16.msra.mxu0 0
    %3576 = vmatprep.subr.bf16.mxu0 0
    %3577 = vmatpush1.bf16.msra.mxu0 0
    %3578 = vmatprep.subr.bf16.mxu0 0
    %3579 = vmatpush1.bf16.msra.mxu0 0
    %3580 = vmatprep.subr.bf16.mxu0 0
    %3581 = vmatpush1.bf16.msra.mxu0 0
    %3582 = vmatprep.mubr.bf16.mxu0 0
    %3583 = vmatmul.mubr.bf16.gmra.mrb[0].mxu0 %v707
    %v3584 = vpop.f32.mrb[0].mxu0
    %v3585 = vadd.f32 0.0, %v3584
    %v3586 = vpop.f32.mrb[0].mxu0
    %v3587 = vpop.f32.mrb[0].mxu0
    %v3588 = vadd.f32 0.0, %v3587
    %v3589 = vpop.f32.mrb[0].mxu0
    %3590 = vmatprep.mubr.bf16.mxu0 0
    %3591 = vmatmul.mubr.bf16.gmra.mrb[0].mxu0 %v710
    %v3592 = vpop.f32.mrb[0].mxu0
    %v3593 = vadd.f32 0.0, %v3592
    %v3594 = vpop.f32.mrb[0].mxu0
    %v3595 = vpop.f32.mrb[0].mxu0
    %v3596 = vadd.f32 0.0, %v3595
    %v3597 = vpop.f32.mrb[0].mxu0
    %3598 = vmatprep.mubr.bf16.mxu0 0
    %3599 = vmatmul.mubr.bf16.gmra.mrb[0].mxu0 %v713
    %v3600 = vpop.f32.mrb[0].mxu0
    %v3601 = vadd.f32 0.0, %v3600
    %v3602 = vpop.f32.mrb[0].mxu0
    %v3603 = vpop.f32.mrb[0].mxu0
    %v3604 = vadd.f32 0.0, %v3603
    %v3605 = vpop.f32.mrb[0].mxu0
    %3606 = vdwg.mxu0
    %v3607 = vrcp.pop %v3585
    %v3608 = vrcp.pop %v3588
    %v3609 = vrcp.pop %v3593
    %v3610 = vrcp.pop %v3596
    %v3611 = vrcp.pop %v3601
    %v3612 = vrcp.pop %v3604
    %v3613 = vmul.f32 %v3494, %v3607
    %v3614 = vmul.f32 %v3496, %v3608
    %v3615 = vmul.f32 %v3498, %v3609
    %v3616 = vmul.f32 %v3500, %v3610
    %v3617 = vmul.f32 %v3502, %v3611
    %v3618 = vmul.f32 %v3504, %v3612
    %v3619 = vpack.c.bf16 %v3614, %v3613
    %v3620 = vpack.c.bf16 %v3616, %v3615
    %v3621 = vpack.c.bf16 %v3618, %v3617
    %v3623 = vsel %vm601, %v3619, 0
    %v3626 = vsel %vm601, %v3620, 0
    %v3629 = vsel %vm601, %v3621, 0
    %3631 = vmatprep.subr.bf16.mxu0 0
    %3632 = vmatpush1.bf16.msra.mxu0 %v801
    %3633 = vmatprep.subr.bf16.mxu0 0
    %3634 = vmatpush1.bf16.msra.mxu0 0
    %3635 = vmatprep.subr.bf16.mxu0 0
    %3636 = vmatpush1.bf16.msra.mxu0 0
    %3637 = vmatprep.subr.bf16.mxu0 0
    %3638 = vmatpush1.bf16.msra.mxu0 0
    %3639 = vmatprep.subr.bf16.mxu0 0
    %3640 = vmatpush1.bf16.msra.mxu0 0
    %3641 = vmatprep.subr.bf16.mxu0 0
    %3642 = vmatpush1.bf16.msra.mxu0 0
    %3643 = vmatprep.subr.bf16.mxu0 0
    %3644 = vmatpush1.bf16.msra.mxu0 0
    %3645 = vmatprep.subr.bf16.mxu0 0
    %3646 = vmatpush1.bf16.msra.mxu0 0
    %3647 = vmatprep.subr.bf16.mxu0 0
    %3648 = vmatpush1.bf16.msra.mxu0 0
    %3649 = vmatprep.subr.bf16.mxu0 0
    %3650 = vmatpush1.bf16.msra.mxu0 0
    %3651 = vmatprep.subr.bf16.mxu0 0
    %3652 = vmatpush1.bf16.msra.mxu0 0
    %3653 = vmatprep.subr.bf16.mxu0 0
    %3654 = vmatpush1.bf16.msra.mxu0 0
    %3655 = vmatprep.subr.bf16.mxu0 0
    %3656 = vmatpush1.bf16.msra.mxu0 0
    %3657 = vmatprep.subr.bf16.mxu0 0
    %3658 = vmatpush1.bf16.msra.mxu0 0
    %3659 = vmatprep.subr.bf16.mxu0 0
    %3660 = vmatpush1.bf16.msra.mxu0 0
    %3661 = vmatprep.subr.bf16.mxu0 0
    %3662 = vmatpush1.bf16.msra.mxu0 0
    %3663 = vmatprep.mubr.bf16.mxu0 0
    %3664 = vmatmul.mubr.bf16.gmra.mrb[0].mxu0 %v3623
    %v3665 = vpop.f32.mrb[0].mxu0
    %v3666 = vadd.f32 0.0, %v3665
    %v3667 = vpop.f32.mrb[0].mxu0
    %v3668 = vpop.f32.mrb[0].mxu0
    %v3669 = vadd.f32 0.0, %v3668
    %v3670 = vpop.f32.mrb[0].mxu0
    %3671 = vmatprep.mubr.bf16.mxu0 0
    %3672 = vmatmul.mubr.bf16.gmra.mrb[0].mxu0 %v3626
    %v3673 = vpop.f32.mrb[0].mxu0
    %v3674 = vadd.f32 0.0, %v3673
    %v3675 = vpop.f32.mrb[0].mxu0
    %v3676 = vpop.f32.mrb[0].mxu0
    %v3677 = vadd.f32 0.0, %v3676
    %v3678 = vpop.f32.mrb[0].mxu0
    %3679 = vmatprep.mubr.bf16.mxu0 0
    %3680 = vmatmul.mubr.bf16.gmra.mrb[0].mxu0 %v3629
    %v3681 = vpop.f32.mrb[0].mxu0
    %v3682 = vadd.f32 0.0, %v3681
    %v3683 = vpop.f32.mrb[0].mxu0
    %v3684 = vpop.f32.mrb[0].mxu0
    %v3685 = vadd.f32 0.0, %v3684
    %v3686 = vpop.f32.mrb[0].mxu0
    %3687 = vdwg.mxu0
    %3694 = vrot.lane.b32.xlu0 %v3666, 64
    %v3695 = vpop.permute.xlu0 %3694
    %3696 = vrot.lane.b32.xlu0 %v3669, 64
    %v3697 = vpop.permute.xlu0 %3696
    %3698 = vrot.lane.b32.xlu0 %v3674, 64
    %v3699 = vpop.permute.xlu0 %3698
    %3700 = vrot.lane.b32.xlu0 %v3677, 64
    %v3701 = vpop.permute.xlu0 %3700
    %3702 = vrot.lane.b32.xlu0 %v3682, 64
    %v3703 = vpop.permute.xlu0 %3702
    %3704 = vrot.lane.b32.xlu0 %v3685, 64
    %v3705 = vpop.permute.xlu0 %3704
    %v3712 = vmul.f32 %v3261, %v3695
    %v3713 = vmul.f32 %v3262, %v3697
    %v3714 = vmul.f32 %v3263, %v3699
    %v3715 = vmul.f32 %v3264, %v3701
    %v3716 = vmul.f32 %v3265, %v3703
    %v3717 = vmul.f32 %v3266, %v3705
    %v3718 = vpack.c.bf16 %v3713, %v3712
    %v3719 = vpack.c.bf16 %v3715, %v3714
    %v3720 = vpack.c.bf16 %v3717, %v3716
    %v3721 = vlaneseq
    %v3722 = vshrl.u32 %v3721, 7
    %v3723 = vsub.s32 3, %v3722
    %v3724 = vrot.slane %v3028, %v3723
    %3728 = vrot.lane.b32.xlu0 %v3718, 64
    %v3729 = vpop.permute.xlu0 %3728
    %3730 = vrot.lane.b32.xlu0 %v3719, 64
    %v3731 = vpop.permute.xlu0 %3730
    %3732 = vrot.lane.b32.xlu0 %v3720, 64
    %v3733 = vpop.permute.xlu0 %3732
    %3737 = vmatprep.subr.bf16.mxu0 0
    %3738 = vmatpush1.bf16.msra.mxu0 %v3729
    %3739 = vmatprep.subr.bf16.mxu0 0
    %3740 = vmatpush1.bf16.msra.mxu0 %v3731
    %3741 = vmatprep.subr.bf16.mxu0 0
    %3742 = vmatpush1.bf16.msra.mxu0 %v3733
    %3743 = vmatprep.subr.bf16.mxu0 0
    %3744 = vmatpush1.bf16.msra.mxu0 0
    %3745 = vmatprep.subr.bf16.mxu0 0
    %3746 = vmatpush1.bf16.msra.mxu0 0
    %3747 = vmatprep.subr.bf16.mxu0 0
    %3748 = vmatpush1.bf16.msra.mxu0 0
    %3749 = vmatprep.subr.bf16.mxu0 0
    %3750 = vmatpush1.bf16.msra.mxu0 0
    %3751 = vmatprep.subr.bf16.mxu0 0
    %3752 = vmatpush1.bf16.msra.mxu0 0
    %3753 = vmatprep.subr.bf16.mxu0 0
    %3754 = vmatpush1.bf16.msra.mxu0 0
    %3755 = vmatprep.subr.bf16.mxu0 0
    %3756 = vmatpush1.bf16.msra.mxu0 0
    %3757 = vmatprep.subr.bf16.mxu0 0
    %3758 = vmatpush1.bf16.msra.mxu0 0
    %3759 = vmatprep.subr.bf16.mxu0 0
    %3760 = vmatpush1.bf16.msra.mxu0 0
    %3761 = vmatprep.subr.bf16.mxu0 0
    %3762 = vmatpush1.bf16.msra.mxu0 0
    %3763 = vmatprep.subr.bf16.mxu0 0
    %3764 = vmatpush1.bf16.msra.mxu0 0
    %3765 = vmatprep.subr.bf16.mxu0 0
    %3766 = vmatpush1.bf16.msra.mxu0 0
    %3767 = vmatprep.subr.bf16.mxu0 0
    %3768 = vmatpush1.bf16.msra.mxu0 0
    %3769 = vmatprep.mubr.bf16.mxu0 0
    %3770 = vmatmul.mubr.bf16.gmra.mrb[0].mxu0 %v647
    %v3771 = vpop.f32.mrb[0].mxu0
    %v3772 = vadd.f32 %v3724, %v3771
    %v3773 = vpop.f32.mrb[0].mxu0
    %v3774 = vpop.f32.mrb[0].mxu0
    %v3775 = vadd.f32 %v3724, %v3774
    %v3776 = vpop.f32.mrb[0].mxu0
    %3777 = vdwg.mxu0
    %v3778 = vadd.f32 %v2651, %v3772
    %v3779 = vadd.f32 %v2652, %v3775
    %v3780 = vsel %vm270, %v3778, 0.0
    %3781 = vadd.xlane.f32.xlu0 %v3780
    %v3782 = vpop.xlane.xlu0 %3781
    %v3783 = vsel %vm270, %v3779, 0.0
    %3784 = vadd.xlane.f32.xlu0 %v3783
    %v3785 = vpop.xlane.xlu0 %3784
    %v3786 = vmul.f32 %v3782, %v958
    %v3787 = vmul.f32 %v3785, %v958
    %v3788 = vsub.f32 %v3778, %v3786
    %v3789 = vsub.f32 %v3779, %v3787
    %v3790 = vmul.f32 %v3788, %v3788
    %v3791 = vmul.f32 %v3789, %v3789
    %v3792 = vsel %vm270, %v3790, 0.0
    %3793 = vadd.xlane.f32.xlu0 %v3792
    %v3794 = vpop.xlane.xlu0 %3793
    %v3795 = vsel %vm270, %v3791, 0.0
    %3796 = vadd.xlane.f32.xlu0 %v3795
    %v3797 = vpop.xlane.xlu0 %3796
    %v3798 = vmul.f32 %v3794, %v958
    %v3799 = vmul.f32 %v3797, %v958
    %v3800 = vadd.f32 %v3798, 1e-05
    %v3801 = vadd.f32 %v3799, 1e-05
    %v3802 = vrsqrt.pop %v3800
    %v3803 = vrsqrt.pop %v3801
    %v3804 = vmul.f32 %v3788, %v3802
    %v3805 = vmul.f32 %v3789, %v3803
    %v3806 = vlaneseq
    %v3807 = vshrl.u32 %v3806, 7
    %v3808 = vsub.s32 4, %v3807
    %v3809 = vrot.slane %v3028, %v3808
    %v3810 = vmul.f32 %v3804, %v3809
    %v3811 = vmul.f32 %v3805, %v3809
    %v3812 = vlaneseq
    %v3813 = vshrl.u32 %v3812, 7
    %v3814 = vsub.s32 5, %v3813
    %v3815 = vrot.slane %v3028, %v3814
    %v3816 = vadd.f32 %v3810, %v3815
    %v3817 = vadd.f32 %v3811, %v3815
    %v3818 = vpack.c.bf16 %v3817, %v3816
    %v3819 = vlaneseq
    %v3820 = vshrl.u32 %v3819, 7
    %v3821 = vsub.s32 6, %v3820
    %v3822 = vrot.slane %v3028, %v3821
    %v3828 = vunpack.c.l.b16 %v2991
    %v3829 = vunpack.c.l.b16 %v2992
    %v3830 = vunpack.c.l.b16 %v2993
    %v3831 = vunpack.c.l.b16 %v2994
    %v3832 = vunpack.c.l.b16 %v2995
    %v3833 = vpack.c.b16 %v3829, %v3828
    %v3834 = vpack.c.b16 %v3831, %v3830
    %v3835 = vpack.c.b16 %v3832, %v3832
    %v3839 = vsel %vm270, %v3818, 0
    %v3842 = vsel %vm289, %v3835, 0
    %3844 = vmatprep.subr.bf16.mxu0 0
    %3845 = vmatpush1.bf16.msra.mxu0 %v3833
    %3846 = vmatprep.subr.bf16.mxu0 0
    %3847 = vmatpush1.bf16.msra.mxu0 %v3834
    %3848 = vmatprep.subr.bf16.mxu0 0
    %3849 = vmatpush1.bf16.msra.mxu0 %v3842
    %3850 = vmatprep.subr.bf16.mxu0 0
    %3851 = vmatpush1.bf16.msra.mxu0 0
    %3852 = vmatprep.subr.bf16.mxu0 0
    %3853 = vmatpush1.bf16.msra.mxu0 0
    %3854 = vmatprep.subr.bf16.mxu0 0
    %3855 = vmatpush1.bf16.msra.mxu0 0
    %3856 = vmatprep.subr.bf16.mxu0 0
    %3857 = vmatpush1.bf16.msra.mxu0 0
    %3858 = vmatprep.subr.bf16.mxu0 0
    %3859 = vmatpush1.bf16.msra.mxu0 0
    %3860 = vmatprep.subr.bf16.mxu0 0
    %3861 = vmatpush1.bf16.msra.mxu0 0
    %3862 = vmatprep.subr.bf16.mxu0 0
    %3863 = vmatpush1.bf16.msra.mxu0 0
    %3864 = vmatprep.subr.bf16.mxu0 0
    %3865 = vmatpush1.bf16.msra.mxu0 0
    %3866 = vmatprep.subr.bf16.mxu0 0
    %3867 = vmatpush1.bf16.msra.mxu0 0
    %3868 = vmatprep.subr.bf16.mxu0 0
    %3869 = vmatpush1.bf16.msra.mxu0 0
    %3870 = vmatprep.subr.bf16.mxu0 0
    %3871 = vmatpush1.bf16.msra.mxu0 0
    %3872 = vmatprep.subr.bf16.mxu0 0
    %3873 = vmatpush1.bf16.msra.mxu0 0
    %3874 = vmatprep.subr.bf16.mxu0 0
    %3875 = vmatpush1.bf16.msra.mxu0 0
    %3876 = vmatprep.mubr.bf16.mxu0 0
    %3877 = vmatmul.mubr.bf16.gmra.mrb[0].mxu0 %v3839
    %v3878 = vpop.f32.mrb[0].mxu0
    %v3879 = vadd.f32 %v3822, %v3878
    %v3880 = vpop.f32.mrb[0].mxu0
    %v3881 = vpop.f32.mrb[0].mxu0
    %v3882 = vadd.f32 %v3822, %v3881
    %v3883 = vpop.f32.mrb[0].mxu0
    %3884 = vdwg.mxu0
    %vm3885 = vcmp.gt.f32.partialorder %v3879, 0.0
    %vm3886 = vcmp.gt.f32.partialorder %v3882, 0.0
    %v3887 = vmin.f32 %v3879, 0.0
    %v3888 = vmin.f32 %v3882, 0.0
    %v3889 = vmul.f32 %v3887, 1.442695
    %v3890 = vpow.pop %v3889
    %v3891 = vmul.f32 %v3888, 1.442695
    %v3892 = vpow.pop %v3891
    %v3893 = vsub.f32 %v3890, 1.0
    %v3894 = vsub.f32 %v3892, 1.0
    %v3895 = vmul.f32 %v3893, 1.6732632
    %v3896 = vmul.f32 %v3894, 1.6732632
    %v3897 = vsel %vm3885, %v3879, %v3895
    %v3898 = vsel %vm3886, %v3882, %v3896
    %v3899 = vmul.f32 %v3897, 1.050701
    %v3900 = vmul.f32 %v3898, 1.050701
    %v3901 = vsel %vm270, %v3899, 0.0
    %3902 = vadd.xlane.f32.xlu0 %v3901
    %v3903 = vpop.xlane.xlu0 %3902
    %v3904 = vsel %vm270, %v3900, 0.0
    %3905 = vadd.xlane.f32.xlu0 %v3904
    %v3906 = vpop.xlane.xlu0 %3905
    %v3907 = vmul.f32 %v3903, %v958
    %v3908 = vmul.f32 %v3906, %v958
    %v3909 = vsub.f32 %v3899, %v3907
    %v3910 = vsub.f32 %v3900, %v3908
    %v3911 = vmul.f32 %v3909, %v3909
    %v3912 = vmul.f32 %v3910, %v3910
    %v3913 = vsel %vm270, %v3911, 0.0
    %3914 = vadd.xlane.f32.xlu0 %v3913
    %v3915 = vpop.xlane.xlu0 %3914
    %v3916 = vsel %vm270, %v3912, 0.0
    %3917 = vadd.xlane.f32.xlu0 %v3916
    %v3918 = vpop.xlane.xlu0 %3917
    %v3919 = vmul.f32 %v3915, %v958
    %v3920 = vmul.f32 %v3918, %v958
    %v3921 = vadd.f32 %v3919, 1e-05
    %v3922 = vadd.f32 %v3920, 1e-05
    %v3923 = vrsqrt.pop %v3921
    %v3924 = vrsqrt.pop %v3922
    %v3925 = vmul.f32 %v3909, %v3923
    %v3926 = vmul.f32 %v3910, %v3924
    %v3927 = vlaneseq
    %v3928 = vshrl.u32 %v3927, 7
    %v3929 = vsub.s32 7, %v3928
    %v3930 = vrot.slane %v3028, %v3929
    %v3931 = vmul.f32 %v3925, %v3930
    %v3932 = vmul.f32 %v3926, %v3930
    %v3933 = vlaneseq
    %v3934 = vshrl.u32 %v3933, 7
    %v3935 = vsub.s32 0, %v3934
    %v3936 = vrot.slane %v3029, %v3935
    %v3937 = vadd.f32 %v3931, %v3936
    %v3938 = vadd.f32 %v3932, %v3936
    %v3939 = vpack.c.bf16 %v3938, %v3937
    %v3940 = vlaneseq
    %v3941 = vshrl.u32 %v3940, 7
    %v3942 = vsub.s32 1, %v3941
    %v3943 = vrot.slane %v3029, %v3942
    %v3949 = vunpack.c.l.b16 %v2996
    %v3950 = vunpack.c.l.b16 %v2997
    %v3951 = vunpack.c.l.b16 %v2998
    %v3952 = vunpack.c.l.b16 %v2999
    %v3953 = vunpack.c.l.b16 %v3000
    %v3954 = vpack.c.b16 %v3950, %v3949
    %v3955 = vpack.c.b16 %v3952, %v3951
    %v3956 = vpack.c.b16 %v3953, %v3953
    %v3960 = vsel %vm270, %v3939, 0
    %v3963 = vsel %vm289, %v3956, 0
    %3965 = vmatprep.subr.bf16.mxu0 0
    %3966 = vmatpush1.bf16.msra.mxu0 %v3954
    %3967 = vmatprep.subr.bf16.mxu0 0
    %3968 = vmatpush1.bf16.msra.mxu0 %v3955
    %3969 = vmatprep.subr.bf16.mxu0 0
    %3970 = vmatpush1.bf16.msra.mxu0 %v3963
    %3971 = vmatprep.subr.bf16.mxu0 0
    %3972 = vmatpush1.bf16.msra.mxu0 0
    %3973 = vmatprep.subr.bf16.mxu0 0
    %3974 = vmatpush1.bf16.msra.mxu0 0
    %3975 = vmatprep.subr.bf16.mxu0 0
    %3976 = vmatpush1.bf16.msra.mxu0 0
    %3977 = vmatprep.subr.bf16.mxu0 0
    %3978 = vmatpush1.bf16.msra.mxu0 0
    %3979 = vmatprep.subr.bf16.mxu0 0
    %3980 = vmatpush1.bf16.msra.mxu0 0
    %3981 = vmatprep.subr.bf16.mxu0 0
    %3982 = vmatpush1.bf16.msra.mxu0 0
    %3983 = vmatprep.subr.bf16.mxu0 0
    %3984 = vmatpush1.bf16.msra.mxu0 0
    %3985 = vmatprep.subr.bf16.mxu0 0
    %3986 = vmatpush1.bf16.msra.mxu0 0
    %3987 = vmatprep.subr.bf16.mxu0 0
    %3988 = vmatpush1.bf16.msra.mxu0 0
    %3989 = vmatprep.subr.bf16.mxu0 0
    %3990 = vmatpush1.bf16.msra.mxu0 0
    %3991 = vmatprep.subr.bf16.mxu0 0
    %3992 = vmatpush1.bf16.msra.mxu0 0
    %3993 = vmatprep.subr.bf16.mxu0 0
    %3994 = vmatpush1.bf16.msra.mxu0 0
    %3995 = vmatprep.subr.bf16.mxu0 0
    %3996 = vmatpush1.bf16.msra.mxu0 0
    %3997 = vmatprep.mubr.bf16.mxu0 0
    %3998 = vmatmul.mubr.bf16.gmra.mrb[0].mxu0 %v3960
    %v3999 = vpop.f32.mrb[0].mxu0
    %v4000 = vadd.f32 %v3943, %v3999
    %v4001 = vpop.f32.mrb[0].mxu0
    %v4002 = vpop.f32.mrb[0].mxu0
    %v4003 = vadd.f32 %v3943, %v4002
    %v4004 = vpop.f32.mrb[0].mxu0
    %4005 = vdwg.mxu0
    %v4006 = vadd.f32 %v3816, %v4000
    %v4007 = vadd.f32 %v3817, %v4003
    %v4008 = vsel %vm270, %v4006, 0.0
    %4009 = vadd.xlane.f32.xlu0 %v4008
    %v4010 = vpop.xlane.xlu0 %4009
    %v4011 = vsel %vm270, %v4007, 0.0
    %4012 = vadd.xlane.f32.xlu0 %v4011
    %v4013 = vpop.xlane.xlu0 %4012
    %v4014 = vmul.f32 %v4010, %v958
    %v4015 = vmul.f32 %v4013, %v958
    %v4016 = vsub.f32 %v4006, %v4014
    %v4017 = vsub.f32 %v4007, %v4015
    %v4018 = vmul.f32 %v4016, %v4016
    %v4019 = vmul.f32 %v4017, %v4017
    %v4020 = vsel %vm270, %v4018, 0.0
    %4021 = vadd.xlane.f32.xlu0 %v4020
    %v4022 = vpop.xlane.xlu0 %4021
    %v4023 = vsel %vm270, %v4019, 0.0
    %4024 = vadd.xlane.f32.xlu0 %v4023
    %v4025 = vpop.xlane.xlu0 %4024
    %v4026 = vmul.f32 %v4022, %v958
    %v4027 = vmul.f32 %v4025, %v958
    %v4028 = vadd.f32 %v4026, 1e-05
    %v4029 = vadd.f32 %v4027, 1e-05
    %v4030 = vrsqrt.pop %v4028
    %v4031 = vrsqrt.pop %v4029
    %v4032 = vmul.f32 %v4016, %v4030
    %v4033 = vmul.f32 %v4017, %v4031
    %v4034 = vlaneseq
    %v4035 = vshrl.u32 %v4034, 7
    %v4036 = vsub.s32 2, %v4035
    %v4037 = vrot.slane %v3029, %v4036
    %v4038 = vmul.f32 %v4032, %v4037
    %v4039 = vmul.f32 %v4033, %v4037
    %v4040 = vlaneseq
    %v4041 = vshrl.u32 %v4040, 7
    %v4042 = vsub.s32 3, %v4041
    %v4043 = vrot.slane %v3029, %v4042
    %v4044 = vadd.f32 %v4038, %v4043
    %v4045 = vadd.f32 %v4039, %v4043
    %v4046 = vpack.c.bf16 %v4045, %v4044
    %v4047 = vmul.f32 %v4044, %v4044
    %v4048 = vmul.f32 %v4045, %v4045
    %v4049 = vpack.c.bf16 %v4048, %v4047
    %4050 = vmatprep.subr.bf16.mxu0 0
    %4051 = vmatpush1.bf16.msra.mxu0 %v4046
    %4052 = vmatprep.subr.bf16.mxu0 0
    %4053 = vmatpush1.bf16.msra.mxu0 %v4049
    %4054 = vmatprep.subr.bf16.mxu0 0
    %4055 = vmatpush1.bf16.msra.mxu0 0
    %4056 = vmatprep.subr.bf16.mxu0 0
    %4057 = vmatpush1.bf16.msra.mxu0 0
    %4058 = vmatprep.subr.bf16.mxu0 0
    %4059 = vmatpush1.bf16.msra.mxu0 0
    %4060 = vmatprep.subr.bf16.mxu0 0
    %4061 = vmatpush1.bf16.msra.mxu0 0
    %4062 = vmatprep.subr.bf16.mxu0 0
    %4063 = vmatpush1.bf16.msra.mxu0 0
    %4064 = vmatprep.subr.bf16.mxu0 0
    %4065 = vmatpush1.bf16.msra.mxu0 0
    %4066 = vmatprep.subr.bf16.mxu0 0
    %4067 = vmatpush1.bf16.msra.mxu0 0
    %4068 = vmatprep.subr.bf16.mxu0 0
    %4069 = vmatpush1.bf16.msra.mxu0 0
    %4070 = vmatprep.subr.bf16.mxu0 0
    %4071 = vmatpush1.bf16.msra.mxu0 0
    %4072 = vmatprep.subr.bf16.mxu0 0
    %4073 = vmatpush1.bf16.msra.mxu0 0
    %4074 = vmatprep.subr.bf16.mxu0 0
    %4075 = vmatpush1.bf16.msra.mxu0 0
    %4076 = vmatprep.subr.bf16.mxu0 0
    %4077 = vmatpush1.bf16.msra.mxu0 0
    %4078 = vmatprep.subr.bf16.mxu0 0
    %4079 = vmatpush1.bf16.msra.mxu0 0
    %4080 = vmatprep.subr.bf16.mxu0 0
    %4081 = vmatpush1.bf16.msra.mxu0 0
    %4082 = vmatprep.mubr.bf16.mxu0 0
    %4083 = vmatmul.mubr.bf16.gmra.mrb[0].mxu0 %v1225
    %v4084 = vpop.f32.mrb[0].mxu0
    %v4085 = vadd.f32 0.0, %v4084
    %v4086 = vpop.f32.mrb[0].mxu0
    %v4087 = vpop.f32.mrb[0].mxu0
    %v4088 = vpop.f32.mrb[0].mxu0
    %4089 = vdwg.mxu0
    %v4090 = vmul.f32 %v4085, %v4085
    %v4092 = vrot.slane %v4090, 6
    %v4094 = vsub.f32 %v4085, %v4092
    %v4095 = vmax.f32 %v4094, 0.0
    %v4096 = vadd.f32 %v4095, 1e-05
    %v4097 = vrsqrt.pop %v4096
    %v4098 = vmul.f32 %v4096, %v4097
    %vm4099 = vcmp.eq.f32.partialorder %v4096, inf
    %v4100 = vsel %vm4099, %v4096, %v4098
    %vm4101 = vcmp.eq.f32.partialorder %v4096, 0.0
    %v4102 = vand.u32 %v4096, 2147483648
    %v4103 = vsel %vm4101, %v4102, %v4100
    %v4104 = vsub.f32 0.0, %v4044
    %v4105 = vsub.f32 0.0, %v4045
    %4108 = vrot.lane.b32.xlu0 %v4104, 40
    %v4109 = vpop.permute.xlu0 %4108
    %4110 = vrot.lane.b32.xlu0 %v4105, 40
    %v4111 = vpop.permute.xlu0 %4110
    %v4114 = vsel %vm270, %v4044, %v4109
    %v4115 = vsel %vm270, %v4045, %v4111
    %v4116 = vsel %vm1307, %v4114, -1e+30
    %v4117 = vsel %vm1308, %v4115, -1e+30
    %v4118 = vsel %vm1311, %v4116, -inf
    %v4119 = vsel %vm1311, %v4117, -inf
    %v4120 = vmax.f32 %v4118, %v4119
    %v4121 = vrot.slane %v4120, 4
    %v4122 = vmax.f32 %v4120, %v4121
    %v4123 = vrot.slane %v4122, 2
    %v4124 = vmax.f32 %v4122, %v4123
    %v4125 = vrot.slane %v4124, 1
    %v4126 = vmax.f32 %v4124, %v4125
    %v4127 = vsel %vm1335, %v4114, -1e+30
    %v4128 = vsel %vm1336, %v4115, -1e+30
    %v4129 = vsel %vm1311, %v4127, -inf
    %v4130 = vsel %vm1311, %v4128, -inf
    %v4131 = vmax.f32 %v4129, %v4130
    %v4132 = vrot.slane %v4131, 4
    %v4133 = vmax.f32 %v4131, %v4132
    %v4134 = vrot.slane %v4133, 2
    %v4135 = vmax.f32 %v4133, %v4134
    %v4136 = vrot.slane %v4135, 1
    %v4137 = vmax.f32 %v4135, %v4136
    %v4138 = vsel %vm1348, %v4126, %v4137
    %v4139 = vsub.f32 0.0, %v4138
    %4141 = vrot.lane.b32.xlu0 %v4085, 8
    %v4142 = vpop.permute.xlu0 %4141
    %v4145 = vrot.slane %v4103, 2
    %4146 = vrot.lane.b32.xlu0 %v4145, 48
    %v4147 = vpop.permute.xlu0 %4146
    %4150 = vrot.lane.b32.xlu0 %v4138, 88
    %v4151 = vpop.permute.xlu0 %4150
    %4154 = vrot.lane.b32.xlu0 %v4139, 88
    %v4155 = vpop.permute.xlu0 %4154
    %v4157 = vsel %vm1368, %v2974, %v4142
    %v4158 = vsel %vm645, %v4157, %v4147
    %v4159 = vsel %vm1371, %v4158, %v4151
    %v4160 = vpack.c.bf16 %v4159, %v4159
    %v4161 = vpack.c.bf16 %v4155, %v4155
    %v4162 = vlaneseq
    %v4163 = vshrl.u32 %v4162, 7
    %v4164 = vsub.s32 4, %v4163
    %v4165 = vrot.slane %v3029, %v4164
    %v4187 = vunpack.c.l.b16 %v3001
    %v4188 = vunpack.c.l.b16 %v3002
    %v4189 = vunpack.c.l.b16 %v3003
    %v4190 = vunpack.c.l.b16 %v3004
    %v4191 = vunpack.c.l.b16 %v3005
    %v4192 = vunpack.c.l.b16 %v3006
    %v4193 = vunpack.c.l.b16 %v3007
    %v4194 = vunpack.c.l.b16 %v3008
    %v4195 = vunpack.c.l.b16 %v3009
    %v4196 = vunpack.c.l.b16 %v3010
    %v4197 = vunpack.c.l.b16 %v3011
    %v4198 = vunpack.c.l.b16 %v3012
    %v4199 = vunpack.c.l.b16 %v3013
    %v4200 = vunpack.c.l.b16 %v3014
    %v4201 = vunpack.c.l.b16 %v3015
    %v4202 = vunpack.c.l.b16 %v3016
    %v4203 = vunpack.c.l.b16 %v3017
    %v4204 = vunpack.c.l.b16 %v3018
    %v4205 = vunpack.c.l.b16 %v3019
    %v4206 = vunpack.c.l.b16 %v3020
    %v4207 = vunpack.c.l.b16 %v3021
    %v4208 = vpack.c.b16 %v4188, %v4187
    %v4209 = vpack.c.b16 %v4190, %v4189
    %v4210 = vpack.c.b16 %v4192, %v4191
    %v4211 = vpack.c.b16 %v4194, %v4193
    %v4212 = vpack.c.b16 %v4196, %v4195
    %v4213 = vpack.c.b16 %v4198, %v4197
    %v4214 = vpack.c.b16 %v4200, %v4199
    %v4215 = vpack.c.b16 %v4202, %v4201
    %v4216 = vpack.c.b16 %v4204, %v4203
    %v4217 = vpack.c.b16 %v4206, %v4205
    %v4218 = vpack.c.b16 %v4207, %v4207
    %v4230 = vsel %vm270, %v4161, 0
    %v4233 = vsel %vm289, %v4218, 0
    %4235 = vmatprep.subr.bf16.mxu0 0
    %4236 = vmatpush1.bf16.msra.mxu0 %v4208
    %4237 = vmatprep.subr.bf16.mxu0 0
    %4238 = vmatpush1.bf16.msra.mxu0 %v4209
    %4239 = vmatprep.subr.bf16.mxu0 0
    %4240 = vmatpush1.bf16.msra.mxu0 %v4210
    %4241 = vmatprep.subr.bf16.mxu0 0
    %4242 = vmatpush1.bf16.msra.mxu0 %v4211
    %4243 = vmatprep.subr.bf16.mxu0 0
    %4244 = vmatpush1.bf16.msra.mxu0 %v4212
    %4245 = vmatprep.subr.bf16.mxu0 0
    %4246 = vmatpush1.bf16.msra.mxu0 %v4213
    %4247 = vmatprep.subr.bf16.mxu0 0
    %4248 = vmatpush1.bf16.msra.mxu0 %v4214
    %4249 = vmatprep.subr.bf16.mxu0 0
    %4250 = vmatpush1.bf16.msra.mxu0 %v4215
    %4251 = vmatprep.subr.bf16.mxu0 0
    %4252 = vmatpush1.bf16.msra.mxu0 %v4216
    %4253 = vmatprep.subr.bf16.mxu0 0
    %4254 = vmatpush1.bf16.msra.mxu0 %v4217
    %4255 = vmatprep.subr.bf16.mxu0 0
    %4256 = vmatpush1.bf16.msra.mxu0 %v4233
    %4257 = vmatprep.subr.bf16.mxu0 0
    %4258 = vmatpush1.bf16.msra.mxu0 0
    %4259 = vmatprep.subr.bf16.mxu0 0
    %4260 = vmatpush1.bf16.msra.mxu0 0
    %4261 = vmatprep.subr.bf16.mxu0 0
    %4262 = vmatpush1.bf16.msra.mxu0 0
    %4263 = vmatprep.subr.bf16.mxu0 0
    %4264 = vmatpush1.bf16.msra.mxu0 0
    %4265 = vmatprep.subr.bf16.mxu0 0
    %4266 = vmatpush1.bf16.msra.mxu0 0
    %4267 = vmatprep.mubr.bf16.mxu0 %v4230
    %4268 = vmatmul.mubr.bf16.gmra.mrb[0].mxu0 %v4160
    %v4269 = vpop.f32.mrb[0].mxu0
    %v4270 = vadd.f32 %v4165, %v4269
    %v4271 = vpop.f32.mrb[0].mxu0
    %v4272 = vpop.f32.mrb[0].mxu0
    %v4273 = vpop.f32.mrb[0].mxu0
    %4274 = vdwg.mxu0
    %vm4275 = vcmp.gt.f32.partialorder %v4270, 0.0
    %v4276 = vmin.f32 %v4270, 0.0
    %v4277 = vmul.f32 %v4276, 1.442695
    %v4278 = vpow.pop %v4277
    %v4279 = vsub.f32 %v4278, 1.0
    %v4280 = vmul.f32 %v4279, 1.6732632
    %v4281 = vsel %vm4275, %v4270, %v4280
    %v4282 = vmul.f32 %v4281, 1.050701
    %v4283 = vsel %vm1496, %v4282, 0.0
    %4284 = vadd.xlane.f32.xlu0 %v4283
    %v4285 = vpop.xlane.xlu0 %4284
    %v4286 = vmul.f32 %v4285, %v958
    %v4287 = vsub.f32 %v4282, %v4286
    %v4288 = vmul.f32 %v4287, %v4287
    %v4289 = vsel %vm1496, %v4288, 0.0
    %4290 = vadd.xlane.f32.xlu0 %v4289
    %v4291 = vpop.xlane.xlu0 %4290
    %v4292 = vmul.f32 %v4291, %v958
    %v4293 = vadd.f32 %v4292, 1e-05
    %v4294 = vrsqrt.pop %v4293
    %v4295 = vmul.f32 %v4287, %v4294
    %v4296 = vlaneseq
    %v4297 = vshrl.u32 %v4296, 7
    %v4298 = vsub.s32 5, %v4297
    %v4299 = vrot.slane %v3029, %v4298
    %v4300 = vmul.f32 %v4295, %v4299
    %v4301 = vlaneseq
    %v4302 = vshrl.u32 %v4301, 7
    %v4303 = vsub.s32 6, %v4302
    %v4304 = vrot.slane %v3029, %v4303
    %v4305 = vadd.f32 %v4300, %v4304
    %v4306 = vpack.c.bf16 %v4305, %v4305
    %v4307 = vlaneseq
    %v4308 = vshrl.u32 %v4307, 7
    %v4309 = vsub.s32 7, %v4308
    %v4310 = vrot.slane %v3029, %v4309
    %v4316 = vunpack.c.l.b16 %v3022
    %v4317 = vunpack.c.l.b16 %v3023
    %v4318 = vunpack.c.l.b16 %v3024
    %v4319 = vunpack.c.l.b16 %v3025
    %v4320 = vunpack.c.l.b16 %v3026
    %v4321 = vpack.c.b16 %v4317, %v4316
    %v4322 = vpack.c.b16 %v4319, %v4318
    %v4323 = vpack.c.b16 %v4320, %v4320
    %v4327 = vsel %vm270, %v4306, 0
    %v4330 = vsel %vm289, %v4323, 0
    %4332 = vmatprep.subr.bf16.mxu0 0
    %4333 = vmatpush1.bf16.msra.mxu0 %v4321
    %4334 = vmatprep.subr.bf16.mxu0 0
    %4335 = vmatpush1.bf16.msra.mxu0 %v4322
    %4336 = vmatprep.subr.bf16.mxu0 0
    %4337 = vmatpush1.bf16.msra.mxu0 %v4330
    %4338 = vmatprep.subr.bf16.mxu0 0
    %4339 = vmatpush1.bf16.msra.mxu0 0
    %4340 = vmatprep.subr.bf16.mxu0 0
    %4341 = vmatpush1.bf16.msra.mxu0 0
    %4342 = vmatprep.subr.bf16.mxu0 0
    %4343 = vmatpush1.bf16.msra.mxu0 0
    %4344 = vmatprep.subr.bf16.mxu0 0
    %4345 = vmatpush1.bf16.msra.mxu0 0
    %4346 = vmatprep.subr.bf16.mxu0 0
    %4347 = vmatpush1.bf16.msra.mxu0 0
    %4348 = vmatprep.subr.bf16.mxu0 0
    %4349 = vmatpush1.bf16.msra.mxu0 0
    %4350 = vmatprep.subr.bf16.mxu0 0
    %4351 = vmatpush1.bf16.msra.mxu0 0
    %4352 = vmatprep.subr.bf16.mxu0 0
    %4353 = vmatpush1.bf16.msra.mxu0 0
    %4354 = vmatprep.subr.bf16.mxu0 0
    %4355 = vmatpush1.bf16.msra.mxu0 0
    %4356 = vmatprep.subr.bf16.mxu0 0
    %4357 = vmatpush1.bf16.msra.mxu0 0
    %4358 = vmatprep.subr.bf16.mxu0 0
    %4359 = vmatpush1.bf16.msra.mxu0 0
    %4360 = vmatprep.subr.bf16.mxu0 0
    %4361 = vmatpush1.bf16.msra.mxu0 0
    %4362 = vmatprep.subr.bf16.mxu0 0
    %4363 = vmatpush1.bf16.msra.mxu0 0
    %4364 = vmatprep.mubr.bf16.mxu0 0
    %4365 = vmatmul.mubr.bf16.gmra.mrb[0].mxu0 %v4327
    %v4366 = vpop.f32.mrb[0].mxu0
    %v4367 = vadd.f32 %v4310, %v4366
    %v4368 = vpop.f32.mrb[0].mxu0
    %v4369 = vpop.f32.mrb[0].mxu0
    %v4370 = vpop.f32.mrb[0].mxu0
    %4371 = vdwg.mxu0
    %vm4372 = vcmask 58368
    %4373 = vst.msk [vmem:[#allocation2] sm:$0x3] %vm4372, %v4367
    // Predicated region
    $region30: #{graphnets_forward.1} parent=1 // pred_check
      _
    $region31: #{graphnets_forward.1} parent=1 // pred_check_branch
      %4375 = sbr.rel (0) target = $region33
    $region32: #{graphnets_forward.1} parent=1 // pred_region
      %s4377 = ssub.s32 32, 32
      %4378 = vsyncadd [#allocation3], %s4377
      %s4380 = sshll.u32 [#allocation2], 4
      %s4381 = int_to_ptr.vmem [resolvable:$true] %s4380
      %4383 = dma.vmem_to_hbm [thread:$0]  %s4381, 32, %s7, [#allocation3]
    $region33: #{graphnets_forward.1} parent=1 // pred_fallthru
      _
    // Predicated region
    $region34: #{graphnets_forward.1} parent=1 // pred_check
      _
    $region35: #{graphnets_forward.1} parent=1 // pred_check_branch
      %4385 = sbr.rel (0) target = $region37
    $region36: #{graphnets_forward.1} parent=1 // pred_region
      %4386 = dma.done [#allocation3], 32
    $region37: #{graphnets_forward.1} parent=1 // pred_fallthru
      _
    %4387 = vsyncpa [#allocation3], 1

</llo_original>
